<compile_context>
chip_gen: v7x
topology: tpu7x:2x2x1
jax: 0.10.0
libtpu: 0.0.40
codegen_flags: <defaults>
</compile_context>

<pallas_src>
import functools

import jax
import jax.numpy as jnp
from jax.experimental import pallas as pl
from jax.experimental.pallas import tpu as pltpu


def complex_upsample_kernel(
    x_ref,     # (1, H, W, C)        NHWC input tile (unpadded; halo built in VMEM)
    wdw_ref,   # (34, C)             depthwise weights: rows 0..8 = 3x3, rows 9..33 = 5x5
    pw_ref,    # (2, C, C)           pointwise weights, applied as  acc @ pw[b]
    bn_ref,    # (8, C)              folded BN (eval): [s1a,b1a,s1b,b1b, s2a,b2a,s2b,b2b]
    o_ref,     # (1, 2, H, 2, W, C)  output parity planes [n, row_par, h, col_par, w, c]
    xp_scr,    # VMEM (H+4, W+4, C)  zero-padded input (pad=2 covers both k=3/p=1 and k=5/p=2)
    zc_scr,    # VMEM (H, W+2, C)    column-clamped copy for the bilinear W shifts
    *, H, W, C,
):
    f32 = jnp.float32

    # Zero-pad the input inside VMEM (removes the HBM pad round trip).
    xp_scr[...] = jnp.zeros((H + 4, W + 4, C), f32)
    xp_scr[2:2 + H, 2:2 + W, :] = x_ref[0]

    # 5 W-shifted bands cover every depthwise tap of both kernels; the per-tap row offsets
    # are outer-dim slices (no sublane relayout).
    xs = [xp_scr[:, s:s + W, :] for s in range(5)]      # each (H+4, W, C)

    wdw = wdw_ref[...]      # (34, C)
    bn = bn_ref[...]        # (8, C)

    def branch(base, k, off, bno, b):
        acc = jnp.zeros((H, W, C), f32)
        for dh in range(k):                            # depthwise conv (VPU, lane-dense)
            for dw in range(k):
                acc = acc + xs[off + dw][off + dh:off + dh + H] * wdw[base + dh * k + dw]
        acc = acc * bn[bno] + bn[bno + 1]              # BN after depthwise (eval mode)
        y = jnp.dot(acc.reshape(H * W, C), pw_ref[b],
                    preferred_element_type=f32)        # pointwise 1x1 conv (MXU, K=N=C)
        y = jnp.maximum(y * bn[bno + 2] + bn[bno + 3], 0.0)   # BN + ReLU
        return y.reshape(H, W, C)

    # Two MXU dots issued back-to-back (recommended path for C >= 128).
    z = branch(0, 3, 1, 0, 0) + branch(9, 5, 0, 4, 1)

    # 2x bilinear upsample, align_corners=False (half-pixel): separable 0.25/0.75 blends
    # with edge clamping.  Row shifts act on the outer dim (relayout-free); column shifts
    # are read back from a clamped VMEM scratch instead of axis=1 concatenates.
    up = jnp.concatenate([z[:1], z[:-1]], axis=0)       # z[max(i-1,0)]
    dn = jnp.concatenate([z[1:], z[-1:]], axis=0)       # z[min(i+1,H-1)]
    zh0 = 0.25 * up + 0.75 * z                          # even output rows
    zh1 = 0.75 * z + 0.25 * dn                          # odd output rows

    def wpass(a):
        zc_scr[:, 1:1 + W, :] = a
        zc_scr[:, 0:1, :] = a[:, 0:1, :]                # clamp left edge
        zc_scr[:, W + 1:W + 2, :] = a[:, W - 1:W, :]    # clamp right edge
        left = zc_scr[:, 0:W, :]                        # a[:, max(j-1,0)]
        right = zc_scr[:, 2:2 + W, :]                   # a[:, min(j+1,W-1)]
        return 0.25 * left + 0.75 * a, 0.75 * a + 0.25 * right

    ee, eo = wpass(zh0)
    oe, oo = wpass(zh1)

    o_ref[0, 0, :, 0] = ee      # out[2i,   2j]
    o_ref[0, 0, :, 1] = eo      # out[2i,   2j+1]
    o_ref[0, 1, :, 0] = oe      # out[2i+1, 2j]
    o_ref[0, 1, :, 1] = oo      # out[2i+1, 2j+1]


def complex_upsample(x_nchw, params):
    """Matches ComplexUpsample.forward (eval-mode BN). Input/output are NCHW like PyTorch."""
    wdw, pw, bn = params
    N, C, H, W = x_nchw.shape
    x = jnp.transpose(x_nchw, (0, 2, 3, 1)).astype(jnp.float32)     # NHWC (C on lanes)

    kern = functools.partial(complex_upsample_kernel, H=H, W=W, C=C)

    flops = int(N * (2 * 34 * H * W * C + 2 * 2 * H * W * C * C + 24 * H * W * C))
    bytes_accessed = int(4 * (N * H * W * C + N * 4 * H * W * C
                              + wdw.size + pw.size + bn.size))

    out = pl.pallas_call(
        kern,
        out_shape=jax.ShapeDtypeStruct((N, 2, H, 2, W, C), jnp.float32),
        grid=(N,),
        in_specs=[
            pl.BlockSpec((1, H, W, C), lambda n: (n, 0, 0, 0)),
            pl.BlockSpec((34, C), lambda n: (0, 0)),
            pl.BlockSpec((2, C, C), lambda n: (0, 0, 0)),
            pl.BlockSpec((8, C), lambda n: (0, 0)),
        ],
        out_specs=pl.BlockSpec((1, 2, H, 2, W, C), lambda n: (n, 0, 0, 0, 0, 0)),
        scratch_shapes=[
            pltpu.VMEM((H + 4, W + 4, C), jnp.float32),
            pltpu.VMEM((H, W + 2, C), jnp.float32),
        ],
        compiler_params=pltpu.CompilerParams(
            dimension_semantics=("parallel",),
            vmem_limit_bytes=32 * 1024 * 1024),
        cost_estimate=pl.CostEstimate(flops=flops, transcendentals=0,
                                      bytes_accessed=bytes_accessed),
    )(x, wdw, pw, bn)

    # Single layout pass: fold the parity interleave and NHWC->NCHW into one transpose;
    # the trailing reshape merges contiguous (h,row_par)/(w,col_par) pairs and is free.
    out = jnp.transpose(out, (0, 5, 2, 1, 4, 3)).reshape(N, C, 2 * H, 2 * W)
    return out


def ref_forward(x_nchw, params):
    """Pure-JAX reference of the PyTorch forward (eval-mode BN)."""
    wdw, pw, bn = params
    x = jnp.transpose(x_nchw, (0, 2, 3, 1)).astype(jnp.float32)
    N, H, W, C = x.shape

    def branch(wd_flat, k, pad, sa, ba, pwm, sb, bb):
        wd = wd_flat.reshape(k, k, 1, C)
        y = jax.lax.conv_general_dilated(
            x, wd, (1, 1), [(pad, pad), (pad, pad)],
            dimension_numbers=("NHWC", "HWIO", "NHWC"),
            feature_group_count=C, precision=jax.lax.Precision.HIGHEST)
        y = y * sa + ba
        y = jax.lax.conv_general_dilated(
            y, pwm.reshape(1, 1, C, C), (1, 1), "VALID",
            dimension_numbers=("NHWC", "HWIO", "NHWC"),
            precision=jax.lax.Precision.HIGHEST)
        return jnp.maximum(y * sb + bb, 0.0)

    z = (branch(wdw[:9], 3, 1, bn[0], bn[1], pw[0], bn[2], bn[3])
         + branch(wdw[9:], 5, 2, bn[4], bn[5], pw[1], bn[6], bn[7]))
    z = jax.image.resize(z, (N, 2 * H, 2 * W, C), method="bilinear")
    return jnp.transpose(z, (0, 3, 1, 2))


if __name__ == "__main__":
    N, C, H, W = 2, 128, 16, 16      # C matches the module default input_dim = outpt_dim = 128
    key = jax.random.PRNGKey(0)
    ks = jax.random.split(key, 21)

    def bn_scale_shift(kg, kb, km, kv):
        gamma = jax.random.uniform(kg, (C,), minval=0.5, maxval=1.5)
        beta = 0.1 * jax.random.normal(kb, (C,))
        mean = 0.1 * jax.random.normal(km, (C,))
        var = jax.random.uniform(kv, (C,), minval=0.5, maxval=1.5)
        scale = gamma / jnp.sqrt(var + 1e-5)
        shift = beta - mean * scale
        return scale, shift

    x = jax.random.normal(ks[0], (N, C, H, W), jnp.float32)

    w3 = 0.3 * jax.random.normal(ks[1], (9, C), jnp.float32)     # depthwise 3x3 (C,1,3,3) flat
    pw1 = 0.1 * jax.random.normal(ks[2], (C, C), jnp.float32)    # pointwise (Cin, Cout)
    w5 = 0.3 * jax.random.normal(ks[3], (25, C), jnp.float32)    # depthwise 5x5
    pw2 = 0.1 * jax.random.normal(ks[4], (C, C), jnp.float32)

    s1a, b1a = bn_scale_shift(ks[5], ks[6], ks[7], ks[8])        # BN inside SeparableConv2d (b1)
    s1b, b1b = bn_scale_shift(ks[9], ks[10], ks[11], ks[12])     # BN after SeparableConv2d (b1)
    s2a, b2a = bn_scale_shift(ks[13], ks[14], ks[15], ks[16])    # branch2
    s2b, b2b = bn_scale_shift(ks[17], ks[18], ks[19], ks[20])

    params = (
        jnp.concatenate([w3, w5], axis=0),                                  # (34, C)
        jnp.stack([pw1, pw2], axis=0),                                      # (2, C, C)
        jnp.stack([s1a, b1a, s1b, b1b, s2a, b2a, s2b, b2b], axis=0),        # (8, C)
    )

    out = jax.jit(complex_upsample)(x, params)
    out = jax.block_until_ready(out)
    assert out.shape == (N, C, 2 * H, 2 * W), out.shape

    ref = ref_forward(x, params)
    err = float(jnp.max(jnp.abs(out - ref)))
    assert jnp.allclose(out, ref, atol=3e-2, rtol=3e-2), err

    print("KERNEL_OK")
</pallas_src>

<mosaic_0001>
module attributes {stable_mosaic.version = 11 : i64} {
  func.func @complex_upsample_kernel(%arg0: i32, %arg1: memref<1x16x16x128xf32, #tpu.memory_space<vmem>>, %arg2: memref<34x128xf32, #tpu.memory_space<vmem>>, %arg3: memref<2x128x128xf32, #tpu.memory_space<vmem>>, %arg4: memref<8x128xf32, #tpu.memory_space<vmem>>, %arg5: memref<1x2x16x2x16x128xf32, #tpu.memory_space<vmem>>, %arg6: memref<20x20x128xf32, #tpu.memory_space<vmem>>, %arg7: memref<16x18x128xf32, #tpu.memory_space<vmem>>) attributes {dimension_semantics = [#tpu.dimension_semantics<parallel>], iteration_bounds = array<i64: 2>, scalar_prefetch = 0 : i64, scratch_operands = 2 : i64, tpu.core_type = #tpu.core_type<tc>, window_params = [{transform_indices = @transform_0, window_bounds = array<i64: 1, 16, 16, 128>}, {pipeline_mode = #tpu.pipeline_mode<synchronous>, transform_indices = @transform_1, window_bounds = array<i64: 34, 128>}, {pipeline_mode = #tpu.pipeline_mode<synchronous>, transform_indices = @transform_2, window_bounds = array<i64: 2, 128, 128>}, {pipeline_mode = #tpu.pipeline_mode<synchronous>, transform_indices = @transform_3, window_bounds = array<i64: 8, 128>}, {transform_indices = @transform_4, window_bounds = array<i64: 1, 2, 16, 2, 16, 128>}]} {
    %cst = arith.constant 0.000000e+00 : f32
    %0 = vector.broadcast %cst : f32 to vector<20x20x128xf32>
    %c0 = arith.constant 0 : index
    %c0_0 = arith.constant 0 : index
    %c0_1 = arith.constant 0 : index
    %1 = vector.load %arg6[%c0, %c0_0, %c0_1] : memref<20x20x128xf32, #tpu.memory_space<vmem>>, vector<20x20x128xf32>
    tpu.vector_store %arg6[%c0, %c0_0, %c0_1], %0 {strides = array<i32>} : memref<20x20x128xf32, #tpu.memory_space<vmem>>, vector<20x20x128xf32>,
    %c0_2 = arith.constant 0 : index
    %c0_3 = arith.constant 0 : index
    %c0_4 = arith.constant 0 : index
    %c0_5 = arith.constant 0 : index
    %2 = vector.load %arg1[%c0_2, %c0_3, %c0_4, %c0_5] : memref<1x16x16x128xf32, #tpu.memory_space<vmem>>, vector<1x16x16x128xf32>
    %3 = vector.shape_cast %2 : vector<1x16x16x128xf32> to vector<16x16x128xf32>
    %c2 = arith.constant 2 : index
    %c2_6 = arith.constant 2 : index
    %c0_7 = arith.constant 0 : index
    %4 = vector.load %arg6[%c2, %c2_6, %c0_7] : memref<20x20x128xf32, #tpu.memory_space<vmem>>, vector<16x16x128xf32>
    tpu.vector_store %arg6[%c2, %c2_6, %c0_7], %3 {strides = array<i32>} : memref<20x20x128xf32, #tpu.memory_space<vmem>>, vector<16x16x128xf32>,
    %c0_8 = arith.constant 0 : index
    %c0_9 = arith.constant 0 : index
    %c0_10 = arith.constant 0 : index
    %5 = vector.load %arg6[%c0_8, %c0_9, %c0_10] : memref<20x20x128xf32, #tpu.memory_space<vmem>>, vector<20x16x128xf32>
    %c0_11 = arith.constant 0 : index
    %c1 = arith.constant 1 : index
    %c0_12 = arith.constant 0 : index
    %6 = vector.load %arg6[%c0_11, %c1, %c0_12] : memref<20x20x128xf32, #tpu.memory_space<vmem>>, vector<20x16x128xf32>
    %c0_13 = arith.constant 0 : index
    %c2_14 = arith.constant 2 : index
    %c0_15 = arith.constant 0 : index
    %7 = vector.load %arg6[%c0_13, %c2_14, %c0_15] : memref<20x20x128xf32, #tpu.memory_space<vmem>>, vector<20x16x128xf32>
    %c0_16 = arith.constant 0 : index
    %c3 = arith.constant 3 : index
    %c0_17 = arith.constant 0 : index
    %8 = vector.load %arg6[%c0_16, %c3, %c0_17] : memref<20x20x128xf32, #tpu.memory_space<vmem>>, vector<20x16x128xf32>
    %c0_18 = arith.constant 0 : index
    %c4 = arith.constant 4 : index
    %c0_19 = arith.constant 0 : index
    %9 = vector.load %arg6[%c0_18, %c4, %c0_19] : memref<20x20x128xf32, #tpu.memory_space<vmem>>, vector<20x16x128xf32>
    %c0_20 = arith.constant 0 : index
    %c0_21 = arith.constant 0 : index
    %10 = vector.load %arg2[%c0_20, %c0_21] : memref<34x128xf32, #tpu.memory_space<vmem>>, vector<34x128xf32>
    %c0_22 = arith.constant 0 : index
    %c0_23 = arith.constant 0 : index
    %11 = vector.load %arg4[%c0_22, %c0_23] : memref<8x128xf32, #tpu.memory_space<vmem>>, vector<8x128xf32>
    %cst_24 = arith.constant 0.000000e+00 : f32
    %12 = vector.broadcast %cst_24 : f32 to vector<16x16x128xf32>
    %13 = vector.extract_strided_slice %6 {offsets = [1, 0, 0], sizes = [16, 16, 128], strides = [1, 1, 1]} : vector<20x16x128xf32> to vector<16x16x128xf32>
    %14 = vector.extract_strided_slice %10 {offsets = [0, 0], sizes = [1, 128], strides = [1, 1]} : vector<34x128xf32> to vector<1x128xf32>
    %15 = vector.shape_cast %14 : vector<1x128xf32> to vector<128xf32>
    %16 = vector.shape_cast %15 : vector<128xf32> to vector<1x1x128xf32>
    %17 = vector.broadcast %16 : vector<1x1x128xf32> to vector<16x16x128xf32>
    %18 = arith.mulf %13, %17 : vector<16x16x128xf32>
    %19 = arith.addf %12, %18 : vector<16x16x128xf32>
    %20 = vector.extract_strided_slice %7 {offsets = [1, 0, 0], sizes = [16, 16, 128], strides = [1, 1, 1]} : vector<20x16x128xf32> to vector<16x16x128xf32>
    %21 = vector.extract_strided_slice %10 {offsets = [1, 0], sizes = [1, 128], strides = [1, 1]} : vector<34x128xf32> to vector<1x128xf32>
    %22 = vector.shape_cast %21 : vector<1x128xf32> to vector<128xf32>
    %23 = vector.shape_cast %22 : vector<128xf32> to vector<1x1x128xf32>
    %24 = vector.broadcast %23 : vector<1x1x128xf32> to vector<16x16x128xf32>
    %25 = arith.mulf %20, %24 : vector<16x16x128xf32>
    %26 = arith.addf %19, %25 : vector<16x16x128xf32>
    %27 = vector.extract_strided_slice %8 {offsets = [1, 0, 0], sizes = [16, 16, 128], strides = [1, 1, 1]} : vector<20x16x128xf32> to vector<16x16x128xf32>
    %28 = vector.extract_strided_slice %10 {offsets = [2, 0], sizes = [1, 128], strides = [1, 1]} : vector<34x128xf32> to vector<1x128xf32>
    %29 = vector.shape_cast %28 : vector<1x128xf32> to vector<128xf32>
    %30 = vector.shape_cast %29 : vector<128xf32> to vector<1x1x128xf32>
    %31 = vector.broadcast %30 : vector<1x1x128xf32> to vector<16x16x128xf32>
    %32 = arith.mulf %27, %31 : vector<16x16x128xf32>
    %33 = arith.addf %26, %32 : vector<16x16x128xf32>
    %34 = vector.extract_strided_slice %6 {offsets = [2, 0, 0], sizes = [16, 16, 128], strides = [1, 1, 1]} : vector<20x16x128xf32> to vector<16x16x128xf32>
    %35 = vector.extract_strided_slice %10 {offsets = [3, 0], sizes = [1, 128], strides = [1, 1]} : vector<34x128xf32> to vector<1x128xf32>
    %36 = vector.shape_cast %35 : vector<1x128xf32> to vector<128xf32>
    %37 = vector.shape_cast %36 : vector<128xf32> to vector<1x1x128xf32>
    %38 = vector.broadcast %37 : vector<1x1x128xf32> to vector<16x16x128xf32>
    %39 = arith.mulf %34, %38 : vector<16x16x128xf32>
    %40 = arith.addf %33, %39 : vector<16x16x128xf32>
    %41 = vector.extract_strided_slice %7 {offsets = [2, 0, 0], sizes = [16, 16, 128], strides = [1, 1, 1]} : vector<20x16x128xf32> to vector<16x16x128xf32>
    %42 = vector.extract_strided_slice %10 {offsets = [4, 0], sizes = [1, 128], strides = [1, 1]} : vector<34x128xf32> to vector<1x128xf32>
    %43 = vector.shape_cast %42 : vector<1x128xf32> to vector<128xf32>
    %44 = vector.shape_cast %43 : vector<128xf32> to vector<1x1x128xf32>
    %45 = vector.broadcast %44 : vector<1x1x128xf32> to vector<16x16x128xf32>
    %46 = arith.mulf %41, %45 : vector<16x16x128xf32>
    %47 = arith.addf %40, %46 : vector<16x16x128xf32>
    %48 = vector.extract_strided_slice %8 {offsets = [2, 0, 0], sizes = [16, 16, 128], strides = [1, 1, 1]} : vector<20x16x128xf32> to vector<16x16x128xf32>
    %49 = vector.extract_strided_slice %10 {offsets = [5, 0], sizes = [1, 128], strides = [1, 1]} : vector<34x128xf32> to vector<1x128xf32>
    %50 = vector.shape_cast %49 : vector<1x128xf32> to vector<128xf32>
    %51 = vector.shape_cast %50 : vector<128xf32> to vector<1x1x128xf32>
    %52 = vector.broadcast %51 : vector<1x1x128xf32> to vector<16x16x128xf32>
    %53 = arith.mulf %48, %52 : vector<16x16x128xf32>
    %54 = arith.addf %47, %53 : vector<16x16x128xf32>
    %55 = vector.extract_strided_slice %6 {offsets = [3, 0, 0], sizes = [16, 16, 128], strides = [1, 1, 1]} : vector<20x16x128xf32> to vector<16x16x128xf32>
    %56 = vector.extract_strided_slice %10 {offsets = [6, 0], sizes = [1, 128], strides = [1, 1]} : vector<34x128xf32> to vector<1x128xf32>
    %57 = vector.shape_cast %56 : vector<1x128xf32> to vector<128xf32>
    %58 = vector.shape_cast %57 : vector<128xf32> to vector<1x1x128xf32>
    %59 = vector.broadcast %58 : vector<1x1x128xf32> to vector<16x16x128xf32>
    %60 = arith.mulf %55, %59 : vector<16x16x128xf32>
    %61 = arith.addf %54, %60 : vector<16x16x128xf32>
    %62 = vector.extract_strided_slice %7 {offsets = [3, 0, 0], sizes = [16, 16, 128], strides = [1, 1, 1]} : vector<20x16x128xf32> to vector<16x16x128xf32>
    %63 = vector.extract_strided_slice %10 {offsets = [7, 0], sizes = [1, 128], strides = [1, 1]} : vector<34x128xf32> to vector<1x128xf32>
    %64 = vector.shape_cast %63 : vector<1x128xf32> to vector<128xf32>
    %65 = vector.shape_cast %64 : vector<128xf32> to vector<1x1x128xf32>
    %66 = vector.broadcast %65 : vector<1x1x128xf32> to vector<16x16x128xf32>
    %67 = arith.mulf %62, %66 : vector<16x16x128xf32>
    %68 = arith.addf %61, %67 : vector<16x16x128xf32>
    %69 = vector.extract_strided_slice %8 {offsets = [3, 0, 0], sizes = [16, 16, 128], strides = [1, 1, 1]} : vector<20x16x128xf32> to vector<16x16x128xf32>
    %70 = vector.extract_strided_slice %10 {offsets = [8, 0], sizes = [1, 128], strides = [1, 1]} : vector<34x128xf32> to vector<1x128xf32>
    %71 = vector.shape_cast %70 : vector<1x128xf32> to vector<128xf32>
    %72 = vector.shape_cast %71 : vector<128xf32> to vector<1x1x128xf32>
    %73 = vector.broadcast %72 : vector<1x1x128xf32> to vector<16x16x128xf32>
    %74 = arith.mulf %69, %73 : vector<16x16x128xf32>
    %75 = arith.addf %68, %74 : vector<16x16x128xf32>
    %76 = vector.extract_strided_slice %11 {offsets = [0, 0], sizes = [1, 128], strides = [1, 1]} : vector<8x128xf32> to vector<1x128xf32>
    %77 = vector.shape_cast %76 : vector<1x128xf32> to vector<128xf32>
    %78 = vector.shape_cast %77 : vector<128xf32> to vector<1x1x128xf32>
    %79 = vector.broadcast %78 : vector<1x1x128xf32> to vector<16x16x128xf32>
    %80 = arith.mulf %75, %79 : vector<16x16x128xf32>
    %81 = vector.extract_strided_slice %11 {offsets = [1, 0], sizes = [1, 128], strides = [1, 1]} : vector<8x128xf32> to vector<1x128xf32>
    %82 = vector.shape_cast %81 : vector<1x128xf32> to vector<128xf32>
    %83 = vector.shape_cast %82 : vector<128xf32> to vector<1x1x128xf32>
    %84 = vector.broadcast %83 : vector<1x1x128xf32> to vector<16x16x128xf32>
    %85 = arith.addf %80, %84 : vector<16x16x128xf32>
    %86 = vector.shape_cast %85 : vector<16x16x128xf32> to vector<256x128xf32>
    %c0_25 = arith.constant 0 : index
    %c0_26 = arith.constant 0 : index
    %c0_27 = arith.constant 0 : index
    %87 = vector.load %arg3[%c0_25, %c0_26, %c0_27] : memref<2x128x128xf32, #tpu.memory_space<vmem>>, vector<1x128x128xf32>
    %88 = vector.shape_cast %87 : vector<1x128x128xf32> to vector<128x128xf32>
    %cst_28 = arith.constant dense<0.000000e+00> : vector<256x128xf32>
    %89 = tpu.matmul %86, %88, %cst_28 {dimension_numbers = #tpu.dot_dimension_numbers<[1], [0], [0], [1], [0, 0, 1, 1], [], []>} : vector<256x128xf32>, vector<128x128xf32>, vector<256x128xf32> -> vector<256x128xf32>
    %90 = vector.extract_strided_slice %11 {offsets = [2, 0], sizes = [1, 128], strides = [1, 1]} : vector<8x128xf32> to vector<1x128xf32>
    %91 = vector.shape_cast %90 : vector<1x128xf32> to vector<128xf32>
    %92 = vector.shape_cast %91 : vector<128xf32> to vector<1x128xf32>
    %93 = vector.broadcast %92 : vector<1x128xf32> to vector<256x128xf32>
    %94 = arith.mulf %89, %93 : vector<256x128xf32>
    %95 = vector.extract_strided_slice %11 {offsets = [3, 0], sizes = [1, 128], strides = [1, 1]} : vector<8x128xf32> to vector<1x128xf32>
    %96 = vector.shape_cast %95 : vector<1x128xf32> to vector<128xf32>
    %97 = vector.shape_cast %96 : vector<128xf32> to vector<1x128xf32>
    %98 = vector.broadcast %97 : vector<1x128xf32> to vector<256x128xf32>
    %99 = arith.addf %94, %98 : vector<256x128xf32>
    %cst_29 = arith.constant 0.000000e+00 : f32
    %100 = vector.broadcast %cst_29 : f32 to vector<256x128xf32>
    %101 = arith.maximumf %99, %100 : vector<256x128xf32>
    %102 = vector.shape_cast %101 : vector<256x128xf32> to vector<16x16x128xf32>
    %cst_30 = arith.constant 0.000000e+00 : f32
    %103 = vector.broadcast %cst_30 : f32 to vector<16x16x128xf32>
    %104 = vector.extract_strided_slice %5 {offsets = [0, 0, 0], sizes = [16, 16, 128], strides = [1, 1, 1]} : vector<20x16x128xf32> to vector<16x16x128xf32>
    %105 = vector.extract_strided_slice %10 {offsets = [9, 0], sizes = [1, 128], strides = [1, 1]} : vector<34x128xf32> to vector<1x128xf32>
    %106 = vector.shape_cast %105 : vector<1x128xf32> to vector<128xf32>
    %107 = vector.shape_cast %106 : vector<128xf32> to vector<1x1x128xf32>
    %108 = vector.broadcast %107 : vector<1x1x128xf32> to vector<16x16x128xf32>
    %109 = arith.mulf %104, %108 : vector<16x16x128xf32>
    %110 = arith.addf %103, %109 : vector<16x16x128xf32>
    %111 = vector.extract_strided_slice %6 {offsets = [0, 0, 0], sizes = [16, 16, 128], strides = [1, 1, 1]} : vector<20x16x128xf32> to vector<16x16x128xf32>
    %112 = vector.extract_strided_slice %10 {offsets = [10, 0], sizes = [1, 128], strides = [1, 1]} : vector<34x128xf32> to vector<1x128xf32>
    %113 = vector.shape_cast %112 : vector<1x128xf32> to vector<128xf32>
    %114 = vector.shape_cast %113 : vector<128xf32> to vector<1x1x128xf32>
    %115 = vector.broadcast %114 : vector<1x1x128xf32> to vector<16x16x128xf32>
    %116 = arith.mulf %111, %115 : vector<16x16x128xf32>
    %117 = arith.addf %110, %116 : vector<16x16x128xf32>
    %118 = vector.extract_strided_slice %7 {offsets = [0, 0, 0], sizes = [16, 16, 128], strides = [1, 1, 1]} : vector<20x16x128xf32> to vector<16x16x128xf32>
    %119 = vector.extract_strided_slice %10 {offsets = [11, 0], sizes = [1, 128], strides = [1, 1]} : vector<34x128xf32> to vector<1x128xf32>
    %120 = vector.shape_cast %119 : vector<1x128xf32> to vector<128xf32>
    %121 = vector.shape_cast %120 : vector<128xf32> to vector<1x1x128xf32>
    %122 = vector.broadcast %121 : vector<1x1x128xf32> to vector<16x16x128xf32>
    %123 = arith.mulf %118, %122 : vector<16x16x128xf32>
    %124 = arith.addf %117, %123 : vector<16x16x128xf32>
    %125 = vector.extract_strided_slice %8 {offsets = [0, 0, 0], sizes = [16, 16, 128], strides = [1, 1, 1]} : vector<20x16x128xf32> to vector<16x16x128xf32>
    %126 = vector.extract_strided_slice %10 {offsets = [12, 0], sizes = [1, 128], strides = [1, 1]} : vector<34x128xf32> to vector<1x128xf32>
    %127 = vector.shape_cast %126 : vector<1x128xf32> to vector<128xf32>
    %128 = vector.shape_cast %127 : vector<128xf32> to vector<1x1x128xf32>
    %129 = vector.broadcast %128 : vector<1x1x128xf32> to vector<16x16x128xf32>
    %130 = arith.mulf %125, %129 : vector<16x16x128xf32>
    %131 = arith.addf %124, %130 : vector<16x16x128xf32>
    %132 = vector.extract_strided_slice %9 {offsets = [0, 0, 0], sizes = [16, 16, 128], strides = [1, 1, 1]} : vector<20x16x128xf32> to vector<16x16x128xf32>
    %133 = vector.extract_strided_slice %10 {offsets = [13, 0], sizes = [1, 128], strides = [1, 1]} : vector<34x128xf32> to vector<1x128xf32>
    %134 = vector.shape_cast %133 : vector<1x128xf32> to vector<128xf32>
    %135 = vector.shape_cast %134 : vector<128xf32> to vector<1x1x128xf32>
    %136 = vector.broadcast %135 : vector<1x1x128xf32> to vector<16x16x128xf32>
    %137 = arith.mulf %132, %136 : vector<16x16x128xf32>
    %138 = arith.addf %131, %137 : vector<16x16x128xf32>
    %139 = vector.extract_strided_slice %5 {offsets = [1, 0, 0], sizes = [16, 16, 128], strides = [1, 1, 1]} : vector<20x16x128xf32> to vector<16x16x128xf32>
    %140 = vector.extract_strided_slice %10 {offsets = [14, 0], sizes = [1, 128], strides = [1, 1]} : vector<34x128xf32> to vector<1x128xf32>
    %141 = vector.shape_cast %140 : vector<1x128xf32> to vector<128xf32>
    %142 = vector.shape_cast %141 : vector<128xf32> to vector<1x1x128xf32>
    %143 = vector.broadcast %142 : vector<1x1x128xf32> to vector<16x16x128xf32>
    %144 = arith.mulf %139, %143 : vector<16x16x128xf32>
    %145 = arith.addf %138, %144 : vector<16x16x128xf32>
    %146 = vector.extract_strided_slice %6 {offsets = [1, 0, 0], sizes = [16, 16, 128], strides = [1, 1, 1]} : vector<20x16x128xf32> to vector<16x16x128xf32>
    %147 = vector.extract_strided_slice %10 {offsets = [15, 0], sizes = [1, 128], strides = [1, 1]} : vector<34x128xf32> to vector<1x128xf32>
    %148 = vector.shape_cast %147 : vector<1x128xf32> to vector<128xf32>
    %149 = vector.shape_cast %148 : vector<128xf32> to vector<1x1x128xf32>
    %150 = vector.broadcast %149 : vector<1x1x128xf32> to vector<16x16x128xf32>
    %151 = arith.mulf %146, %150 : vector<16x16x128xf32>
    %152 = arith.addf %145, %151 : vector<16x16x128xf32>
    %153 = vector.extract_strided_slice %7 {offsets = [1, 0, 0], sizes = [16, 16, 128], strides = [1, 1, 1]} : vector<20x16x128xf32> to vector<16x16x128xf32>
    %154 = vector.extract_strided_slice %10 {offsets = [16, 0], sizes = [1, 128], strides = [1, 1]} : vector<34x128xf32> to vector<1x128xf32>
    %155 = vector.shape_cast %154 : vector<1x128xf32> to vector<128xf32>
    %156 = vector.shape_cast %155 : vector<128xf32> to vector<1x1x128xf32>
    %157 = vector.broadcast %156 : vector<1x1x128xf32> to vector<16x16x128xf32>
    %158 = arith.mulf %153, %157 : vector<16x16x128xf32>
    %159 = arith.addf %152, %158 : vector<16x16x128xf32>
    %160 = vector.extract_strided_slice %8 {offsets = [1, 0, 0], sizes = [16, 16, 128], strides = [1, 1, 1]} : vector<20x16x128xf32> to vector<16x16x128xf32>
    %161 = vector.extract_strided_slice %10 {offsets = [17, 0], sizes = [1, 128], strides = [1, 1]} : vector<34x128xf32> to vector<1x128xf32>
    %162 = vector.shape_cast %161 : vector<1x128xf32> to vector<128xf32>
    %163 = vector.shape_cast %162 : vector<128xf32> to vector<1x1x128xf32>
    %164 = vector.broadcast %163 : vector<1x1x128xf32> to vector<16x16x128xf32>
    %165 = arith.mulf %160, %164 : vector<16x16x128xf32>
    %166 = arith.addf %159, %165 : vector<16x16x128xf32>
    %167 = vector.extract_strided_slice %9 {offsets = [1, 0, 0], sizes = [16, 16, 128], strides = [1, 1, 1]} : vector<20x16x128xf32> to vector<16x16x128xf32>
    %168 = vector.extract_strided_slice %10 {offsets = [18, 0], sizes = [1, 128], strides = [1, 1]} : vector<34x128xf32> to vector<1x128xf32>
    %169 = vector.shape_cast %168 : vector<1x128xf32> to vector<128xf32>
    %170 = vector.shape_cast %169 : vector<128xf32> to vector<1x1x128xf32>
    %171 = vector.broadcast %170 : vector<1x1x128xf32> to vector<16x16x128xf32>
    %172 = arith.mulf %167, %171 : vector<16x16x128xf32>
    %173 = arith.addf %166, %172 : vector<16x16x128xf32>
    %174 = vector.extract_strided_slice %5 {offsets = [2, 0, 0], sizes = [16, 16, 128], strides = [1, 1, 1]} : vector<20x16x128xf32> to vector<16x16x128xf32>
    %175 = vector.extract_strided_slice %10 {offsets = [19, 0], sizes = [1, 128], strides = [1, 1]} : vector<34x128xf32> to vector<1x128xf32>
    %176 = vector.shape_cast %175 : vector<1x128xf32> to vector<128xf32>
    %177 = vector.shape_cast %176 : vector<128xf32> to vector<1x1x128xf32>
    %178 = vector.broadcast %177 : vector<1x1x128xf32> to vector<16x16x128xf32>
    %179 = arith.mulf %174, %178 : vector<16x16x128xf32>
    %180 = arith.addf %173, %179 : vector<16x16x128xf32>
    %181 = vector.extract_strided_slice %6 {offsets = [2, 0, 0], sizes = [16, 16, 128], strides = [1, 1, 1]} : vector<20x16x128xf32> to vector<16x16x128xf32>
    %182 = vector.extract_strided_slice %10 {offsets = [20, 0], sizes = [1, 128], strides = [1, 1]} : vector<34x128xf32> to vector<1x128xf32>
    %183 = vector.shape_cast %182 : vector<1x128xf32> to vector<128xf32>
    %184 = vector.shape_cast %183 : vector<128xf32> to vector<1x1x128xf32>
    %185 = vector.broadcast %184 : vector<1x1x128xf32> to vector<16x16x128xf32>
    %186 = arith.mulf %181, %185 : vector<16x16x128xf32>
    %187 = arith.addf %180, %186 : vector<16x16x128xf32>
    %188 = vector.extract_strided_slice %7 {offsets = [2, 0, 0], sizes = [16, 16, 128], strides = [1, 1, 1]} : vector<20x16x128xf32> to vector<16x16x128xf32>
    %189 = vector.extract_strided_slice %10 {offsets = [21, 0], sizes = [1, 128], strides = [1, 1]} : vector<34x128xf32> to vector<1x128xf32>
    %190 = vector.shape_cast %189 : vector<1x128xf32> to vector<128xf32>
    %191 = vector.shape_cast %190 : vector<128xf32> to vector<1x1x128xf32>
    %192 = vector.broadcast %191 : vector<1x1x128xf32> to vector<16x16x128xf32>
    %193 = arith.mulf %188, %192 : vector<16x16x128xf32>
    %194 = arith.addf %187, %193 : vector<16x16x128xf32>
    %195 = vector.extract_strided_slice %8 {offsets = [2, 0, 0], sizes = [16, 16, 128], strides = [1, 1, 1]} : vector<20x16x128xf32> to vector<16x16x128xf32>
    %196 = vector.extract_strided_slice %10 {offsets = [22, 0], sizes = [1, 128], strides = [1, 1]} : vector<34x128xf32> to vector<1x128xf32>
    %197 = vector.shape_cast %196 : vector<1x128xf32> to vector<128xf32>
    %198 = vector.shape_cast %197 : vector<128xf32> to vector<1x1x128xf32>
    %199 = vector.broadcast %198 : vector<1x1x128xf32> to vector<16x16x128xf32>
    %200 = arith.mulf %195, %199 : vector<16x16x128xf32>
    %201 = arith.addf %194, %200 : vector<16x16x128xf32>
    %202 = vector.extract_strided_slice %9 {offsets = [2, 0, 0], sizes = [16, 16, 128], strides = [1, 1, 1]} : vector<20x16x128xf32> to vector<16x16x128xf32>
    %203 = vector.extract_strided_slice %10 {offsets = [23, 0], sizes = [1, 128], strides = [1, 1]} : vector<34x128xf32> to vector<1x128xf32>
    %204 = vector.shape_cast %203 : vector<1x128xf32> to vector<128xf32>
    %205 = vector.shape_cast %204 : vector<128xf32> to vector<1x1x128xf32>
    %206 = vector.broadcast %205 : vector<1x1x128xf32> to vector<16x16x128xf32>
    %207 = arith.mulf %202, %206 : vector<16x16x128xf32>
    %208 = arith.addf %201, %207 : vector<16x16x128xf32>
    %209 = vector.extract_strided_slice %5 {offsets = [3, 0, 0], sizes = [16, 16, 128], strides = [1, 1, 1]} : vector<20x16x128xf32> to vector<16x16x128xf32>
    %210 = vector.extract_strided_slice %10 {offsets = [24, 0], sizes = [1, 128], strides = [1, 1]} : vector<34x128xf32> to vector<1x128xf32>
    %211 = vector.shape_cast %210 : vector<1x128xf32> to vector<128xf32>
    %212 = vector.shape_cast %211 : vector<128xf32> to vector<1x1x128xf32>
    %213 = vector.broadcast %212 : vector<1x1x128xf32> to vector<16x16x128xf32>
    %214 = arith.mulf %209, %213 : vector<16x16x128xf32>
    %215 = arith.addf %208, %214 : vector<16x16x128xf32>
    %216 = vector.extract_strided_slice %6 {offsets = [3, 0, 0], sizes = [16, 16, 128], strides = [1, 1, 1]} : vector<20x16x128xf32> to vector<16x16x128xf32>
    %217 = vector.extract_strided_slice %10 {offsets = [25, 0], sizes = [1, 128], strides = [1, 1]} : vector<34x128xf32> to vector<1x128xf32>
    %218 = vector.shape_cast %217 : vector<1x128xf32> to vector<128xf32>
    %219 = vector.shape_cast %218 : vector<128xf32> to vector<1x1x128xf32>
    %220 = vector.broadcast %219 : vector<1x1x128xf32> to vector<16x16x128xf32>
    %221 = arith.mulf %216, %220 : vector<16x16x128xf32>
    %222 = arith.addf %215, %221 : vector<16x16x128xf32>
    %223 = vector.extract_strided_slice %7 {offsets = [3, 0, 0], sizes = [16, 16, 128], strides = [1, 1, 1]} : vector<20x16x128xf32> to vector<16x16x128xf32>
    %224 = vector.extract_strided_slice %10 {offsets = [26, 0], sizes = [1, 128], strides = [1, 1]} : vector<34x128xf32> to vector<1x128xf32>
    %225 = vector.shape_cast %224 : vector<1x128xf32> to vector<128xf32>
    %226 = vector.shape_cast %225 : vector<128xf32> to vector<1x1x128xf32>
    %227 = vector.broadcast %226 : vector<1x1x128xf32> to vector<16x16x128xf32>
    %228 = arith.mulf %223, %227 : vector<16x16x128xf32>
    %229 = arith.addf %222, %228 : vector<16x16x128xf32>
    %230 = vector.extract_strided_slice %8 {offsets = [3, 0, 0], sizes = [16, 16, 128], strides = [1, 1, 1]} : vector<20x16x128xf32> to vector<16x16x128xf32>
    %231 = vector.extract_strided_slice %10 {offsets = [27, 0], sizes = [1, 128], strides = [1, 1]} : vector<34x128xf32> to vector<1x128xf32>
    %232 = vector.shape_cast %231 : vector<1x128xf32> to vector<128xf32>
    %233 = vector.shape_cast %232 : vector<128xf32> to vector<1x1x128xf32>
    %234 = vector.broadcast %233 : vector<1x1x128xf32> to vector<16x16x128xf32>
    %235 = arith.mulf %230, %234 : vector<16x16x128xf32>
    %236 = arith.addf %229, %235 : vector<16x16x128xf32>
    %237 = vector.extract_strided_slice %9 {offsets = [3, 0, 0], sizes = [16, 16, 128], strides = [1, 1, 1]} : vector<20x16x128xf32> to vector<16x16x128xf32>
    %238 = vector.extract_strided_slice %10 {offsets = [28, 0], sizes = [1, 128], strides = [1, 1]} : vector<34x128xf32> to vector<1x128xf32>
    %239 = vector.shape_cast %238 : vector<1x128xf32> to vector<128xf32>
    %240 = vector.shape_cast %239 : vector<128xf32> to vector<1x1x128xf32>
    %241 = vector.broadcast %240 : vector<1x1x128xf32> to vector<16x16x128xf32>
    %242 = arith.mulf %237, %241 : vector<16x16x128xf32>
    %243 = arith.addf %236, %242 : vector<16x16x128xf32>
    %244 = vector.extract_strided_slice %5 {offsets = [4, 0, 0], sizes = [16, 16, 128], strides = [1, 1, 1]} : vector<20x16x128xf32> to vector<16x16x128xf32>
    %245 = vector.extract_strided_slice %10 {offsets = [29, 0], sizes = [1, 128], strides = [1, 1]} : vector<34x128xf32> to vector<1x128xf32>
    %246 = vector.shape_cast %245 : vector<1x128xf32> to vector<128xf32>
    %247 = vector.shape_cast %246 : vector<128xf32> to vector<1x1x128xf32>
    %248 = vector.broadcast %247 : vector<1x1x128xf32> to vector<16x16x128xf32>
    %249 = arith.mulf %244, %248 : vector<16x16x128xf32>
    %250 = arith.addf %243, %249 : vector<16x16x128xf32>
    %251 = vector.extract_strided_slice %6 {offsets = [4, 0, 0], sizes = [16, 16, 128], strides = [1, 1, 1]} : vector<20x16x128xf32> to vector<16x16x128xf32>
    %252 = vector.extract_strided_slice %10 {offsets = [30, 0], sizes = [1, 128], strides = [1, 1]} : vector<34x128xf32> to vector<1x128xf32>
    %253 = vector.shape_cast %252 : vector<1x128xf32> to vector<128xf32>
    %254 = vector.shape_cast %253 : vector<128xf32> to vector<1x1x128xf32>
    %255 = vector.broadcast %254 : vector<1x1x128xf32> to vector<16x16x128xf32>
    %256 = arith.mulf %251, %255 : vector<16x16x128xf32>
    %257 = arith.addf %250, %256 : vector<16x16x128xf32>
    %258 = vector.extract_strided_slice %7 {offsets = [4, 0, 0], sizes = [16, 16, 128], strides = [1, 1, 1]} : vector<20x16x128xf32> to vector<16x16x128xf32>
    %259 = vector.extract_strided_slice %10 {offsets = [31, 0], sizes = [1, 128], strides = [1, 1]} : vector<34x128xf32> to vector<1x128xf32>
    %260 = vector.shape_cast %259 : vector<1x128xf32> to vector<128xf32>
    %261 = vector.shape_cast %260 : vector<128xf32> to vector<1x1x128xf32>
    %262 = vector.broadcast %261 : vector<1x1x128xf32> to vector<16x16x128xf32>
    %263 = arith.mulf %258, %262 : vector<16x16x128xf32>
    %264 = arith.addf %257, %263 : vector<16x16x128xf32>
    %265 = vector.extract_strided_slice %8 {offsets = [4, 0, 0], sizes = [16, 16, 128], strides = [1, 1, 1]} : vector<20x16x128xf32> to vector<16x16x128xf32>
    %266 = vector.extract_strided_slice %10 {offsets = [32, 0], sizes = [1, 128], strides = [1, 1]} : vector<34x128xf32> to vector<1x128xf32>
    %267 = vector.shape_cast %266 : vector<1x128xf32> to vector<128xf32>
    %268 = vector.shape_cast %267 : vector<128xf32> to vector<1x1x128xf32>
    %269 = vector.broadcast %268 : vector<1x1x128xf32> to vector<16x16x128xf32>
    %270 = arith.mulf %265, %269 : vector<16x16x128xf32>
    %271 = arith.addf %264, %270 : vector<16x16x128xf32>
    %272 = vector.extract_strided_slice %9 {offsets = [4, 0, 0], sizes = [16, 16, 128], strides = [1, 1, 1]} : vector<20x16x128xf32> to vector<16x16x128xf32>
    %273 = vector.extract_strided_slice %10 {offsets = [33, 0], sizes = [1, 128], strides = [1, 1]} : vector<34x128xf32> to vector<1x128xf32>
    %274 = vector.shape_cast %273 : vector<1x128xf32> to vector<128xf32>
    %275 = vector.shape_cast %274 : vector<128xf32> to vector<1x1x128xf32>
    %276 = vector.broadcast %275 : vector<1x1x128xf32> to vector<16x16x128xf32>
    %277 = arith.mulf %272, %276 : vector<16x16x128xf32>
    %278 = arith.addf %271, %277 : vector<16x16x128xf32>
    %279 = vector.extract_strided_slice %11 {offsets = [4, 0], sizes = [1, 128], strides = [1, 1]} : vector<8x128xf32> to vector<1x128xf32>
    %280 = vector.shape_cast %279 : vector<1x128xf32> to vector<128xf32>
    %281 = vector.shape_cast %280 : vector<128xf32> to vector<1x1x128xf32>
    %282 = vector.broadcast %281 : vector<1x1x128xf32> to vector<16x16x128xf32>
    %283 = arith.mulf %278, %282 : vector<16x16x128xf32>
    %284 = vector.extract_strided_slice %11 {offsets = [5, 0], sizes = [1, 128], strides = [1, 1]} : vector<8x128xf32> to vector<1x128xf32>
    %285 = vector.shape_cast %284 : vector<1x128xf32> to vector<128xf32>
    %286 = vector.shape_cast %285 : vector<128xf32> to vector<1x1x128xf32>
    %287 = vector.broadcast %286 : vector<1x1x128xf32> to vector<16x16x128xf32>
    %288 = arith.addf %283, %287 : vector<16x16x128xf32>
    %289 = vector.shape_cast %288 : vector<16x16x128xf32> to vector<256x128xf32>
    %c1_31 = arith.constant 1 : index
    %c0_32 = arith.constant 0 : index
    %c0_33 = arith.constant 0 : index
    %290 = vector.load %arg3[%c1_31, %c0_32, %c0_33] : memref<2x128x128xf32, #tpu.memory_space<vmem>>, vector<1x128x128xf32>
    %291 = vector.shape_cast %290 : vector<1x128x128xf32> to vector<128x128xf32>
    %cst_34 = arith.constant dense<0.000000e+00> : vector<256x128xf32>
    %292 = tpu.matmul %289, %291, %cst_34 {dimension_numbers = #tpu.dot_dimension_numbers<[1], [0], [0], [1], [0, 0, 1, 1], [], []>} : vector<256x128xf32>, vector<128x128xf32>, vector<256x128xf32> -> vector<256x128xf32>
    %293 = vector.extract_strided_slice %11 {offsets = [6, 0], sizes = [1, 128], strides = [1, 1]} : vector<8x128xf32> to vector<1x128xf32>
    %294 = vector.shape_cast %293 : vector<1x128xf32> to vector<128xf32>
    %295 = vector.shape_cast %294 : vector<128xf32> to vector<1x128xf32>
    %296 = vector.broadcast %295 : vector<1x128xf32> to vector<256x128xf32>
    %297 = arith.mulf %292, %296 : vector<256x128xf32>
    %298 = vector.extract_strided_slice %11 {offsets = [7, 0], sizes = [1, 128], strides = [1, 1]} : vector<8x128xf32> to vector<1x128xf32>
    %299 = vector.shape_cast %298 : vector<1x128xf32> to vector<128xf32>
    %300 = vector.shape_cast %299 : vector<128xf32> to vector<1x128xf32>
    %301 = vector.broadcast %300 : vector<1x128xf32> to vector<256x128xf32>
    %302 = arith.addf %297, %301 : vector<256x128xf32>
    %cst_35 = arith.constant 0.000000e+00 : f32
    %303 = vector.broadcast %cst_35 : f32 to vector<256x128xf32>
    %304 = arith.maximumf %302, %303 : vector<256x128xf32>
    %305 = vector.shape_cast %304 : vector<256x128xf32> to vector<16x16x128xf32>
    %306 = arith.addf %102, %305 : vector<16x16x128xf32>
    %307 = vector.extract_strided_slice %306 {offsets = [0, 0, 0], sizes = [1, 16, 128], strides = [1, 1, 1]} : vector<16x16x128xf32> to vector<1x16x128xf32>
    %308 = vector.extract_strided_slice %306 {offsets = [0, 0, 0], sizes = [15, 16, 128], strides = [1, 1, 1]} : vector<16x16x128xf32> to vector<15x16x128xf32>
    %309 = tpu.concatenate %307, %308 in 0 : vector<1x16x128xf32>, vector<15x16x128xf32> -> vector<16x16x128xf32>
    %310 = vector.extract_strided_slice %306 {offsets = [1, 0, 0], sizes = [15, 16, 128], strides = [1, 1, 1]} : vector<16x16x128xf32> to vector<15x16x128xf32>
    %311 = vector.extract_strided_slice %306 {offsets = [15, 0, 0], sizes = [1, 16, 128], strides = [1, 1, 1]} : vector<16x16x128xf32> to vector<1x16x128xf32>
    %312 = tpu.concatenate %310, %311 in 0 : vector<15x16x128xf32>, vector<1x16x128xf32> -> vector<16x16x128xf32>
    %cst_36 = arith.constant 2.500000e-01 : f32
    %313 = vector.broadcast %cst_36 : f32 to vector<16x16x128xf32>
    %314 = arith.mulf %313, %309 : vector<16x16x128xf32>
    %cst_37 = arith.constant 7.500000e-01 : f32
    %315 = vector.broadcast %cst_37 : f32 to vector<16x16x128xf32>
    %316 = arith.mulf %315, %306 : vector<16x16x128xf32>
    %317 = arith.addf %314, %316 : vector<16x16x128xf32>
    %cst_38 = arith.constant 7.500000e-01 : f32
    %318 = vector.broadcast %cst_38 : f32 to vector<16x16x128xf32>
    %319 = arith.mulf %318, %306 : vector<16x16x128xf32>
    %cst_39 = arith.constant 2.500000e-01 : f32
    %320 = vector.broadcast %cst_39 : f32 to vector<16x16x128xf32>
    %321 = arith.mulf %320, %312 : vector<16x16x128xf32>
    %322 = arith.addf %319, %321 : vector<16x16x128xf32>
    %c0_40 = arith.constant 0 : index
    %c1_41 = arith.constant 1 : index
    %c0_42 = arith.constant 0 : index
    %323 = vector.load %arg7[%c0_40, %c1_41, %c0_42] : memref<16x18x128xf32, #tpu.memory_space<vmem>>, vector<16x16x128xf32>
    tpu.vector_store %arg7[%c0_40, %c1_41, %c0_42], %317 {strides = array<i32>} : memref<16x18x128xf32, #tpu.memory_space<vmem>>, vector<16x16x128xf32>,
    %324 = vector.extract_strided_slice %317 {offsets = [0, 0, 0], sizes = [16, 1, 128], strides = [1, 1, 1]} : vector<16x16x128xf32> to vector<16x1x128xf32>
    %c0_43 = arith.constant 0 : index
    %c0_44 = arith.constant 0 : index
    %c0_45 = arith.constant 0 : index
    %325 = vector.load %arg7[%c0_43, %c0_44, %c0_45] : memref<16x18x128xf32, #tpu.memory_space<vmem>>, vector<16x1x128xf32>
    tpu.vector_store %arg7[%c0_43, %c0_44, %c0_45], %324 {strides = array<i32>} : memref<16x18x128xf32, #tpu.memory_space<vmem>>, vector<16x1x128xf32>,
    %326 = vector.extract_strided_slice %317 {offsets = [0, 15, 0], sizes = [16, 1, 128], strides = [1, 1, 1]} : vector<16x16x128xf32> to vector<16x1x128xf32>
    %c0_46 = arith.constant 0 : index
    %c17 = arith.constant 17 : index
    %c0_47 = arith.constant 0 : index
    %327 = vector.load %arg7[%c0_46, %c17, %c0_47] : memref<16x18x128xf32, #tpu.memory_space<vmem>>, vector<16x1x128xf32>
    tpu.vector_store %arg7[%c0_46, %c17, %c0_47], %326 {strides = array<i32>} : memref<16x18x128xf32, #tpu.memory_space<vmem>>, vector<16x1x128xf32>,
    %c0_48 = arith.constant 0 : index
    %c0_49 = arith.constant 0 : index
    %c0_50 = arith.constant 0 : index
    %328 = vector.load %arg7[%c0_48, %c0_49, %c0_50] : memref<16x18x128xf32, #tpu.memory_space<vmem>>, vector<16x16x128xf32>
    %c0_51 = arith.constant 0 : index
    %c2_52 = arith.constant 2 : index
    %c0_53 = arith.constant 0 : index
    %329 = vector.load %arg7[%c0_51, %c2_52, %c0_53] : memref<16x18x128xf32, #tpu.memory_space<vmem>>, vector<16x16x128xf32>
    %cst_54 = arith.constant 2.500000e-01 : f32
    %330 = vector.broadcast %cst_54 : f32 to vector<16x16x128xf32>
    %331 = arith.mulf %330, %328 : vector<16x16x128xf32>
    %cst_55 = arith.constant 7.500000e-01 : f32
    %332 = vector.broadcast %cst_55 : f32 to vector<16x16x128xf32>
    %333 = arith.mulf %332, %317 : vector<16x16x128xf32>
    %334 = arith.addf %331, %333 : vector<16x16x128xf32>
    %cst_56 = arith.constant 7.500000e-01 : f32
    %335 = vector.broadcast %cst_56 : f32 to vector<16x16x128xf32>
    %336 = arith.mulf %335, %317 : vector<16x16x128xf32>
    %cst_57 = arith.constant 2.500000e-01 : f32
    %337 = vector.broadcast %cst_57 : f32 to vector<16x16x128xf32>
    %338 = arith.mulf %337, %329 : vector<16x16x128xf32>
    %339 = arith.addf %336, %338 : vector<16x16x128xf32>
    %c0_58 = arith.constant 0 : index
    %c1_59 = arith.constant 1 : index
    %c0_60 = arith.constant 0 : index
    %340 = vector.load %arg7[%c0_58, %c1_59, %c0_60] : memref<16x18x128xf32, #tpu.memory_space<vmem>>, vector<16x16x128xf32>
    tpu.vector_store %arg7[%c0_58, %c1_59, %c0_60], %322 {strides = array<i32>} : memref<16x18x128xf32, #tpu.memory_space<vmem>>, vector<16x16x128xf32>,
    %341 = vector.extract_strided_slice %322 {offsets = [0, 0, 0], sizes = [16, 1, 128], strides = [1, 1, 1]} : vector<16x16x128xf32> to vector<16x1x128xf32>
    %c0_61 = arith.constant 0 : index
    %c0_62 = arith.constant 0 : index
    %c0_63 = arith.constant 0 : index
    %342 = vector.load %arg7[%c0_61, %c0_62, %c0_63] : memref<16x18x128xf32, #tpu.memory_space<vmem>>, vector<16x1x128xf32>
    tpu.vector_store %arg7[%c0_61, %c0_62, %c0_63], %341 {strides = array<i32>} : memref<16x18x128xf32, #tpu.memory_space<vmem>>, vector<16x1x128xf32>,
    %343 = vector.extract_strided_slice %322 {offsets = [0, 15, 0], sizes = [16, 1, 128], strides = [1, 1, 1]} : vector<16x16x128xf32> to vector<16x1x128xf32>
    %c0_64 = arith.constant 0 : index
    %c17_65 = arith.constant 17 : index
    %c0_66 = arith.constant 0 : index
    %344 = vector.load %arg7[%c0_64, %c17_65, %c0_66] : memref<16x18x128xf32, #tpu.memory_space<vmem>>, vector<16x1x128xf32>
    tpu.vector_store %arg7[%c0_64, %c17_65, %c0_66], %343 {strides = array<i32>} : memref<16x18x128xf32, #tpu.memory_space<vmem>>, vector<16x1x128xf32>,
    %c0_67 = arith.constant 0 : index
    %c0_68 = arith.constant 0 : index
    %c0_69 = arith.constant 0 : index
    %345 = vector.load %arg7[%c0_67, %c0_68, %c0_69] : memref<16x18x128xf32, #tpu.memory_space<vmem>>, vector<16x16x128xf32>
    %c0_70 = arith.constant 0 : index
    %c2_71 = arith.constant 2 : index
    %c0_72 = arith.constant 0 : index
    %346 = vector.load %arg7[%c0_70, %c2_71, %c0_72] : memref<16x18x128xf32, #tpu.memory_space<vmem>>, vector<16x16x128xf32>
    %cst_73 = arith.constant 2.500000e-01 : f32
    %347 = vector.broadcast %cst_73 : f32 to vector<16x16x128xf32>
    %348 = arith.mulf %347, %345 : vector<16x16x128xf32>
    %cst_74 = arith.constant 7.500000e-01 : f32
    %349 = vector.broadcast %cst_74 : f32 to vector<16x16x128xf32>
    %350 = arith.mulf %349, %322 : vector<16x16x128xf32>
    %351 = arith.addf %348, %350 : vector<16x16x128xf32>
    %cst_75 = arith.constant 7.500000e-01 : f32
    %352 = vector.broadcast %cst_75 : f32 to vector<16x16x128xf32>
    %353 = arith.mulf %352, %322 : vector<16x16x128xf32>
    %cst_76 = arith.constant 2.500000e-01 : f32
    %354 = vector.broadcast %cst_76 : f32 to vector<16x16x128xf32>
    %355 = arith.mulf %354, %346 : vector<16x16x128xf32>
    %356 = arith.addf %353, %355 : vector<16x16x128xf32>
    %c0_77 = arith.constant 0 : index
    %c0_78 = arith.constant 0 : index
    %c0_79 = arith.constant 0 : index
    %c0_80 = arith.constant 0 : index
    %c0_81 = arith.constant 0 : index
    %c0_82 = arith.constant 0 : index
    %357 = vector.load %arg5[%c0_77, %c0_78, %c0_79, %c0_80, %c0_81, %c0_82] : memref<1x2x16x2x16x128xf32, #tpu.memory_space<vmem>>, vector<1x1x16x1x16x128xf32>
    %358 = vector.shape_cast %357 : vector<1x1x16x1x16x128xf32> to vector<16x16x128xf32>
    %359 = vector.shape_cast %334 : vector<16x16x128xf32> to vector<1x1x16x1x16x128xf32>
    tpu.vector_store %arg5[%c0_77, %c0_78, %c0_79, %c0_80, %c0_81, %c0_82], %359 {strides = array<i32>} : memref<1x2x16x2x16x128xf32, #tpu.memory_space<vmem>>, vector<1x1x16x1x16x128xf32>,
    %c0_83 = arith.constant 0 : index
    %c0_84 = arith.constant 0 : index
    %c0_85 = arith.constant 0 : index
    %c1_86 = arith.constant 1 : index
    %c0_87 = arith.constant 0 : index
    %c0_88 = arith.constant 0 : index
    %360 = vector.load %arg5[%c0_83, %c0_84, %c0_85, %c1_86, %c0_87, %c0_88] : memref<1x2x16x2x16x128xf32, #tpu.memory_space<vmem>>, vector<1x1x16x1x16x128xf32>
    %361 = vector.shape_cast %360 : vector<1x1x16x1x16x128xf32> to vector<16x16x128xf32>
    %362 = vector.shape_cast %339 : vector<16x16x128xf32> to vector<1x1x16x1x16x128xf32>
    tpu.vector_store %arg5[%c0_83, %c0_84, %c0_85, %c1_86, %c0_87, %c0_88], %362 {strides = array<i32>} : memref<1x2x16x2x16x128xf32, #tpu.memory_space<vmem>>, vector<1x1x16x1x16x128xf32>,
    %c0_89 = arith.constant 0 : index
    %c1_90 = arith.constant 1 : index
    %c0_91 = arith.constant 0 : index
    %c0_92 = arith.constant 0 : index
    %c0_93 = arith.constant 0 : index
    %c0_94 = arith.constant 0 : index
    %363 = vector.load %arg5[%c0_89, %c1_90, %c0_91, %c0_92, %c0_93, %c0_94] : memref<1x2x16x2x16x128xf32, #tpu.memory_space<vmem>>, vector<1x1x16x1x16x128xf32>
    %364 = vector.shape_cast %363 : vector<1x1x16x1x16x128xf32> to vector<16x16x128xf32>
    %365 = vector.shape_cast %351 : vector<16x16x128xf32> to vector<1x1x16x1x16x128xf32>
    tpu.vector_store %arg5[%c0_89, %c1_90, %c0_91, %c0_92, %c0_93, %c0_94], %365 {strides = array<i32>} : memref<1x2x16x2x16x128xf32, #tpu.memory_space<vmem>>, vector<1x1x16x1x16x128xf32>,
    %c0_95 = arith.constant 0 : index
    %c1_96 = arith.constant 1 : index
    %c0_97 = arith.constant 0 : index
    %c1_98 = arith.constant 1 : index
    %c0_99 = arith.constant 0 : index
    %c0_100 = arith.constant 0 : index
    %366 = vector.load %arg5[%c0_95, %c1_96, %c0_97, %c1_98, %c0_99, %c0_100] : memref<1x2x16x2x16x128xf32, #tpu.memory_space<vmem>>, vector<1x1x16x1x16x128xf32>
    %367 = vector.shape_cast %366 : vector<1x1x16x1x16x128xf32> to vector<16x16x128xf32>
    %368 = vector.shape_cast %356 : vector<16x16x128xf32> to vector<1x1x16x1x16x128xf32>
    tpu.vector_store %arg5[%c0_95, %c1_96, %c0_97, %c1_98, %c0_99, %c0_100], %368 {strides = array<i32>} : memref<1x2x16x2x16x128xf32, #tpu.memory_space<vmem>>, vector<1x1x16x1x16x128xf32>,
    return
  }
  func.func @transform_0(%arg0: i32) -> (i32, i32, i32, i32) {
    %c0_i32 = arith.constant 0 : i32
    %c0_i32_0 = arith.constant 0 : i32
    %c0_i32_1 = arith.constant 0 : i32
    %c0_i32_2 = arith.constant 0 : i32
    return %arg0, %c0_i32, %c0_i32_0, %c0_i32_1 : i32, i32, i32, i32
  }
  func.func @transform_1(%arg0: i32) -> (i32, i32) {
    %c0_i32 = arith.constant 0 : i32
    %c0_i32_0 = arith.constant 0 : i32
    %c0_i32_1 = arith.constant 0 : i32
    return %c0_i32, %c0_i32_0 : i32, i32
  }
  func.func @transform_2(%arg0: i32) -> (i32, i32, i32) {
    %c0_i32 = arith.constant 0 : i32
    %c0_i32_0 = arith.constant 0 : i32
    %c0_i32_1 = arith.constant 0 : i32
    %c0_i32_2 = arith.constant 0 : i32
    return %c0_i32, %c0_i32_0, %c0_i32_1 : i32, i32, i32
  }
  func.func @transform_3(%arg0: i32) -> (i32, i32) {
    %c0_i32 = arith.constant 0 : i32
    %c0_i32_0 = arith.constant 0 : i32
    %c0_i32_1 = arith.constant 0 : i32
    return %c0_i32, %c0_i32_0 : i32, i32
  }
  func.func @transform_4(%arg0: i32) -> (i32, i32, i32, i32, i32, i32) {
    %c0_i32 = arith.constant 0 : i32
    %c0_i32_0 = arith.constant 0 : i32
    %c0_i32_1 = arith.constant 0 : i32
    %c0_i32_2 = arith.constant 0 : i32
    %c0_i32_3 = arith.constant 0 : i32
    %c0_i32_4 = arith.constant 0 : i32
    return %arg0, %c0_i32, %c0_i32_0, %c0_i32_1, %c0_i32_2, %c0_i32_3 : i32, i32, i32, i32, i32, i32
  }
}

</mosaic_0001>

<llo_original>
// kernel: complex_upsample.1
$region0: #{complex_upsample.1}
  #allocation0 [shape = 'u32[]', space=smem, size = 0x4, offset = 0x4, fixed_abs, tag = 'smem constant byte address 0x4 - core index']
  #allocation1 [shape = 'u32[144,128]{1,0:T(1,128)}', space=vmem, size = 0x12000, scoped, tag = 'internal scratch']
  #allocation2 [shape = 'f32[20,20,128]{2,1,0:T(8,128)}', space=vmem, size = 0x3c000, scoped, tag = 'scratch operand']
  #allocation3 [shape = 'f32[16,18,128]{2,1,0:T(8,128)}', space=vmem, size = 0x30000, scoped, tag = 'scratch operand']
  %s0 = inlined_call_operand.hbm [shape: f32[2,16,16,128], index: 0, kind: input, shape index: {}]
  %s1 = inlined_call_operand.hbm [shape: f32[34,128], index: 1, kind: input, shape index: {}]
  %s2 = inlined_call_operand.hbm [shape: f32[2,128,128], index: 2, kind: input, shape index: {}]
  %s3 = inlined_call_operand.vmem [shape: f32[8,128], index: 3, kind: input, shape index: {}]
  %s4 = inlined_call_operand.vmem [shape: f32[2,2,16,2,16,128], index: 4, kind: output, shape index: {}]
  %s5 = sld [smem:[#allocation0]]
  $region61: #{complex_upsample.1} parent=0
    _
  %s7 = ssub.s32 1, %s5
  %s8 = scalar_select 0, %s7, %s5
  $region1: #{complex_upsample.1} parent=0
    #allocation4 [shape = 'u8[262144]{0}', space=vmem, size = 0x40000, scoped, tag = 'input window, operand 0']
    #allocation5 [shape = 's32[2]{0}', space=sflag, size = 0x8, scoped, tag = 'scoped memory for complex_upsample.1']
    #allocation6 [shape = 'u8[20480]{0}', space=vmem, size = 0x5000, scoped, tag = 'input window, operand 1, single buffered']
    #allocation7 [shape = 's32[1]{0}', space=sflag, size = 0x4, scoped, tag = 'scoped memory for complex_upsample.1']
    #allocation8 [shape = 'u8[131072]{0}', space=vmem, size = 0x20000, scoped, tag = 'input window, operand 2, single buffered']
    %9 = vsyncpa [#allocation5], 0
    %s10 = scalar_lea.sflag [#allocation5], 1
    %11 = vsyncpa %s10, 0
    %12 = vsyncpa [#allocation7], 0
    loop: start=0, step=1, limit=4
    $region2: #{complex_upsample.1} parent=1 // loop_pre_header
      _
    $region3: #{complex_upsample.1} parent=1 // loop_header
      %s14 = sphi 0, %s18
      %p15 = scmp.ge.s32.totalorder %s14, 4
      %s24 = sphi 0, %s26
      %s27 = sphi 0, %s24
      %s28 = sphi 0, %s27
      %s44 = sphi 0, %s28
      %s48 = sphi 0, %s48
      %s50 = sphi 0, %s48
      %s51 = sphi 0, %s50
      %s65 = sphi 0, %s51
      %s69 = sphi 0, %s69
      %s71 = sphi 0, %s69
      %s72 = sphi 0, %s71
      %s86 = sphi 0, %s72
      %s90 = sphi 0, %s90
      %s92 = sphi 0, %s90
      %s93 = sphi 0, %s92
      %s107 = sphi 0, %s93
      %s113 = sphi 0, %s115
      %s116 = sphi 0, %s113
      %s117 = sphi 0, %s116
      %s133 = sphi 0, %s117
    $region4: #{complex_upsample.1} parent=1 // loop_header_branch
      %17 = sbr.rel (%p15) target = $region8
    $region5: #{complex_upsample.1} parent=1 // loop_body
      %s19 = ssub.s32 %s14, 1
      %s20 = ssub.s32 %s14, 2
      %s21 = sadd.s32 %s14, 1
      %s22 = ssub.s32 %s14, %s21
      %p23 = scmp.eq.s32.totalorder %s22, 0
      %s25 = sadd.s32 %s24, 1
      %s26 = scalar_select %p23, %s24, %s25
      %p29 = pneg %p23
      %p30 = scmp.eq.s32.totalorder %s14, 1
      %p31 = por %p29, %p30
      %p32 = scmp.ne.s32.totalorder %s24, %s27
      %p33 = scmp.eq.s32.totalorder %s14, 0
      %p34 = por %p32, %p33
      %p35 = scmp.ne.s32.totalorder %s24, %s27
      %p36 = scmp.eq.s32.totalorder %s19, 1
      %p37 = por %p35, %p36
      %p38 = scmp.ne.s32.totalorder %s27, %s28
      %p39 = scmp.eq.s32.totalorder %s19, 0
      %p40 = por %p38, %p39
      %p41 = scmp.ne.s32.totalorder %s27, %s28
      %p42 = scmp.eq.s32.totalorder %s20, 1
      %p43 = por %p41, %p42
      %p45 = scmp.ne.s32.totalorder %s28, %s44
      %p46 = scmp.eq.s32.totalorder %s20, 0
      %p47 = por %p45, %p46
      %s49 = sadd.s32 %s48, 1
      %p52 = scmp.eq.s32.totalorder %s14, 1
      %p53 = scmp.ne.s32.totalorder %s48, %s50
      %p54 = scmp.eq.s32.totalorder %s14, 0
      %p55 = por %p53, %p54
      %p56 = scmp.ne.s32.totalorder %s48, %s50
      %p57 = scmp.eq.s32.totalorder %s19, 1
      %p58 = por %p56, %p57
      %p59 = scmp.ne.s32.totalorder %s50, %s51
      %p60 = scmp.eq.s32.totalorder %s19, 0
      %p61 = por %p59, %p60
      %p62 = scmp.ne.s32.totalorder %s50, %s51
      %p63 = scmp.eq.s32.totalorder %s20, 1
      %p64 = por %p62, %p63
      %p66 = scmp.ne.s32.totalorder %s51, %s65
      %p67 = scmp.eq.s32.totalorder %s20, 0
      %p68 = por %p66, %p67
      %s70 = sadd.s32 %s69, 1
      %p73 = scmp.eq.s32.totalorder %s14, 1
      %p74 = scmp.ne.s32.totalorder %s69, %s71
      %p75 = scmp.eq.s32.totalorder %s14, 0
      %p76 = por %p74, %p75
      %p77 = scmp.ne.s32.totalorder %s69, %s71
      %p78 = scmp.eq.s32.totalorder %s19, 1
      %p79 = por %p77, %p78
      %p80 = scmp.ne.s32.totalorder %s71, %s72
      %p81 = scmp.eq.s32.totalorder %s19, 0
      %p82 = por %p80, %p81
      %p83 = scmp.ne.s32.totalorder %s71, %s72
      %p84 = scmp.eq.s32.totalorder %s20, 1
      %p85 = por %p83, %p84
      %p87 = scmp.ne.s32.totalorder %s72, %s86
      %p88 = scmp.eq.s32.totalorder %s20, 0
      %p89 = por %p87, %p88
      %s91 = sadd.s32 %s90, 1
      %p94 = scmp.eq.s32.totalorder %s14, 1
      %p95 = scmp.ne.s32.totalorder %s90, %s92
      %p96 = scmp.eq.s32.totalorder %s14, 0
      %p97 = por %p95, %p96
      %p98 = scmp.ne.s32.totalorder %s90, %s92
      %p99 = scmp.eq.s32.totalorder %s19, 1
      %p100 = por %p98, %p99
      %p101 = scmp.ne.s32.totalorder %s92, %s93
      %p102 = scmp.eq.s32.totalorder %s19, 0
      %p103 = por %p101, %p102
      %p104 = scmp.ne.s32.totalorder %s92, %s93
      %p105 = scmp.eq.s32.totalorder %s20, 1
      %p106 = por %p104, %p105
      %p108 = scmp.ne.s32.totalorder %s93, %s107
      %p109 = scmp.eq.s32.totalorder %s20, 0
      %p110 = por %p108, %p109
      %s111 = ssub.s32 %s14, %s21
      %p112 = scmp.eq.s32.totalorder %s111, 0
      %s114 = sadd.s32 %s113, 1
      %s115 = scalar_select %p112, %s113, %s114
      %p118 = pneg %p112
      %p119 = scmp.eq.s32.totalorder %s14, 1
      %p120 = por %p118, %p119
      %p121 = scmp.ne.s32.totalorder %s113, %s116
      %p122 = scmp.eq.s32.totalorder %s14, 0
      %p123 = por %p121, %p122
      %p124 = scmp.ne.s32.totalorder %s113, %s116
      %p125 = scmp.eq.s32.totalorder %s19, 1
      %p126 = por %p124, %p125
      %p127 = scmp.ne.s32.totalorder %s116, %s117
      %p128 = scmp.eq.s32.totalorder %s19, 0
      %p129 = por %p127, %p128
      %p130 = scmp.ne.s32.totalorder %s116, %s117
      %p131 = scmp.eq.s32.totalorder %s20, 1
      %p132 = por %p130, %p131
      %p134 = scmp.ne.s32.totalorder %s117, %s133
      %p135 = scmp.eq.s32.totalorder %s20, 0
      %p136 = por %p134, %p135
      %p137 = scmp.le.s32.totalorder 1, %s14
      %p138 = scmp.lt.s32.totalorder %s14, 3
      %p139 = pnand %p137, %p138
      %p140 = pneg %p139
      // Predicated region
      $region9: #{complex_upsample.1} parent=5 // pred_check
        _
      $region10: #{complex_upsample.1} parent=5 // pred_check_branch
        %142 = sbr.rel (%p139) target = $region12
      $region11: #{complex_upsample.1} parent=5 // pred_region
        %s143 = ssub.s32 %s14, 1
        // Predicated region
        $region13: #{complex_upsample.1} parent=11 // pred_check
          %p144 = pneg %p61
        $region14: #{complex_upsample.1} parent=11 // pred_check_branch
          %146 = sbr.rel (%p144) target = $region16
        $region15: #{complex_upsample.1} parent=11 // pred_region
          %s148 = ssub.s32 640, 640
          %149 = vsyncadd [#allocation7], %s148
          %s150 = sshll.u32 [#allocation6], 4
          %s151 = int_to_ptr.vmem [resolvable:$true] %s150
          %156 = dma.hbm_to_vmem [thread:$0]  %s1, 640, %s151, [#allocation7], 128, 128, 8
        $region16: #{complex_upsample.1} parent=11 // pred_fallthru
          _
        // Predicated region
        $region17: #{complex_upsample.1} parent=11 // pred_check
          %p157 = pneg %p82
        $region18: #{complex_upsample.1} parent=11 // pred_check_branch
          %159 = sbr.rel (%p157) target = $region20
        $region19: #{complex_upsample.1} parent=11 // pred_region
          %s161 = ssub.s32 4096, 4096
          %162 = vsyncadd [#allocation7], %s161
          %s163 = sshll.u32 [#allocation8], 4
          %s164 = int_to_ptr.vmem [resolvable:$true] %s163
          %169 = dma.hbm_to_vmem [thread:$0]  %s2, 4096, %s164, [#allocation7], 128, 128, 8
        $region20: #{complex_upsample.1} parent=11 // pred_fallthru
          _
        // Predicated region
        $region21: #{complex_upsample.1} parent=11 // pred_check
          %p170 = pneg %p103
        $region22: #{complex_upsample.1} parent=11 // pred_check_branch
          %172 = sbr.rel (%p170) target = $region24
        $region23: #{complex_upsample.1} parent=11 // pred_region
          _
        $region24: #{complex_upsample.1} parent=11 // pred_fallthru
          _
      $region12: #{complex_upsample.1} parent=5 // pred_fallthru
        _
      %p173 = scmp.lt.s32.totalorder %s14, 2
      // Predicated region
      $region25: #{complex_upsample.1} parent=5 // pred_check
        %p174 = pneg %p173
      $region26: #{complex_upsample.1} parent=5 // pred_check_branch
        %176 = sbr.rel (%p174) target = $region28
      $region27: #{complex_upsample.1} parent=5 // pred_region
        // Predicated region
        $region29: #{complex_upsample.1} parent=27 // pred_check
          %p177 = pneg %p34
        $region30: #{complex_upsample.1} parent=27 // pred_check_branch
          %179 = sbr.rel (%p177) target = $region32
        $region31: #{complex_upsample.1} parent=27 // pred_region
          %s180 = sand.u32 %s24, 1
          %s181 = scalar_lea.sflag [#allocation5], %s180
          %s182 = sand.u32 %s24, 1
          %s183 = smul.addr %s182, 256
          %s184 = scalar_lea.vmem [#allocation4], %s183
          %s186 = ssub.s32 4096, 4096
          %187 = vsyncadd %s181, %s186
          %s188 = smul.addr %s14, 32
          %s189 = smul.addr %s188, 128
          %s190 = scalar_lea.hbm %s0, %s189
          %s191 = sshll.u32 %s184, 4
          %s192 = int_to_ptr.vmem [resolvable:$true] %s191
          %197 = dma.hbm_to_vmem [thread:$0]  %s190, 4096, %s192, %s181, 128, 128, 8
        $region32: #{complex_upsample.1} parent=27 // pred_fallthru
          _
      $region28: #{complex_upsample.1} parent=5 // pred_fallthru
        _
      %p198 = scmp.le.s32.totalorder 1, %s14
      %p199 = scmp.lt.s32.totalorder %s14, 3
      %p200 = pnand %p198, %p199
      %p201 = pneg %p200
      // Predicated region
      $region33: #{complex_upsample.1} parent=5 // pred_check
        _
      $region34: #{complex_upsample.1} parent=5 // pred_check_branch
        %203 = sbr.rel (%p200) target = $region36
      $region35: #{complex_upsample.1} parent=5 // pred_region
        %s204 = ssub.s32 %s14, 1
        %s205 = sand.u32 %s27, 1
        %s206 = scalar_lea.sflag [#allocation5], %s205
        %s207 = sand.u32 %s27, 1
        %s208 = smul.addr %s207, 256
        %s209 = scalar_lea.vmem [#allocation4], %s208
        // Predicated region
        $region37: #{complex_upsample.1} parent=35 // pred_check
          %p210 = pneg %p40
        $region38: #{complex_upsample.1} parent=35 // pred_check_branch
          %212 = sbr.rel (%p210) target = $region40
        $region39: #{complex_upsample.1} parent=35 // pred_region
          %213 = dma.done %s206, 4096
        $region40: #{complex_upsample.1} parent=35 // pred_fallthru
          _
        // Predicated region
        $region41: #{complex_upsample.1} parent=35 // pred_check
          %p214 = pneg %p61
        $region42: #{complex_upsample.1} parent=35 // pred_check_branch
          %216 = sbr.rel (%p214) target = $region44
        $region43: #{complex_upsample.1} parent=35 // pred_region
          %217 = dma.done [#allocation7], 640
        $region44: #{complex_upsample.1} parent=35 // pred_fallthru
          _
        // Predicated region
        $region45: #{complex_upsample.1} parent=35 // pred_check
          %p218 = pneg %p82
        $region46: #{complex_upsample.1} parent=35 // pred_check_branch
          %220 = sbr.rel (%p218) target = $region48
        $region47: #{complex_upsample.1} parent=35 // pred_region
          %221 = dma.done [#allocation7], 4096
        $region48: #{complex_upsample.1} parent=35 // pred_fallthru
          _
        %s222 = sand.u32 %s27, 1
        %s223 = scalar_lea.sflag [#allocation5], %s222
        %s224 = sand.u32 %s27, 1
        %s225 = smul.addr %s224, 256
        %s226 = scalar_lea.vmem [#allocation4], %s225
        %p227 = pneg %p40
        %p228 = pneg %p37
        %p229 = pneg %p61
        %p230 = pneg %p58
        %p231 = pneg %p82
        %p232 = pneg %p79
        %p233 = pneg %p103
        %p234 = pneg %p100
        %p235 = pneg %p129
        %p236 = pneg %p126
        %p237 = scmp.lt.s32.totalorder %s19, 1
        %s238 = scalar_select %p237, %s19, 1
        %s239 = smul.addr %s238, 128
        %s240 = smul.addr %s239, 8
        %s241 = scalar_lea.vmem %s4, %s240
        %p242 = scmp.lt.s32.totalorder %s19, 1
        %s243 = scalar_select %p242, %s19, 1
        %s244 = smul.addr %s243, 128
        %s245 = smul.addr %s244, 8
        %s246 = scalar_lea.vmem %s4, %s245
        %247 = vst [vmem:[#allocation2] sm:$0xff] 0.0
        %248 = vst [vmem:[#allocation2 + $0x8] sm:$0xff] 0.0
        %249 = vst [vmem:[#allocation2 + $0x10] sm:$0xf] 0.0
        %250 = vst [vmem:[#allocation2 + $0x18] sm:$0xff] 0.0
        %251 = vst [vmem:[#allocation2 + $0x20] sm:$0xff] 0.0
        %252 = vst [vmem:[#allocation2 + $0x28] sm:$0xf] 0.0
        %253 = vst [vmem:[#allocation2 + $0x30] sm:$0xff] 0.0
        %254 = vst [vmem:[#allocation2 + $0x38] sm:$0xff] 0.0
        %255 = vst [vmem:[#allocation2 + $0x40] sm:$0xf] 0.0
        %256 = vst [vmem:[#allocation2 + $0x48] sm:$0xff] 0.0
        %257 = vst [vmem:[#allocation2 + $0x50] sm:$0xff] 0.0
        %258 = vst [vmem:[#allocation2 + $0x58] sm:$0xf] 0.0
        %259 = vst [vmem:[#allocation2 + $0x60] sm:$0xff] 0.0
        %260 = vst [vmem:[#allocation2 + $0x68] sm:$0xff] 0.0
        %261 = vst [vmem:[#allocation2 + $0x70] sm:$0xf] 0.0
        %262 = vst [vmem:[#allocation2 + $0x78] sm:$0xff] 0.0
        %263 = vst [vmem:[#allocation2 + $0x80] sm:$0xff] 0.0
        %264 = vst [vmem:[#allocation2 + $0x88] sm:$0xf] 0.0
        %265 = vst [vmem:[#allocation2 + $0x90] sm:$0xff] 0.0
        %266 = vst [vmem:[#allocation2 + $0x98] sm:$0xff] 0.0
        %267 = vst [vmem:[#allocation2 + $0xa0] sm:$0xf] 0.0
        %268 = vst [vmem:[#allocation2 + $0xa8] sm:$0xff] 0.0
        %269 = vst [vmem:[#allocation2 + $0xb0] sm:$0xff] 0.0
        %270 = vst [vmem:[#allocation2 + $0xb8] sm:$0xf] 0.0
        %271 = vst [vmem:[#allocation2 + $0xc0] sm:$0xff] 0.0
        %272 = vst [vmem:[#allocation2 + $0xc8] sm:$0xff] 0.0
        %273 = vst [vmem:[#allocation2 + $0xd0] sm:$0xf] 0.0
        %274 = vst [vmem:[#allocation2 + $0xd8] sm:$0xff] 0.0
        %275 = vst [vmem:[#allocation2 + $0xe0] sm:$0xff] 0.0
        %276 = vst [vmem:[#allocation2 + $0xe8] sm:$0xf] 0.0
        %277 = vst [vmem:[#allocation2 + $0xf0] sm:$0xff] 0.0
        %278 = vst [vmem:[#allocation2 + $0xf8] sm:$0xff] 0.0
        %279 = vst [vmem:[#allocation2 + $0x100] sm:$0xf] 0.0
        %280 = vst [vmem:[#allocation2 + $0x108] sm:$0xff] 0.0
        %281 = vst [vmem:[#allocation2 + $0x110] sm:$0xff] 0.0
        %282 = vst [vmem:[#allocation2 + $0x118] sm:$0xf] 0.0
        %283 = vst [vmem:[#allocation2 + $0x120] sm:$0xff] 0.0
        %284 = vst [vmem:[#allocation2 + $0x128] sm:$0xff] 0.0
        %285 = vst [vmem:[#allocation2 + $0x130] sm:$0xf] 0.0
        %286 = vst [vmem:[#allocation2 + $0x138] sm:$0xff] 0.0
        %287 = vst [vmem:[#allocation2 + $0x140] sm:$0xff] 0.0
        %288 = vst [vmem:[#allocation2 + $0x148] sm:$0xf] 0.0
        %289 = vst [vmem:[#allocation2 + $0x150] sm:$0xff] 0.0
        %290 = vst [vmem:[#allocation2 + $0x158] sm:$0xff] 0.0
        %291 = vst [vmem:[#allocation2 + $0x160] sm:$0xf] 0.0
        %292 = vst [vmem:[#allocation2 + $0x168] sm:$0xff] 0.0
        %293 = vst [vmem:[#allocation2 + $0x170] sm:$0xff] 0.0
        %294 = vst [vmem:[#allocation2 + $0x178] sm:$0xf] 0.0
        %295 = vst [vmem:[#allocation2 + $0x180] sm:$0xff] 0.0
        %296 = vst [vmem:[#allocation2 + $0x188] sm:$0xff] 0.0
        %297 = vst [vmem:[#allocation2 + $0x190] sm:$0xf] 0.0
        %298 = vst [vmem:[#allocation2 + $0x198] sm:$0xff] 0.0
        %299 = vst [vmem:[#allocation2 + $0x1a0] sm:$0xff] 0.0
        %300 = vst [vmem:[#allocation2 + $0x1a8] sm:$0xf] 0.0
        %301 = vst [vmem:[#allocation2 + $0x1b0] sm:$0xff] 0.0
        %302 = vst [vmem:[#allocation2 + $0x1b8] sm:$0xff] 0.0
        %303 = vst [vmem:[#allocation2 + $0x1c0] sm:$0xf] 0.0
        %304 = vst [vmem:[#allocation2 + $0x1c8] sm:$0xff] 0.0
        %305 = vst [vmem:[#allocation2 + $0x1d0] sm:$0xff] 0.0
        %306 = vst [vmem:[#allocation2 + $0x1d8] sm:$0xf] 0.0
        %v307 = vld [vmem:[%s209] sm:$0xff]
        %v308 = vld [vmem:[%s209 + $0x8] sm:$0xff]
        %v309 = vld [vmem:[%s209 + $0x10] sm:$0xff]
        %v310 = vld [vmem:[%s209 + $0x18] sm:$0xff]
        %v311 = vld [vmem:[%s209 + $0x20] sm:$0xff]
        %v312 = vld [vmem:[%s209 + $0x28] sm:$0xff]
        %v313 = vld [vmem:[%s209 + $0x30] sm:$0xff]
        %v314 = vld [vmem:[%s209 + $0x38] sm:$0xff]
        %v315 = vld [vmem:[%s209 + $0x40] sm:$0xff]
        %v316 = vld [vmem:[%s209 + $0x48] sm:$0xff]
        %v317 = vld [vmem:[%s209 + $0x50] sm:$0xff]
        %v318 = vld [vmem:[%s209 + $0x58] sm:$0xff]
        %v319 = vld [vmem:[%s209 + $0x60] sm:$0xff]
        %v320 = vld [vmem:[%s209 + $0x68] sm:$0xff]
        %v321 = vld [vmem:[%s209 + $0x70] sm:$0xff]
        %v322 = vld [vmem:[%s209 + $0x78] sm:$0xff]
        %v323 = vld [vmem:[%s209 + $0x80] sm:$0xff]
        %v324 = vld [vmem:[%s209 + $0x88] sm:$0xff]
        %v325 = vld [vmem:[%s209 + $0x90] sm:$0xff]
        %v326 = vld [vmem:[%s209 + $0x98] sm:$0xff]
        %v327 = vld [vmem:[%s209 + $0xa0] sm:$0xff]
        %v328 = vld [vmem:[%s209 + $0xa8] sm:$0xff]
        %v329 = vld [vmem:[%s209 + $0xb0] sm:$0xff]
        %v330 = vld [vmem:[%s209 + $0xb8] sm:$0xff]
        %v331 = vld [vmem:[%s209 + $0xc0] sm:$0xff]
        %v332 = vld [vmem:[%s209 + $0xc8] sm:$0xff]
        %v333 = vld [vmem:[%s209 + $0xd0] sm:$0xff]
        %v334 = vld [vmem:[%s209 + $0xd8] sm:$0xff]
        %v335 = vld [vmem:[%s209 + $0xe0] sm:$0xff]
        %v336 = vld [vmem:[%s209 + $0xe8] sm:$0xff]
        %v337 = vld [vmem:[%s209 + $0xf0] sm:$0xff]
        %v338 = vld [vmem:[%s209 + $0xf8] sm:$0xff]
        %s339 = scalar_lea.vmem [#allocation2], 48
        %340 = vst [vmem:[%s339 + $0x2] sm:$0xff] %v307
        %341 = vst [vmem:[%s339 + $0xa] sm:$0xff] %v308
        %342 = vst [vmem:[%s339 + $0x1a] sm:$0xff] %v309
        %343 = vst [vmem:[%s339 + $0x22] sm:$0xff] %v310
        %344 = vst [vmem:[%s339 + $0x32] sm:$0xff] %v311
        %345 = vst [vmem:[%s339 + $0x3a] sm:$0xff] %v312
        %346 = vst [vmem:[%s339 + $0x4a] sm:$0xff] %v313
        %347 = vst [vmem:[%s339 + $0x52] sm:$0xff] %v314
        %348 = vst [vmem:[%s339 + $0x62] sm:$0xff] %v315
        %349 = vst [vmem:[%s339 + $0x6a] sm:$0xff] %v316
        %350 = vst [vmem:[%s339 + $0x7a] sm:$0xff] %v317
        %351 = vst [vmem:[%s339 + $0x82] sm:$0xff] %v318
        %352 = vst [vmem:[%s339 + $0x92] sm:$0xff] %v319
        %353 = vst [vmem:[%s339 + $0x9a] sm:$0xff] %v320
        %354 = vst [vmem:[%s339 + $0xaa] sm:$0xff] %v321
        %355 = vst [vmem:[%s339 + $0xb2] sm:$0xff] %v322
        %356 = vst [vmem:[%s339 + $0xc2] sm:$0xff] %v323
        %357 = vst [vmem:[%s339 + $0xca] sm:$0xff] %v324
        %358 = vst [vmem:[%s339 + $0xda] sm:$0xff] %v325
        %359 = vst [vmem:[%s339 + $0xe2] sm:$0xff] %v326
        %360 = vst [vmem:[%s339 + $0xf2] sm:$0xff] %v327
        %361 = vst [vmem:[%s339 + $0xfa] sm:$0xff] %v328
        %362 = vst [vmem:[%s339 + $0x10a] sm:$0xff] %v329
        %363 = vst [vmem:[%s339 + $0x112] sm:$0xff] %v330
        %364 = vst [vmem:[%s339 + $0x122] sm:$0xff] %v331
        %365 = vst [vmem:[%s339 + $0x12a] sm:$0xff] %v332
        %366 = vst [vmem:[%s339 + $0x13a] sm:$0xff] %v333
        %367 = vst [vmem:[%s339 + $0x142] sm:$0xff] %v334
        %368 = vst [vmem:[%s339 + $0x152] sm:$0xff] %v335
        %369 = vst [vmem:[%s339 + $0x15a] sm:$0xff] %v336
        %370 = vst [vmem:[%s339 + $0x16a] sm:$0xff] %v337
        %371 = vst [vmem:[%s339 + $0x172] sm:$0xff] %v338
        %v372 = vld [vmem:[#allocation2] sm:$0xff]
        %v373 = vld [vmem:[#allocation2 + $0x8] sm:$0xff]
        %v374 = vld [vmem:[#allocation2 + $0x18] sm:$0xff]
        %v375 = vld [vmem:[#allocation2 + $0x20] sm:$0xff]
        %v376 = vld [vmem:[#allocation2 + $0x30] sm:$0xff]
        %v377 = vld [vmem:[#allocation2 + $0x38] sm:$0xff]
        %v378 = vld [vmem:[#allocation2 + $0x48] sm:$0xff]
        %v379 = vld [vmem:[#allocation2 + $0x50] sm:$0xff]
        %v380 = vld [vmem:[#allocation2 + $0x60] sm:$0xff]
        %v381 = vld [vmem:[#allocation2 + $0x68] sm:$0xff]
        %v382 = vld [vmem:[#allocation2 + $0x78] sm:$0xff]
        %v383 = vld [vmem:[#allocation2 + $0x80] sm:$0xff]
        %v384 = vld [vmem:[#allocation2 + $0x90] sm:$0xff]
        %v385 = vld [vmem:[#allocation2 + $0x98] sm:$0xff]
        %v386 = vld [vmem:[#allocation2 + $0xa8] sm:$0xff]
        %v387 = vld [vmem:[#allocation2 + $0xb0] sm:$0xff]
        %v388 = vld [vmem:[#allocation2 + $0xc0] sm:$0xff]
        %v389 = vld [vmem:[#allocation2 + $0xc8] sm:$0xff]
        %v390 = vld [vmem:[#allocation2 + $0xd8] sm:$0xff]
        %v391 = vld [vmem:[#allocation2 + $0xe0] sm:$0xff]
        %v392 = vld [vmem:[#allocation2 + $0xf0] sm:$0xff]
        %v393 = vld [vmem:[#allocation2 + $0xf8] sm:$0xff]
        %v394 = vld [vmem:[#allocation2 + $0x108] sm:$0xff]
        %v395 = vld [vmem:[#allocation2 + $0x110] sm:$0xff]
        %v396 = vld [vmem:[#allocation2 + $0x120] sm:$0xff]
        %v397 = vld [vmem:[#allocation2 + $0x128] sm:$0xff]
        %v398 = vld [vmem:[#allocation2 + $0x138] sm:$0xff]
        %v399 = vld [vmem:[#allocation2 + $0x140] sm:$0xff]
        %v400 = vld [vmem:[#allocation2 + $0x150] sm:$0xff]
        %v401 = vld [vmem:[#allocation2 + $0x158] sm:$0xff]
        %v402 = vld [vmem:[#allocation2 + $0x168] sm:$0xff]
        %v403 = vld [vmem:[#allocation2 + $0x170] sm:$0xff]
        %v404 = vld [vmem:[#allocation2 + $0x180] sm:$0xff]
        %v405 = vld [vmem:[#allocation2 + $0x188] sm:$0xff]
        %v406 = vld [vmem:[#allocation2 + $0x198] sm:$0xff]
        %v407 = vld [vmem:[#allocation2 + $0x1a0] sm:$0xff]
        %v408 = vld [vmem:[#allocation2 + $0x1b0] sm:$0xff]
        %v409 = vld [vmem:[#allocation2 + $0x1b8] sm:$0xff]
        %v410 = vld [vmem:[#allocation2 + $0x1c8] sm:$0xff]
        %v411 = vld [vmem:[#allocation2 + $0x1d0] sm:$0xff]
        %v412 = vld [vmem:[#allocation2 + $0x1] sm:$0xff]
        %v413 = vld [vmem:[#allocation2 + $0x9] sm:$0xff]
        %v414 = vld [vmem:[#allocation2 + $0x19] sm:$0xff]
        %v415 = vld [vmem:[#allocation2 + $0x21] sm:$0xff]
        %v416 = vld [vmem:[#allocation2 + $0x31] sm:$0xff]
        %v417 = vld [vmem:[#allocation2 + $0x39] sm:$0xff]
        %v418 = vld [vmem:[#allocation2 + $0x49] sm:$0xff]
        %v419 = vld [vmem:[#allocation2 + $0x51] sm:$0xff]
        %v420 = vld [vmem:[#allocation2 + $0x61] sm:$0xff]
        %v421 = vld [vmem:[#allocation2 + $0x69] sm:$0xff]
        %v422 = vld [vmem:[#allocation2 + $0x79] sm:$0xff]
        %v423 = vld [vmem:[#allocation2 + $0x81] sm:$0xff]
        %v424 = vld [vmem:[#allocation2 + $0x91] sm:$0xff]
        %v425 = vld [vmem:[#allocation2 + $0x99] sm:$0xff]
        %v426 = vld [vmem:[#allocation2 + $0xa9] sm:$0xff]
        %v427 = vld [vmem:[#allocation2 + $0xb1] sm:$0xff]
        %v428 = vld [vmem:[#allocation2 + $0xc1] sm:$0xff]
        %v429 = vld [vmem:[#allocation2 + $0xc9] sm:$0xff]
        %v430 = vld [vmem:[#allocation2 + $0xd9] sm:$0xff]
        %v431 = vld [vmem:[#allocation2 + $0xe1] sm:$0xff]
        %v432 = vld [vmem:[#allocation2 + $0xf1] sm:$0xff]
        %v433 = vld [vmem:[#allocation2 + $0xf9] sm:$0xff]
        %v434 = vld [vmem:[#allocation2 + $0x109] sm:$0xff]
        %v435 = vld [vmem:[#allocation2 + $0x111] sm:$0xff]
        %v436 = vld [vmem:[#allocation2 + $0x121] sm:$0xff]
        %v437 = vld [vmem:[#allocation2 + $0x129] sm:$0xff]
        %v438 = vld [vmem:[#allocation2 + $0x139] sm:$0xff]
        %v439 = vld [vmem:[#allocation2 + $0x141] sm:$0xff]
        %v440 = vld [vmem:[#allocation2 + $0x151] sm:$0xff]
        %v441 = vld [vmem:[#allocation2 + $0x159] sm:$0xff]
        %v442 = vld [vmem:[#allocation2 + $0x169] sm:$0xff]
        %v443 = vld [vmem:[#allocation2 + $0x171] sm:$0xff]
        %v444 = vld [vmem:[#allocation2 + $0x181] sm:$0xff]
        %v445 = vld [vmem:[#allocation2 + $0x189] sm:$0xff]
        %v446 = vld [vmem:[#allocation2 + $0x199] sm:$0xff]
        %v447 = vld [vmem:[#allocation2 + $0x1a1] sm:$0xff]
        %v448 = vld [vmem:[#allocation2 + $0x1b1] sm:$0xff]
        %v449 = vld [vmem:[#allocation2 + $0x1b9] sm:$0xff]
        %v450 = vld [vmem:[#allocation2 + $0x1c9] sm:$0xff]
        %v451 = vld [vmem:[#allocation2 + $0x1d1] sm:$0xff]
        %v452 = vld [vmem:[#allocation2 + $0x2] sm:$0xff]
        %v453 = vld [vmem:[#allocation2 + $0xa] sm:$0xff]
        %v454 = vld [vmem:[#allocation2 + $0x1a] sm:$0xff]
        %v455 = vld [vmem:[#allocation2 + $0x22] sm:$0xff]
        %v456 = vld [vmem:[#allocation2 + $0x32] sm:$0xff]
        %v457 = vld [vmem:[#allocation2 + $0x3a] sm:$0xff]
        %v458 = vld [vmem:[#allocation2 + $0x4a] sm:$0xff]
        %v459 = vld [vmem:[#allocation2 + $0x52] sm:$0xff]
        %v460 = vld [vmem:[#allocation2 + $0x62] sm:$0xff]
        %v461 = vld [vmem:[#allocation2 + $0x6a] sm:$0xff]
        %v462 = vld [vmem:[#allocation2 + $0x7a] sm:$0xff]
        %v463 = vld [vmem:[#allocation2 + $0x82] sm:$0xff]
        %v464 = vld [vmem:[#allocation2 + $0x92] sm:$0xff]
        %v465 = vld [vmem:[#allocation2 + $0x9a] sm:$0xff]
        %v466 = vld [vmem:[#allocation2 + $0xaa] sm:$0xff]
        %v467 = vld [vmem:[#allocation2 + $0xb2] sm:$0xff]
        %v468 = vld [vmem:[#allocation2 + $0xc2] sm:$0xff]
        %v469 = vld [vmem:[#allocation2 + $0xca] sm:$0xff]
        %v470 = vld [vmem:[#allocation2 + $0xda] sm:$0xff]
        %v471 = vld [vmem:[#allocation2 + $0xe2] sm:$0xff]
        %v472 = vld [vmem:[#allocation2 + $0xf2] sm:$0xff]
        %v473 = vld [vmem:[#allocation2 + $0xfa] sm:$0xff]
        %v474 = vld [vmem:[#allocation2 + $0x10a] sm:$0xff]
        %v475 = vld [vmem:[#allocation2 + $0x112] sm:$0xff]
        %v476 = vld [vmem:[#allocation2 + $0x122] sm:$0xff]
        %v477 = vld [vmem:[#allocation2 + $0x12a] sm:$0xff]
        %v478 = vld [vmem:[#allocation2 + $0x13a] sm:$0xff]
        %v479 = vld [vmem:[#allocation2 + $0x142] sm:$0xff]
        %v480 = vld [vmem:[#allocation2 + $0x152] sm:$0xff]
        %v481 = vld [vmem:[#allocation2 + $0x15a] sm:$0xff]
        %v482 = vld [vmem:[#allocation2 + $0x16a] sm:$0xff]
        %v483 = vld [vmem:[#allocation2 + $0x172] sm:$0xff]
        %v484 = vld [vmem:[#allocation2 + $0x182] sm:$0xff]
        %v485 = vld [vmem:[#allocation2 + $0x18a] sm:$0xff]
        %v486 = vld [vmem:[#allocation2 + $0x19a] sm:$0xff]
        %v487 = vld [vmem:[#allocation2 + $0x1a2] sm:$0xff]
        %v488 = vld [vmem:[#allocation2 + $0x1b2] sm:$0xff]
        %v489 = vld [vmem:[#allocation2 + $0x1ba] sm:$0xff]
        %v490 = vld [vmem:[#allocation2 + $0x1ca] sm:$0xff]
        %v491 = vld [vmem:[#allocation2 + $0x1d2] sm:$0xff]
        %v492 = vld [vmem:[#allocation2 + $0x3] sm:$0xff]
        %v493 = vld [vmem:[#allocation2 + $0xb] sm:$0xff]
        %v494 = vld [vmem:[#allocation2 + $0x1b] sm:$0xff]
        %v495 = vld [vmem:[#allocation2 + $0x23] sm:$0xff]
        %v496 = vld [vmem:[#allocation2 + $0x33] sm:$0xff]
        %v497 = vld [vmem:[#allocation2 + $0x3b] sm:$0xff]
        %v498 = vld [vmem:[#allocation2 + $0x4b] sm:$0xff]
        %v499 = vld [vmem:[#allocation2 + $0x53] sm:$0xff]
        %v500 = vld [vmem:[#allocation2 + $0x63] sm:$0xff]
        %v501 = vld [vmem:[#allocation2 + $0x6b] sm:$0xff]
        %v502 = vld [vmem:[#allocation2 + $0x7b] sm:$0xff]
        %v503 = vld [vmem:[#allocation2 + $0x83] sm:$0xff]
        %v504 = vld [vmem:[#allocation2 + $0x93] sm:$0xff]
        %v505 = vld [vmem:[#allocation2 + $0x9b] sm:$0xff]
        %v506 = vld [vmem:[#allocation2 + $0xab] sm:$0xff]
        %v507 = vld [vmem:[#allocation2 + $0xb3] sm:$0xff]
        %v508 = vld [vmem:[#allocation2 + $0xc3] sm:$0xff]
        %v509 = vld [vmem:[#allocation2 + $0xcb] sm:$0xff]
        %v510 = vld [vmem:[#allocation2 + $0xdb] sm:$0xff]
        %v511 = vld [vmem:[#allocation2 + $0xe3] sm:$0xff]
        %v512 = vld [vmem:[#allocation2 + $0xf3] sm:$0xff]
        %v513 = vld [vmem:[#allocation2 + $0xfb] sm:$0xff]
        %v514 = vld [vmem:[#allocation2 + $0x10b] sm:$0xff]
        %v515 = vld [vmem:[#allocation2 + $0x113] sm:$0xff]
        %v516 = vld [vmem:[#allocation2 + $0x123] sm:$0xff]
        %v517 = vld [vmem:[#allocation2 + $0x12b] sm:$0xff]
        %v518 = vld [vmem:[#allocation2 + $0x13b] sm:$0xff]
        %v519 = vld [vmem:[#allocation2 + $0x143] sm:$0xff]
        %v520 = vld [vmem:[#allocation2 + $0x153] sm:$0xff]
        %v521 = vld [vmem:[#allocation2 + $0x15b] sm:$0xff]
        %v522 = vld [vmem:[#allocation2 + $0x16b] sm:$0xff]
        %v523 = vld [vmem:[#allocation2 + $0x173] sm:$0xff]
        %v524 = vld [vmem:[#allocation2 + $0x183] sm:$0xff]
        %v525 = vld [vmem:[#allocation2 + $0x18b] sm:$0xff]
        %v526 = vld [vmem:[#allocation2 + $0x19b] sm:$0xff]
        %v527 = vld [vmem:[#allocation2 + $0x1a3] sm:$0xff]
        %v528 = vld [vmem:[#allocation2 + $0x1b3] sm:$0xff]
        %v529 = vld [vmem:[#allocation2 + $0x1bb] sm:$0xff]
        %v530 = vld [vmem:[#allocation2 + $0x1cb] sm:$0xff]
        %v531 = vld [vmem:[#allocation2 + $0x1d3] sm:$0xff]
        %v532 = vld [vmem:[#allocation2 + $0x4] sm:$0xff]
        %v533 = vld [vmem:[#allocation2 + $0xc] sm:$0xff]
        %v534 = vld [vmem:[#allocation2 + $0x1c] sm:$0xff]
        %v535 = vld [vmem:[#allocation2 + $0x24] sm:$0xff]
        %v536 = vld [vmem:[#allocation2 + $0x34] sm:$0xff]
        %v537 = vld [vmem:[#allocation2 + $0x3c] sm:$0xff]
        %v538 = vld [vmem:[#allocation2 + $0x4c] sm:$0xff]
        %v539 = vld [vmem:[#allocation2 + $0x54] sm:$0xff]
        %v540 = vld [vmem:[#allocation2 + $0x64] sm:$0xff]
        %v541 = vld [vmem:[#allocation2 + $0x6c] sm:$0xff]
        %v542 = vld [vmem:[#allocation2 + $0x7c] sm:$0xff]
        %v543 = vld [vmem:[#allocation2 + $0x84] sm:$0xff]
        %v544 = vld [vmem:[#allocation2 + $0x94] sm:$0xff]
        %v545 = vld [vmem:[#allocation2 + $0x9c] sm:$0xff]
        %v546 = vld [vmem:[#allocation2 + $0xac] sm:$0xff]
        %v547 = vld [vmem:[#allocation2 + $0xb4] sm:$0xff]
        %v548 = vld [vmem:[#allocation2 + $0xc4] sm:$0xff]
        %v549 = vld [vmem:[#allocation2 + $0xcc] sm:$0xff]
        %v550 = vld [vmem:[#allocation2 + $0xdc] sm:$0xff]
        %v551 = vld [vmem:[#allocation2 + $0xe4] sm:$0xff]
        %v552 = vld [vmem:[#allocation2 + $0xf4] sm:$0xff]
        %v553 = vld [vmem:[#allocation2 + $0xfc] sm:$0xff]
        %v554 = vld [vmem:[#allocation2 + $0x10c] sm:$0xff]
        %v555 = vld [vmem:[#allocation2 + $0x114] sm:$0xff]
        %v556 = vld [vmem:[#allocation2 + $0x124] sm:$0xff]
        %v557 = vld [vmem:[#allocation2 + $0x12c] sm:$0xff]
        %v558 = vld [vmem:[#allocation2 + $0x13c] sm:$0xff]
        %v559 = vld [vmem:[#allocation2 + $0x144] sm:$0xff]
        %v560 = vld [vmem:[#allocation2 + $0x154] sm:$0xff]
        %v561 = vld [vmem:[#allocation2 + $0x15c] sm:$0xff]
        %v562 = vld [vmem:[#allocation2 + $0x16c] sm:$0xff]
        %v563 = vld [vmem:[#allocation2 + $0x174] sm:$0xff]
        %v564 = vld [vmem:[#allocation2 + $0x184] sm:$0xff]
        %v565 = vld [vmem:[#allocation2 + $0x18c] sm:$0xff]
        %v566 = vld [vmem:[#allocation2 + $0x19c] sm:$0xff]
        %v567 = vld [vmem:[#allocation2 + $0x1a4] sm:$0xff]
        %v568 = vld [vmem:[#allocation2 + $0x1b4] sm:$0xff]
        %v569 = vld [vmem:[#allocation2 + $0x1bc] sm:$0xff]
        %v570 = vld [vmem:[#allocation2 + $0x1cc] sm:$0xff]
        %v571 = vld [vmem:[#allocation2 + $0x1d4] sm:$0xff]
        %v572 = vld [vmem:[#allocation6] sm:$0xff]
        %v573 = vld [vmem:[#allocation6 + $0x8] sm:$0xff]
        %v574 = vld [vmem:[#allocation6 + $0x10] sm:$0xff]
        %v575 = vld [vmem:[#allocation6 + $0x18] sm:$0xff]
        %v576 = vld [vmem:[#allocation6 + $0x20] sm:$0x3]
        %v577 = vld [vmem:[%s3] sm:$0xff]
        %v578 = vlaneseq
        %v579 = vshrl.u32 %v578, 7
        %v580 = vsub.s32 0, %v579
        %v581 = vrot.slane %v572, %v580
        %v582 = vmul.f32 %v414, %v581
        %v583 = vmul.f32 %v415, %v581
        %v584 = vmul.f32 %v416, %v581
        %v585 = vmul.f32 %v417, %v581
        %v586 = vmul.f32 %v418, %v581
        %v587 = vmul.f32 %v419, %v581
        %v588 = vmul.f32 %v420, %v581
        %v589 = vmul.f32 %v421, %v581
        %v590 = vmul.f32 %v422, %v581
        %v591 = vmul.f32 %v423, %v581
        %v592 = vmul.f32 %v424, %v581
        %v593 = vmul.f32 %v425, %v581
        %v594 = vmul.f32 %v426, %v581
        %v595 = vmul.f32 %v427, %v581
        %v596 = vmul.f32 %v428, %v581
        %v597 = vmul.f32 %v429, %v581
        %v598 = vmul.f32 %v430, %v581
        %v599 = vmul.f32 %v431, %v581
        %v600 = vmul.f32 %v432, %v581
        %v601 = vmul.f32 %v433, %v581
        %v602 = vmul.f32 %v434, %v581
        %v603 = vmul.f32 %v435, %v581
        %v604 = vmul.f32 %v436, %v581
        %v605 = vmul.f32 %v437, %v581
        %v606 = vmul.f32 %v438, %v581
        %v607 = vmul.f32 %v439, %v581
        %v608 = vmul.f32 %v440, %v581
        %v609 = vmul.f32 %v441, %v581
        %v610 = vmul.f32 %v442, %v581
        %v611 = vmul.f32 %v443, %v581
        %v612 = vmul.f32 %v444, %v581
        %v613 = vmul.f32 %v445, %v581
        %v614 = vadd.f32 %v582, 0.0
        %v615 = vadd.f32 %v583, 0.0
        %v616 = vadd.f32 %v584, 0.0
        %v617 = vadd.f32 %v585, 0.0
        %v618 = vadd.f32 %v586, 0.0
        %v619 = vadd.f32 %v587, 0.0
        %v620 = vadd.f32 %v588, 0.0
        %v621 = vadd.f32 %v589, 0.0
        %v622 = vadd.f32 %v590, 0.0
        %v623 = vadd.f32 %v591, 0.0
        %v624 = vadd.f32 %v592, 0.0
        %v625 = vadd.f32 %v593, 0.0
        %v626 = vadd.f32 %v594, 0.0
        %v627 = vadd.f32 %v595, 0.0
        %v628 = vadd.f32 %v596, 0.0
        %v629 = vadd.f32 %v597, 0.0
        %v630 = vadd.f32 %v598, 0.0
        %v631 = vadd.f32 %v599, 0.0
        %v632 = vadd.f32 %v600, 0.0
        %v633 = vadd.f32 %v601, 0.0
        %v634 = vadd.f32 %v602, 0.0
        %v635 = vadd.f32 %v603, 0.0
        %v636 = vadd.f32 %v604, 0.0
        %v637 = vadd.f32 %v605, 0.0
        %v638 = vadd.f32 %v606, 0.0
        %v639 = vadd.f32 %v607, 0.0
        %v640 = vadd.f32 %v608, 0.0
        %v641 = vadd.f32 %v609, 0.0
        %v642 = vadd.f32 %v610, 0.0
        %v643 = vadd.f32 %v611, 0.0
        %v644 = vadd.f32 %v612, 0.0
        %v645 = vadd.f32 %v613, 0.0
        %v646 = vlaneseq
        %v647 = vshrl.u32 %v646, 7
        %v648 = vsub.s32 1, %v647
        %v649 = vrot.slane %v572, %v648
        %v650 = vmul.f32 %v454, %v649
        %v651 = vmul.f32 %v455, %v649
        %v652 = vmul.f32 %v456, %v649
        %v653 = vmul.f32 %v457, %v649
        %v654 = vmul.f32 %v458, %v649
        %v655 = vmul.f32 %v459, %v649
        %v656 = vmul.f32 %v460, %v649
        %v657 = vmul.f32 %v461, %v649
        %v658 = vmul.f32 %v462, %v649
        %v659 = vmul.f32 %v463, %v649
        %v660 = vmul.f32 %v464, %v649
        %v661 = vmul.f32 %v465, %v649
        %v662 = vmul.f32 %v466, %v649
        %v663 = vmul.f32 %v467, %v649
        %v664 = vmul.f32 %v468, %v649
        %v665 = vmul.f32 %v469, %v649
        %v666 = vmul.f32 %v470, %v649
        %v667 = vmul.f32 %v471, %v649
        %v668 = vmul.f32 %v472, %v649
        %v669 = vmul.f32 %v473, %v649
        %v670 = vmul.f32 %v474, %v649
        %v671 = vmul.f32 %v475, %v649
        %v672 = vmul.f32 %v476, %v649
        %v673 = vmul.f32 %v477, %v649
        %v674 = vmul.f32 %v478, %v649
        %v675 = vmul.f32 %v479, %v649
        %v676 = vmul.f32 %v480, %v649
        %v677 = vmul.f32 %v481, %v649
        %v678 = vmul.f32 %v482, %v649
        %v679 = vmul.f32 %v483, %v649
        %v680 = vmul.f32 %v484, %v649
        %v681 = vmul.f32 %v485, %v649
        %v682 = vadd.f32 %v614, %v650
        %v683 = vadd.f32 %v615, %v651
        %v684 = vadd.f32 %v616, %v652
        %v685 = vadd.f32 %v617, %v653
        %v686 = vadd.f32 %v618, %v654
        %v687 = vadd.f32 %v619, %v655
        %v688 = vadd.f32 %v620, %v656
        %v689 = vadd.f32 %v621, %v657
        %v690 = vadd.f32 %v622, %v658
        %v691 = vadd.f32 %v623, %v659
        %v692 = vadd.f32 %v624, %v660
        %v693 = vadd.f32 %v625, %v661
        %v694 = vadd.f32 %v626, %v662
        %v695 = vadd.f32 %v627, %v663
        %v696 = vadd.f32 %v628, %v664
        %v697 = vadd.f32 %v629, %v665
        %v698 = vadd.f32 %v630, %v666
        %v699 = vadd.f32 %v631, %v667
        %v700 = vadd.f32 %v632, %v668
        %v701 = vadd.f32 %v633, %v669
        %v702 = vadd.f32 %v634, %v670
        %v703 = vadd.f32 %v635, %v671
        %v704 = vadd.f32 %v636, %v672
        %v705 = vadd.f32 %v637, %v673
        %v706 = vadd.f32 %v638, %v674
        %v707 = vadd.f32 %v639, %v675
        %v708 = vadd.f32 %v640, %v676
        %v709 = vadd.f32 %v641, %v677
        %v710 = vadd.f32 %v642, %v678
        %v711 = vadd.f32 %v643, %v679
        %v712 = vadd.f32 %v644, %v680
        %v713 = vadd.f32 %v645, %v681
        %v714 = vlaneseq
        %v715 = vshrl.u32 %v714, 7
        %v716 = vsub.s32 2, %v715
        %v717 = vrot.slane %v572, %v716
        %v718 = vmul.f32 %v494, %v717
        %v719 = vmul.f32 %v495, %v717
        %v720 = vmul.f32 %v496, %v717
        %v721 = vmul.f32 %v497, %v717
        %v722 = vmul.f32 %v498, %v717
        %v723 = vmul.f32 %v499, %v717
        %v724 = vmul.f32 %v500, %v717
        %v725 = vmul.f32 %v501, %v717
        %v726 = vmul.f32 %v502, %v717
        %v727 = vmul.f32 %v503, %v717
        %v728 = vmul.f32 %v504, %v717
        %v729 = vmul.f32 %v505, %v717
        %v730 = vmul.f32 %v506, %v717
        %v731 = vmul.f32 %v507, %v717
        %v732 = vmul.f32 %v508, %v717
        %v733 = vmul.f32 %v509, %v717
        %v734 = vmul.f32 %v510, %v717
        %v735 = vmul.f32 %v511, %v717
        %v736 = vmul.f32 %v512, %v717
        %v737 = vmul.f32 %v513, %v717
        %v738 = vmul.f32 %v514, %v717
        %v739 = vmul.f32 %v515, %v717
        %v740 = vmul.f32 %v516, %v717
        %v741 = vmul.f32 %v517, %v717
        %v742 = vmul.f32 %v518, %v717
        %v743 = vmul.f32 %v519, %v717
        %v744 = vmul.f32 %v520, %v717
        %v745 = vmul.f32 %v521, %v717
        %v746 = vmul.f32 %v522, %v717
        %v747 = vmul.f32 %v523, %v717
        %v748 = vmul.f32 %v524, %v717
        %v749 = vmul.f32 %v525, %v717
        %v750 = vadd.f32 %v682, %v718
        %v751 = vadd.f32 %v683, %v719
        %v752 = vadd.f32 %v684, %v720
        %v753 = vadd.f32 %v685, %v721
        %v754 = vadd.f32 %v686, %v722
        %v755 = vadd.f32 %v687, %v723
        %v756 = vadd.f32 %v688, %v724
        %v757 = vadd.f32 %v689, %v725
        %v758 = vadd.f32 %v690, %v726
        %v759 = vadd.f32 %v691, %v727
        %v760 = vadd.f32 %v692, %v728
        %v761 = vadd.f32 %v693, %v729
        %v762 = vadd.f32 %v694, %v730
        %v763 = vadd.f32 %v695, %v731
        %v764 = vadd.f32 %v696, %v732
        %v765 = vadd.f32 %v697, %v733
        %v766 = vadd.f32 %v698, %v734
        %v767 = vadd.f32 %v699, %v735
        %v768 = vadd.f32 %v700, %v736
        %v769 = vadd.f32 %v701, %v737
        %v770 = vadd.f32 %v702, %v738
        %v771 = vadd.f32 %v703, %v739
        %v772 = vadd.f32 %v704, %v740
        %v773 = vadd.f32 %v705, %v741
        %v774 = vadd.f32 %v706, %v742
        %v775 = vadd.f32 %v707, %v743
        %v776 = vadd.f32 %v708, %v744
        %v777 = vadd.f32 %v709, %v745
        %v778 = vadd.f32 %v710, %v746
        %v779 = vadd.f32 %v711, %v747
        %v780 = vadd.f32 %v712, %v748
        %v781 = vadd.f32 %v713, %v749
        %v782 = vlaneseq
        %v783 = vshrl.u32 %v782, 7
        %v784 = vsub.s32 3, %v783
        %v785 = vrot.slane %v572, %v784
        %v786 = vmul.f32 %v416, %v785
        %v787 = vmul.f32 %v417, %v785
        %v788 = vmul.f32 %v418, %v785
        %v789 = vmul.f32 %v419, %v785
        %v790 = vmul.f32 %v420, %v785
        %v791 = vmul.f32 %v421, %v785
        %v792 = vmul.f32 %v422, %v785
        %v793 = vmul.f32 %v423, %v785
        %v794 = vmul.f32 %v424, %v785
        %v795 = vmul.f32 %v425, %v785
        %v796 = vmul.f32 %v426, %v785
        %v797 = vmul.f32 %v427, %v785
        %v798 = vmul.f32 %v428, %v785
        %v799 = vmul.f32 %v429, %v785
        %v800 = vmul.f32 %v430, %v785
        %v801 = vmul.f32 %v431, %v785
        %v802 = vmul.f32 %v432, %v785
        %v803 = vmul.f32 %v433, %v785
        %v804 = vmul.f32 %v434, %v785
        %v805 = vmul.f32 %v435, %v785
        %v806 = vmul.f32 %v436, %v785
        %v807 = vmul.f32 %v437, %v785
        %v808 = vmul.f32 %v438, %v785
        %v809 = vmul.f32 %v439, %v785
        %v810 = vmul.f32 %v440, %v785
        %v811 = vmul.f32 %v441, %v785
        %v812 = vmul.f32 %v442, %v785
        %v813 = vmul.f32 %v443, %v785
        %v814 = vmul.f32 %v444, %v785
        %v815 = vmul.f32 %v445, %v785
        %v816 = vmul.f32 %v446, %v785
        %v817 = vmul.f32 %v447, %v785
        %v818 = vadd.f32 %v750, %v786
        %v819 = vadd.f32 %v751, %v787
        %v820 = vadd.f32 %v752, %v788
        %v821 = vadd.f32 %v753, %v789
        %v822 = vadd.f32 %v754, %v790
        %v823 = vadd.f32 %v755, %v791
        %v824 = vadd.f32 %v756, %v792
        %v825 = vadd.f32 %v757, %v793
        %v826 = vadd.f32 %v758, %v794
        %v827 = vadd.f32 %v759, %v795
        %v828 = vadd.f32 %v760, %v796
        %v829 = vadd.f32 %v761, %v797
        %v830 = vadd.f32 %v762, %v798
        %v831 = vadd.f32 %v763, %v799
        %v832 = vadd.f32 %v764, %v800
        %v833 = vadd.f32 %v765, %v801
        %v834 = vadd.f32 %v766, %v802
        %v835 = vadd.f32 %v767, %v803
        %v836 = vadd.f32 %v768, %v804
        %v837 = vadd.f32 %v769, %v805
        %v838 = vadd.f32 %v770, %v806
        %v839 = vadd.f32 %v771, %v807
        %v840 = vadd.f32 %v772, %v808
        %v841 = vadd.f32 %v773, %v809
        %v842 = vadd.f32 %v774, %v810
        %v843 = vadd.f32 %v775, %v811
        %v844 = vadd.f32 %v776, %v812
        %v845 = vadd.f32 %v777, %v813
        %v846 = vadd.f32 %v778, %v814
        %v847 = vadd.f32 %v779, %v815
        %v848 = vadd.f32 %v780, %v816
        %v849 = vadd.f32 %v781, %v817
        %v850 = vlaneseq
        %v851 = vshrl.u32 %v850, 7
        %v852 = vsub.s32 4, %v851
        %v853 = vrot.slane %v572, %v852
        %v854 = vmul.f32 %v456, %v853
        %v855 = vmul.f32 %v457, %v853
        %v856 = vmul.f32 %v458, %v853
        %v857 = vmul.f32 %v459, %v853
        %v858 = vmul.f32 %v460, %v853
        %v859 = vmul.f32 %v461, %v853
        %v860 = vmul.f32 %v462, %v853
        %v861 = vmul.f32 %v463, %v853
        %v862 = vmul.f32 %v464, %v853
        %v863 = vmul.f32 %v465, %v853
        %v864 = vmul.f32 %v466, %v853
        %v865 = vmul.f32 %v467, %v853
        %v866 = vmul.f32 %v468, %v853
        %v867 = vmul.f32 %v469, %v853
        %v868 = vmul.f32 %v470, %v853
        %v869 = vmul.f32 %v471, %v853
        %v870 = vmul.f32 %v472, %v853
        %v871 = vmul.f32 %v473, %v853
        %v872 = vmul.f32 %v474, %v853
        %v873 = vmul.f32 %v475, %v853
        %v874 = vmul.f32 %v476, %v853
        %v875 = vmul.f32 %v477, %v853
        %v876 = vmul.f32 %v478, %v853
        %v877 = vmul.f32 %v479, %v853
        %v878 = vmul.f32 %v480, %v853
        %v879 = vmul.f32 %v481, %v853
        %v880 = vmul.f32 %v482, %v853
        %v881 = vmul.f32 %v483, %v853
        %v882 = vmul.f32 %v484, %v853
        %v883 = vmul.f32 %v485, %v853
        %v884 = vmul.f32 %v486, %v853
        %v885 = vmul.f32 %v487, %v853
        %v886 = vadd.f32 %v818, %v854
        %v887 = vadd.f32 %v819, %v855
        %v888 = vadd.f32 %v820, %v856
        %v889 = vadd.f32 %v821, %v857
        %v890 = vadd.f32 %v822, %v858
        %v891 = vadd.f32 %v823, %v859
        %v892 = vadd.f32 %v824, %v860
        %v893 = vadd.f32 %v825, %v861
        %v894 = vadd.f32 %v826, %v862
        %v895 = vadd.f32 %v827, %v863
        %v896 = vadd.f32 %v828, %v864
        %v897 = vadd.f32 %v829, %v865
        %v898 = vadd.f32 %v830, %v866
        %v899 = vadd.f32 %v831, %v867
        %v900 = vadd.f32 %v832, %v868
        %v901 = vadd.f32 %v833, %v869
        %v902 = vadd.f32 %v834, %v870
        %v903 = vadd.f32 %v835, %v871
        %v904 = vadd.f32 %v836, %v872
        %v905 = vadd.f32 %v837, %v873
        %v906 = vadd.f32 %v838, %v874
        %v907 = vadd.f32 %v839, %v875
        %v908 = vadd.f32 %v840, %v876
        %v909 = vadd.f32 %v841, %v877
        %v910 = vadd.f32 %v842, %v878
        %v911 = vadd.f32 %v843, %v879
        %v912 = vadd.f32 %v844, %v880
        %v913 = vadd.f32 %v845, %v881
        %v914 = vadd.f32 %v846, %v882
        %v915 = vadd.f32 %v847, %v883
        %v916 = vadd.f32 %v848, %v884
        %v917 = vadd.f32 %v849, %v885
        %v918 = vlaneseq
        %v919 = vshrl.u32 %v918, 7
        %v920 = vsub.s32 5, %v919
        %v921 = vrot.slane %v572, %v920
        %v922 = vmul.f32 %v496, %v921
        %v923 = vmul.f32 %v497, %v921
        %v924 = vmul.f32 %v498, %v921
        %v925 = vmul.f32 %v499, %v921
        %v926 = vmul.f32 %v500, %v921
        %v927 = vmul.f32 %v501, %v921
        %v928 = vmul.f32 %v502, %v921
        %v929 = vmul.f32 %v503, %v921
        %v930 = vmul.f32 %v504, %v921
        %v931 = vmul.f32 %v505, %v921
        %v932 = vmul.f32 %v506, %v921
        %v933 = vmul.f32 %v507, %v921
        %v934 = vmul.f32 %v508, %v921
        %v935 = vmul.f32 %v509, %v921
        %v936 = vmul.f32 %v510, %v921
        %v937 = vmul.f32 %v511, %v921
        %v938 = vmul.f32 %v512, %v921
        %v939 = vmul.f32 %v513, %v921
        %v940 = vmul.f32 %v514, %v921
        %v941 = vmul.f32 %v515, %v921
        %v942 = vmul.f32 %v516, %v921
        %v943 = vmul.f32 %v517, %v921
        %v944 = vmul.f32 %v518, %v921
        %v945 = vmul.f32 %v519, %v921
        %v946 = vmul.f32 %v520, %v921
        %v947 = vmul.f32 %v521, %v921
        %v948 = vmul.f32 %v522, %v921
        %v949 = vmul.f32 %v523, %v921
        %v950 = vmul.f32 %v524, %v921
        %v951 = vmul.f32 %v525, %v921
        %v952 = vmul.f32 %v526, %v921
        %v953 = vmul.f32 %v527, %v921
        %v954 = vadd.f32 %v886, %v922
        %v955 = vadd.f32 %v887, %v923
        %v956 = vadd.f32 %v888, %v924
        %v957 = vadd.f32 %v889, %v925
        %v958 = vadd.f32 %v890, %v926
        %v959 = vadd.f32 %v891, %v927
        %v960 = vadd.f32 %v892, %v928
        %v961 = vadd.f32 %v893, %v929
        %v962 = vadd.f32 %v894, %v930
        %v963 = vadd.f32 %v895, %v931
        %v964 = vadd.f32 %v896, %v932
        %v965 = vadd.f32 %v897, %v933
        %v966 = vadd.f32 %v898, %v934
        %v967 = vadd.f32 %v899, %v935
        %v968 = vadd.f32 %v900, %v936
        %v969 = vadd.f32 %v901, %v937
        %v970 = vadd.f32 %v902, %v938
        %v971 = vadd.f32 %v903, %v939
        %v972 = vadd.f32 %v904, %v940
        %v973 = vadd.f32 %v905, %v941
        %v974 = vadd.f32 %v906, %v942
        %v975 = vadd.f32 %v907, %v943
        %v976 = vadd.f32 %v908, %v944
        %v977 = vadd.f32 %v909, %v945
        %v978 = vadd.f32 %v910, %v946
        %v979 = vadd.f32 %v911, %v947
        %v980 = vadd.f32 %v912, %v948
        %v981 = vadd.f32 %v913, %v949
        %v982 = vadd.f32 %v914, %v950
        %v983 = vadd.f32 %v915, %v951
        %v984 = vadd.f32 %v916, %v952
        %v985 = vadd.f32 %v917, %v953
        %v986 = vlaneseq
        %v987 = vshrl.u32 %v986, 7
        %v988 = vsub.s32 6, %v987
        %v989 = vrot.slane %v572, %v988
        %v990 = vmul.f32 %v418, %v989
        %v991 = vmul.f32 %v419, %v989
        %v992 = vmul.f32 %v420, %v989
        %v993 = vmul.f32 %v421, %v989
        %v994 = vmul.f32 %v422, %v989
        %v995 = vmul.f32 %v423, %v989
        %v996 = vmul.f32 %v424, %v989
        %v997 = vmul.f32 %v425, %v989
        %v998 = vmul.f32 %v426, %v989
        %v999 = vmul.f32 %v427, %v989
        %v1000 = vmul.f32 %v428, %v989
        %v1001 = vmul.f32 %v429, %v989
        %v1002 = vmul.f32 %v430, %v989
        %v1003 = vmul.f32 %v431, %v989
        %v1004 = vmul.f32 %v432, %v989
        %v1005 = vmul.f32 %v433, %v989
        %v1006 = vmul.f32 %v434, %v989
        %v1007 = vmul.f32 %v435, %v989
        %v1008 = vmul.f32 %v436, %v989
        %v1009 = vmul.f32 %v437, %v989
        %v1010 = vmul.f32 %v438, %v989
        %v1011 = vmul.f32 %v439, %v989
        %v1012 = vmul.f32 %v440, %v989
        %v1013 = vmul.f32 %v441, %v989
        %v1014 = vmul.f32 %v442, %v989
        %v1015 = vmul.f32 %v443, %v989
        %v1016 = vmul.f32 %v444, %v989
        %v1017 = vmul.f32 %v445, %v989
        %v1018 = vmul.f32 %v446, %v989
        %v1019 = vmul.f32 %v447, %v989
        %v1020 = vmul.f32 %v448, %v989
        %v1021 = vmul.f32 %v449, %v989
        %v1022 = vadd.f32 %v954, %v990
        %v1023 = vadd.f32 %v955, %v991
        %v1024 = vadd.f32 %v956, %v992
        %v1025 = vadd.f32 %v957, %v993
        %v1026 = vadd.f32 %v958, %v994
        %v1027 = vadd.f32 %v959, %v995
        %v1028 = vadd.f32 %v960, %v996
        %v1029 = vadd.f32 %v961, %v997
        %v1030 = vadd.f32 %v962, %v998
        %v1031 = vadd.f32 %v963, %v999
        %v1032 = vadd.f32 %v964, %v1000
        %v1033 = vadd.f32 %v965, %v1001
        %v1034 = vadd.f32 %v966, %v1002
        %v1035 = vadd.f32 %v967, %v1003
        %v1036 = vadd.f32 %v968, %v1004
        %v1037 = vadd.f32 %v969, %v1005
        %v1038 = vadd.f32 %v970, %v1006
        %v1039 = vadd.f32 %v971, %v1007
        %v1040 = vadd.f32 %v972, %v1008
        %v1041 = vadd.f32 %v973, %v1009
        %v1042 = vadd.f32 %v974, %v1010
        %v1043 = vadd.f32 %v975, %v1011
        %v1044 = vadd.f32 %v976, %v1012
        %v1045 = vadd.f32 %v977, %v1013
        %v1046 = vadd.f32 %v978, %v1014
        %v1047 = vadd.f32 %v979, %v1015
        %v1048 = vadd.f32 %v980, %v1016
        %v1049 = vadd.f32 %v981, %v1017
        %v1050 = vadd.f32 %v982, %v1018
        %v1051 = vadd.f32 %v983, %v1019
        %v1052 = vadd.f32 %v984, %v1020
        %v1053 = vadd.f32 %v985, %v1021
        %v1054 = vlaneseq
        %v1055 = vshrl.u32 %v1054, 7
        %v1056 = vsub.s32 7, %v1055
        %v1057 = vrot.slane %v572, %v1056
        %v1058 = vmul.f32 %v458, %v1057
        %v1059 = vmul.f32 %v459, %v1057
        %v1060 = vmul.f32 %v460, %v1057
        %v1061 = vmul.f32 %v461, %v1057
        %v1062 = vmul.f32 %v462, %v1057
        %v1063 = vmul.f32 %v463, %v1057
        %v1064 = vmul.f32 %v464, %v1057
        %v1065 = vmul.f32 %v465, %v1057
        %v1066 = vmul.f32 %v466, %v1057
        %v1067 = vmul.f32 %v467, %v1057
        %v1068 = vmul.f32 %v468, %v1057
        %v1069 = vmul.f32 %v469, %v1057
        %v1070 = vmul.f32 %v470, %v1057
        %v1071 = vmul.f32 %v471, %v1057
        %v1072 = vmul.f32 %v472, %v1057
        %v1073 = vmul.f32 %v473, %v1057
        %v1074 = vmul.f32 %v474, %v1057
        %v1075 = vmul.f32 %v475, %v1057
        %v1076 = vmul.f32 %v476, %v1057
        %v1077 = vmul.f32 %v477, %v1057
        %v1078 = vmul.f32 %v478, %v1057
        %v1079 = vmul.f32 %v479, %v1057
        %v1080 = vmul.f32 %v480, %v1057
        %v1081 = vmul.f32 %v481, %v1057
        %v1082 = vmul.f32 %v482, %v1057
        %v1083 = vmul.f32 %v483, %v1057
        %v1084 = vmul.f32 %v484, %v1057
        %v1085 = vmul.f32 %v485, %v1057
        %v1086 = vmul.f32 %v486, %v1057
        %v1087 = vmul.f32 %v487, %v1057
        %v1088 = vmul.f32 %v488, %v1057
        %v1089 = vmul.f32 %v489, %v1057
        %v1090 = vadd.f32 %v1022, %v1058
        %v1091 = vadd.f32 %v1023, %v1059
        %v1092 = vadd.f32 %v1024, %v1060
        %v1093 = vadd.f32 %v1025, %v1061
        %v1094 = vadd.f32 %v1026, %v1062
        %v1095 = vadd.f32 %v1027, %v1063
        %v1096 = vadd.f32 %v1028, %v1064
        %v1097 = vadd.f32 %v1029, %v1065
        %v1098 = vadd.f32 %v1030, %v1066
        %v1099 = vadd.f32 %v1031, %v1067
        %v1100 = vadd.f32 %v1032, %v1068
        %v1101 = vadd.f32 %v1033, %v1069
        %v1102 = vadd.f32 %v1034, %v1070
        %v1103 = vadd.f32 %v1035, %v1071
        %v1104 = vadd.f32 %v1036, %v1072
        %v1105 = vadd.f32 %v1037, %v1073
        %v1106 = vadd.f32 %v1038, %v1074
        %v1107 = vadd.f32 %v1039, %v1075
        %v1108 = vadd.f32 %v1040, %v1076
        %v1109 = vadd.f32 %v1041, %v1077
        %v1110 = vadd.f32 %v1042, %v1078
        %v1111 = vadd.f32 %v1043, %v1079
        %v1112 = vadd.f32 %v1044, %v1080
        %v1113 = vadd.f32 %v1045, %v1081
        %v1114 = vadd.f32 %v1046, %v1082
        %v1115 = vadd.f32 %v1047, %v1083
        %v1116 = vadd.f32 %v1048, %v1084
        %v1117 = vadd.f32 %v1049, %v1085
        %v1118 = vadd.f32 %v1050, %v1086
        %v1119 = vadd.f32 %v1051, %v1087
        %v1120 = vadd.f32 %v1052, %v1088
        %v1121 = vadd.f32 %v1053, %v1089
        %v1122 = vlaneseq
        %v1123 = vshrl.u32 %v1122, 7
        %v1124 = vsub.s32 0, %v1123
        %v1125 = vrot.slane %v573, %v1124
        %v1126 = vmul.f32 %v498, %v1125
        %v1127 = vmul.f32 %v499, %v1125
        %v1128 = vmul.f32 %v500, %v1125
        %v1129 = vmul.f32 %v501, %v1125
        %v1130 = vmul.f32 %v502, %v1125
        %v1131 = vmul.f32 %v503, %v1125
        %v1132 = vmul.f32 %v504, %v1125
        %v1133 = vmul.f32 %v505, %v1125
        %v1134 = vmul.f32 %v506, %v1125
        %v1135 = vmul.f32 %v507, %v1125
        %v1136 = vmul.f32 %v508, %v1125
        %v1137 = vmul.f32 %v509, %v1125
        %v1138 = vmul.f32 %v510, %v1125
        %v1139 = vmul.f32 %v511, %v1125
        %v1140 = vmul.f32 %v512, %v1125
        %v1141 = vmul.f32 %v513, %v1125
        %v1142 = vmul.f32 %v514, %v1125
        %v1143 = vmul.f32 %v515, %v1125
        %v1144 = vmul.f32 %v516, %v1125
        %v1145 = vmul.f32 %v517, %v1125
        %v1146 = vmul.f32 %v518, %v1125
        %v1147 = vmul.f32 %v519, %v1125
        %v1148 = vmul.f32 %v520, %v1125
        %v1149 = vmul.f32 %v521, %v1125
        %v1150 = vmul.f32 %v522, %v1125
        %v1151 = vmul.f32 %v523, %v1125
        %v1152 = vmul.f32 %v524, %v1125
        %v1153 = vmul.f32 %v525, %v1125
        %v1154 = vmul.f32 %v526, %v1125
        %v1155 = vmul.f32 %v527, %v1125
        %v1156 = vmul.f32 %v528, %v1125
        %v1157 = vmul.f32 %v529, %v1125
        %v1158 = vadd.f32 %v1090, %v1126
        %v1159 = vadd.f32 %v1091, %v1127
        %v1160 = vadd.f32 %v1092, %v1128
        %v1161 = vadd.f32 %v1093, %v1129
        %v1162 = vadd.f32 %v1094, %v1130
        %v1163 = vadd.f32 %v1095, %v1131
        %v1164 = vadd.f32 %v1096, %v1132
        %v1165 = vadd.f32 %v1097, %v1133
        %v1166 = vadd.f32 %v1098, %v1134
        %v1167 = vadd.f32 %v1099, %v1135
        %v1168 = vadd.f32 %v1100, %v1136
        %v1169 = vadd.f32 %v1101, %v1137
        %v1170 = vadd.f32 %v1102, %v1138
        %v1171 = vadd.f32 %v1103, %v1139
        %v1172 = vadd.f32 %v1104, %v1140
        %v1173 = vadd.f32 %v1105, %v1141
        %v1174 = vadd.f32 %v1106, %v1142
        %v1175 = vadd.f32 %v1107, %v1143
        %v1176 = vadd.f32 %v1108, %v1144
        %v1177 = vadd.f32 %v1109, %v1145
        %v1178 = vadd.f32 %v1110, %v1146
        %v1179 = vadd.f32 %v1111, %v1147
        %v1180 = vadd.f32 %v1112, %v1148
        %v1181 = vadd.f32 %v1113, %v1149
        %v1182 = vadd.f32 %v1114, %v1150
        %v1183 = vadd.f32 %v1115, %v1151
        %v1184 = vadd.f32 %v1116, %v1152
        %v1185 = vadd.f32 %v1117, %v1153
        %v1186 = vadd.f32 %v1118, %v1154
        %v1187 = vadd.f32 %v1119, %v1155
        %v1188 = vadd.f32 %v1120, %v1156
        %v1189 = vadd.f32 %v1121, %v1157
        %v1190 = vlaneseq
        %v1191 = vshrl.u32 %v1190, 7
        %v1192 = vsub.s32 0, %v1191
        %v1193 = vrot.slane %v577, %v1192
        %v1194 = vmul.f32 %v1158, %v1193
        %v1195 = vmul.f32 %v1159, %v1193
        %v1196 = vmul.f32 %v1160, %v1193
        %v1197 = vmul.f32 %v1161, %v1193
        %v1198 = vmul.f32 %v1162, %v1193
        %v1199 = vmul.f32 %v1163, %v1193
        %v1200 = vmul.f32 %v1164, %v1193
        %v1201 = vmul.f32 %v1165, %v1193
        %v1202 = vmul.f32 %v1166, %v1193
        %v1203 = vmul.f32 %v1167, %v1193
        %v1204 = vmul.f32 %v1168, %v1193
        %v1205 = vmul.f32 %v1169, %v1193
        %v1206 = vmul.f32 %v1170, %v1193
        %v1207 = vmul.f32 %v1171, %v1193
        %v1208 = vmul.f32 %v1172, %v1193
        %v1209 = vmul.f32 %v1173, %v1193
        %v1210 = vmul.f32 %v1174, %v1193
        %v1211 = vmul.f32 %v1175, %v1193
        %v1212 = vmul.f32 %v1176, %v1193
        %v1213 = vmul.f32 %v1177, %v1193
        %v1214 = vmul.f32 %v1178, %v1193
        %v1215 = vmul.f32 %v1179, %v1193
        %v1216 = vmul.f32 %v1180, %v1193
        %v1217 = vmul.f32 %v1181, %v1193
        %v1218 = vmul.f32 %v1182, %v1193
        %v1219 = vmul.f32 %v1183, %v1193
        %v1220 = vmul.f32 %v1184, %v1193
        %v1221 = vmul.f32 %v1185, %v1193
        %v1222 = vmul.f32 %v1186, %v1193
        %v1223 = vmul.f32 %v1187, %v1193
        %v1224 = vmul.f32 %v1188, %v1193
        %v1225 = vmul.f32 %v1189, %v1193
        %v1226 = vlaneseq
        %v1227 = vshrl.u32 %v1226, 7
        %v1228 = vsub.s32 1, %v1227
        %v1229 = vrot.slane %v577, %v1228
        %v1230 = vadd.f32 %v1194, %v1229
        %v1231 = vadd.f32 %v1195, %v1229
        %v1232 = vadd.f32 %v1196, %v1229
        %v1233 = vadd.f32 %v1197, %v1229
        %v1234 = vadd.f32 %v1198, %v1229
        %v1235 = vadd.f32 %v1199, %v1229
        %v1236 = vadd.f32 %v1200, %v1229
        %v1237 = vadd.f32 %v1201, %v1229
        %v1238 = vadd.f32 %v1202, %v1229
        %v1239 = vadd.f32 %v1203, %v1229
        %v1240 = vadd.f32 %v1204, %v1229
        %v1241 = vadd.f32 %v1205, %v1229
        %v1242 = vadd.f32 %v1206, %v1229
        %v1243 = vadd.f32 %v1207, %v1229
        %v1244 = vadd.f32 %v1208, %v1229
        %v1245 = vadd.f32 %v1209, %v1229
        %v1246 = vadd.f32 %v1210, %v1229
        %v1247 = vadd.f32 %v1211, %v1229
        %v1248 = vadd.f32 %v1212, %v1229
        %v1249 = vadd.f32 %v1213, %v1229
        %v1250 = vadd.f32 %v1214, %v1229
        %v1251 = vadd.f32 %v1215, %v1229
        %v1252 = vadd.f32 %v1216, %v1229
        %v1253 = vadd.f32 %v1217, %v1229
        %v1254 = vadd.f32 %v1218, %v1229
        %v1255 = vadd.f32 %v1219, %v1229
        %v1256 = vadd.f32 %v1220, %v1229
        %v1257 = vadd.f32 %v1221, %v1229
        %v1258 = vadd.f32 %v1222, %v1229
        %v1259 = vadd.f32 %v1223, %v1229
        %v1260 = vadd.f32 %v1224, %v1229
        %v1261 = vadd.f32 %v1225, %v1229
        %v1262 = vld [vmem:[#allocation8] sm:$0xff]
        %v1263 = vld [vmem:[#allocation8 + $0x8] sm:$0xff]
        %v1264 = vld [vmem:[#allocation8 + $0x10] sm:$0xff]
        %v1265 = vld [vmem:[#allocation8 + $0x18] sm:$0xff]
        %v1266 = vld [vmem:[#allocation8 + $0x20] sm:$0xff]
        %v1267 = vld [vmem:[#allocation8 + $0x28] sm:$0xff]
        %v1268 = vld [vmem:[#allocation8 + $0x30] sm:$0xff]
        %v1269 = vld [vmem:[#allocation8 + $0x38] sm:$0xff]
        %v1270 = vld [vmem:[#allocation8 + $0x40] sm:$0xff]
        %v1271 = vld [vmem:[#allocation8 + $0x48] sm:$0xff]
        %v1272 = vld [vmem:[#allocation8 + $0x50] sm:$0xff]
        %v1273 = vld [vmem:[#allocation8 + $0x58] sm:$0xff]
        %v1274 = vld [vmem:[#allocation8 + $0x60] sm:$0xff]
        %v1275 = vld [vmem:[#allocation8 + $0x68] sm:$0xff]
        %v1276 = vld [vmem:[#allocation8 + $0x70] sm:$0xff]
        %v1277 = vld [vmem:[#allocation8 + $0x78] sm:$0xff]
        %1278 = vmatprep.subr.mxu0 0.0
        %1279 = vmatpush1.msra.mxu0 %v1262
        %1280 = vmatprep.subr.mxu0 0.0
        %1281 = vmatpush1.msra.mxu0 %v1263
        %1282 = vmatprep.subr.mxu0 0.0
        %1283 = vmatpush1.msra.mxu0 %v1264
        %1284 = vmatprep.subr.mxu0 0.0
        %1285 = vmatpush1.msra.mxu0 %v1265
        %1286 = vmatprep.subr.mxu0 0.0
        %1287 = vmatpush1.msra.mxu0 %v1266
        %1288 = vmatprep.subr.mxu0 0.0
        %1289 = vmatpush1.msra.mxu0 %v1267
        %1290 = vmatprep.subr.mxu0 0.0
        %1291 = vmatpush1.msra.mxu0 %v1268
        %1292 = vmatprep.subr.mxu0 0.0
        %1293 = vmatpush1.msra.mxu0 %v1269
        %1294 = vmatprep.subr.mxu0 0.0
        %1295 = vmatpush1.msra.mxu0 %v1270
        %1296 = vmatprep.subr.mxu0 0.0
        %1297 = vmatpush1.msra.mxu0 %v1271
        %1298 = vmatprep.subr.mxu0 0.0
        %1299 = vmatpush1.msra.mxu0 %v1272
        %1300 = vmatprep.subr.mxu0 0.0
        %1301 = vmatpush1.msra.mxu0 %v1273
        %1302 = vmatprep.subr.mxu0 0.0
        %1303 = vmatpush1.msra.mxu0 %v1274
        %1304 = vmatprep.subr.mxu0 0.0
        %1305 = vmatpush1.msra.mxu0 %v1275
        %1306 = vmatprep.subr.mxu0 0.0
        %1307 = vmatpush1.msra.mxu0 %v1276
        %1308 = vmatprep.subr.mxu0 0.0
        %1309 = vmatpush1.msra.mxu0 %v1277
        %1310 = vmatprep.subr.mxu0 0.0
        %1311 = vmatpush1.msra.mxu0 0.0
        %1312 = vmatprep.subr.mxu0 0.0
        %1313 = vmatpush1.msra.mxu0 0.0
        %1314 = vmatprep.subr.mxu0 0.0
        %1315 = vmatpush1.msra.mxu0 0.0
        %1316 = vmatprep.subr.mxu0 0.0
        %1317 = vmatpush1.msra.mxu0 0.0
        %1318 = vmatprep.subr.mxu0 0.0
        %1319 = vmatpush1.msra.mxu0 0.0
        %1320 = vmatprep.subr.mxu0 0.0
        %1321 = vmatpush1.msra.mxu0 0.0
        %1322 = vmatprep.subr.mxu0 0.0
        %1323 = vmatpush1.msra.mxu0 0.0
        %1324 = vmatprep.subr.mxu0 0.0
        %1325 = vmatpush1.msra.mxu0 0.0
        %1326 = vmatprep.subr.mxu0 0.0
        %1327 = vmatpush1.msra.mxu0 0.0
        %1328 = vmatprep.subr.mxu0 0.0
        %1329 = vmatpush1.msra.mxu0 0.0
        %1330 = vmatprep.subr.mxu0 0.0
        %1331 = vmatpush1.msra.mxu0 0.0
        %1332 = vmatprep.subr.mxu0 0.0
        %1333 = vmatpush1.msra.mxu0 0.0
        %1334 = vmatprep.subr.mxu0 0.0
        %1335 = vmatpush1.msra.mxu0 0.0
        %1336 = vmatprep.subr.mxu0 0.0
        %1337 = vmatpush1.msra.mxu0 0.0
        %1338 = vmatprep.subr.mxu0 0.0
        %1339 = vmatpush1.msra.mxu0 0.0
        %1340 = vmatprep.subr.mxu0 0.0
        %1341 = vmatpush1.msra.mxu0 0.0
        %1342 = vmatprep.mubr.f32.mxu0 0.0
        %1343 = vmatmul.mubr.f32.gmra.mrb[0].mxu0 %v1230
        %v1344 = vpop.f32.mrb[0].mxu0
        %v1345 = vadd.f32 0.0, %v1344
        %v1346 = vpop.f32.mrb[0].mxu0
        %1347 = vmatprep.mubr.f32.mxu0 0.0
        %1348 = vmatmul.mubr.f32.gmra.mrb[0].mxu0 %v1231
        %v1349 = vpop.f32.mrb[0].mxu0
        %v1350 = vadd.f32 0.0, %v1349
        %v1351 = vpop.f32.mrb[0].mxu0
        %1352 = vmatprep.mubr.f32.mxu0 0.0
        %1353 = vmatmul.mubr.f32.gmra.mrb[0].mxu0 %v1232
        %v1354 = vpop.f32.mrb[0].mxu0
        %v1355 = vadd.f32 0.0, %v1354
        %v1356 = vpop.f32.mrb[0].mxu0
        %1357 = vmatprep.mubr.f32.mxu0 0.0
        %1358 = vmatmul.mubr.f32.gmra.mrb[0].mxu0 %v1233
        %v1359 = vpop.f32.mrb[0].mxu0
        %v1360 = vadd.f32 0.0, %v1359
        %v1361 = vpop.f32.mrb[0].mxu0
        %1362 = vmatprep.mubr.f32.mxu0 0.0
        %1363 = vmatmul.mubr.f32.gmra.mrb[0].mxu0 %v1234
        %v1364 = vpop.f32.mrb[0].mxu0
        %v1365 = vadd.f32 0.0, %v1364
        %v1366 = vpop.f32.mrb[0].mxu0
        %1367 = vmatprep.mubr.f32.mxu0 0.0
        %1368 = vmatmul.mubr.f32.gmra.mrb[0].mxu0 %v1235
        %v1369 = vpop.f32.mrb[0].mxu0
        %v1370 = vadd.f32 0.0, %v1369
        %v1371 = vpop.f32.mrb[0].mxu0
        %1372 = vmatprep.mubr.f32.mxu0 0.0
        %1373 = vmatmul.mubr.f32.gmra.mrb[0].mxu0 %v1236
        %v1374 = vpop.f32.mrb[0].mxu0
        %v1375 = vadd.f32 0.0, %v1374
        %v1376 = vpop.f32.mrb[0].mxu0
        %1377 = vmatprep.mubr.f32.mxu0 0.0
        %1378 = vmatmul.mubr.f32.gmra.mrb[0].mxu0 %v1237
        %v1379 = vpop.f32.mrb[0].mxu0
        %v1380 = vadd.f32 0.0, %v1379
        %v1381 = vpop.f32.mrb[0].mxu0
        %1382 = vmatprep.mubr.f32.mxu0 0.0
        %1383 = vmatmul.mubr.f32.gmra.mrb[0].mxu0 %v1238
        %v1384 = vpop.f32.mrb[0].mxu0
        %v1385 = vadd.f32 0.0, %v1384
        %v1386 = vpop.f32.mrb[0].mxu0
        %1387 = vmatprep.mubr.f32.mxu0 0.0
        %1388 = vmatmul.mubr.f32.gmra.mrb[0].mxu0 %v1239
        %v1389 = vpop.f32.mrb[0].mxu0
        %v1390 = vadd.f32 0.0, %v1389
        %v1391 = vpop.f32.mrb[0].mxu0
        %1392 = vmatprep.mubr.f32.mxu0 0.0
        %1393 = vmatmul.mubr.f32.gmra.mrb[0].mxu0 %v1240
        %v1394 = vpop.f32.mrb[0].mxu0
        %v1395 = vadd.f32 0.0, %v1394
        %v1396 = vpop.f32.mrb[0].mxu0
        %1397 = vmatprep.mubr.f32.mxu0 0.0
        %1398 = vmatmul.mubr.f32.gmra.mrb[0].mxu0 %v1241
        %v1399 = vpop.f32.mrb[0].mxu0
        %v1400 = vadd.f32 0.0, %v1399
        %v1401 = vpop.f32.mrb[0].mxu0
        %1402 = vmatprep.mubr.f32.mxu0 0.0
        %1403 = vmatmul.mubr.f32.gmra.mrb[0].mxu0 %v1242
        %v1404 = vpop.f32.mrb[0].mxu0
        %v1405 = vadd.f32 0.0, %v1404
        %v1406 = vpop.f32.mrb[0].mxu0
        %1407 = vmatprep.mubr.f32.mxu0 0.0
        %1408 = vmatmul.mubr.f32.gmra.mrb[0].mxu0 %v1243
        %v1409 = vpop.f32.mrb[0].mxu0
        %v1410 = vadd.f32 0.0, %v1409
        %v1411 = vpop.f32.mrb[0].mxu0
        %1412 = vmatprep.mubr.f32.mxu0 0.0
        %1413 = vmatmul.mubr.f32.gmra.mrb[0].mxu0 %v1244
        %v1414 = vpop.f32.mrb[0].mxu0
        %v1415 = vadd.f32 0.0, %v1414
        %v1416 = vpop.f32.mrb[0].mxu0
        %1417 = vmatprep.mubr.f32.mxu0 0.0
        %1418 = vmatmul.mubr.f32.gmra.mrb[0].mxu0 %v1245
        %v1419 = vpop.f32.mrb[0].mxu0
        %v1420 = vadd.f32 0.0, %v1419
        %v1421 = vpop.f32.mrb[0].mxu0
        %1422 = vmatprep.mubr.f32.mxu0 0.0
        %1423 = vmatmul.mubr.f32.gmra.mrb[0].mxu0 %v1246
        %v1424 = vpop.f32.mrb[0].mxu0
        %v1425 = vadd.f32 0.0, %v1424
        %v1426 = vpop.f32.mrb[0].mxu0
        %1427 = vmatprep.mubr.f32.mxu0 0.0
        %1428 = vmatmul.mubr.f32.gmra.mrb[0].mxu0 %v1247
        %v1429 = vpop.f32.mrb[0].mxu0
        %v1430 = vadd.f32 0.0, %v1429
        %v1431 = vpop.f32.mrb[0].mxu0
        %1432 = vmatprep.mubr.f32.mxu0 0.0
        %1433 = vmatmul.mubr.f32.gmra.mrb[0].mxu0 %v1248
        %v1434 = vpop.f32.mrb[0].mxu0
        %v1435 = vadd.f32 0.0, %v1434
        %v1436 = vpop.f32.mrb[0].mxu0
        %1437 = vmatprep.mubr.f32.mxu0 0.0
        %1438 = vmatmul.mubr.f32.gmra.mrb[0].mxu0 %v1249
        %v1439 = vpop.f32.mrb[0].mxu0
        %v1440 = vadd.f32 0.0, %v1439
        %v1441 = vpop.f32.mrb[0].mxu0
        %1442 = vmatprep.mubr.f32.mxu0 0.0
        %1443 = vmatmul.mubr.f32.gmra.mrb[0].mxu0 %v1250
        %v1444 = vpop.f32.mrb[0].mxu0
        %v1445 = vadd.f32 0.0, %v1444
        %v1446 = vpop.f32.mrb[0].mxu0
        %1447 = vmatprep.mubr.f32.mxu0 0.0
        %1448 = vmatmul.mubr.f32.gmra.mrb[0].mxu0 %v1251
        %v1449 = vpop.f32.mrb[0].mxu0
        %v1450 = vadd.f32 0.0, %v1449
        %v1451 = vpop.f32.mrb[0].mxu0
        %1452 = vmatprep.mubr.f32.mxu0 0.0
        %1453 = vmatmul.mubr.f32.gmra.mrb[0].mxu0 %v1252
        %v1454 = vpop.f32.mrb[0].mxu0
        %v1455 = vadd.f32 0.0, %v1454
        %v1456 = vpop.f32.mrb[0].mxu0
        %1457 = vmatprep.mubr.f32.mxu0 0.0
        %1458 = vmatmul.mubr.f32.gmra.mrb[0].mxu0 %v1253
        %v1459 = vpop.f32.mrb[0].mxu0
        %v1460 = vadd.f32 0.0, %v1459
        %v1461 = vpop.f32.mrb[0].mxu0
        %1462 = vmatprep.mubr.f32.mxu0 0.0
        %1463 = vmatmul.mubr.f32.gmra.mrb[0].mxu0 %v1254
        %v1464 = vpop.f32.mrb[0].mxu0
        %v1465 = vadd.f32 0.0, %v1464
        %v1466 = vpop.f32.mrb[0].mxu0
        %1467 = vmatprep.mubr.f32.mxu0 0.0
        %1468 = vmatmul.mubr.f32.gmra.mrb[0].mxu0 %v1255
        %v1469 = vpop.f32.mrb[0].mxu0
        %v1470 = vadd.f32 0.0, %v1469
        %v1471 = vpop.f32.mrb[0].mxu0
        %1472 = vmatprep.mubr.f32.mxu0 0.0
        %1473 = vmatmul.mubr.f32.gmra.mrb[0].mxu0 %v1256
        %v1474 = vpop.f32.mrb[0].mxu0
        %v1475 = vadd.f32 0.0, %v1474
        %v1476 = vpop.f32.mrb[0].mxu0
        %1477 = vmatprep.mubr.f32.mxu0 0.0
        %1478 = vmatmul.mubr.f32.gmra.mrb[0].mxu0 %v1257
        %v1479 = vpop.f32.mrb[0].mxu0
        %v1480 = vadd.f32 0.0, %v1479
        %v1481 = vpop.f32.mrb[0].mxu0
        %1482 = vmatprep.mubr.f32.mxu0 0.0
        %1483 = vmatmul.mubr.f32.gmra.mrb[0].mxu0 %v1258
        %v1484 = vpop.f32.mrb[0].mxu0
        %v1485 = vadd.f32 0.0, %v1484
        %v1486 = vpop.f32.mrb[0].mxu0
        %1487 = vmatprep.mubr.f32.mxu0 0.0
        %1488 = vmatmul.mubr.f32.gmra.mrb[0].mxu0 %v1259
        %v1489 = vpop.f32.mrb[0].mxu0
        %v1490 = vadd.f32 0.0, %v1489
        %v1491 = vpop.f32.mrb[0].mxu0
        %1492 = vmatprep.mubr.f32.mxu0 0.0
        %1493 = vmatmul.mubr.f32.gmra.mrb[0].mxu0 %v1260
        %v1494 = vpop.f32.mrb[0].mxu0
        %v1495 = vadd.f32 0.0, %v1494
        %v1496 = vpop.f32.mrb[0].mxu0
        %1497 = vmatprep.mubr.f32.mxu0 0.0
        %1498 = vmatmul.mubr.f32.gmra.mrb[0].mxu0 %v1261
        %v1499 = vpop.f32.mrb[0].mxu0
        %v1500 = vadd.f32 0.0, %v1499
        %v1501 = vpop.f32.mrb[0].mxu0
        %1502 = vdwg.mxu0
        %v1503 = vlaneseq
        %v1504 = vshrl.u32 %v1503, 7
        %v1505 = vsub.s32 2, %v1504
        %v1506 = vrot.slane %v577, %v1505
        %v1507 = vmul.f32 %v1345, %v1506
        %v1508 = vmul.f32 %v1350, %v1506
        %v1509 = vmul.f32 %v1355, %v1506
        %v1510 = vmul.f32 %v1360, %v1506
        %v1511 = vmul.f32 %v1365, %v1506
        %v1512 = vmul.f32 %v1370, %v1506
        %v1513 = vmul.f32 %v1375, %v1506
        %v1514 = vmul.f32 %v1380, %v1506
        %v1515 = vmul.f32 %v1385, %v1506
        %v1516 = vmul.f32 %v1390, %v1506
        %v1517 = vmul.f32 %v1395, %v1506
        %v1518 = vmul.f32 %v1400, %v1506
        %v1519 = vmul.f32 %v1405, %v1506
        %v1520 = vmul.f32 %v1410, %v1506
        %v1521 = vmul.f32 %v1415, %v1506
        %v1522 = vmul.f32 %v1420, %v1506
        %v1523 = vmul.f32 %v1425, %v1506
        %v1524 = vmul.f32 %v1430, %v1506
        %v1525 = vmul.f32 %v1435, %v1506
        %v1526 = vmul.f32 %v1440, %v1506
        %v1527 = vmul.f32 %v1445, %v1506
        %v1528 = vmul.f32 %v1450, %v1506
        %v1529 = vmul.f32 %v1455, %v1506
        %v1530 = vmul.f32 %v1460, %v1506
        %v1531 = vmul.f32 %v1465, %v1506
        %v1532 = vmul.f32 %v1470, %v1506
        %v1533 = vmul.f32 %v1475, %v1506
        %v1534 = vmul.f32 %v1480, %v1506
        %v1535 = vmul.f32 %v1485, %v1506
        %v1536 = vmul.f32 %v1490, %v1506
        %v1537 = vmul.f32 %v1495, %v1506
        %v1538 = vmul.f32 %v1500, %v1506
        %v1539 = vlaneseq
        %v1540 = vshrl.u32 %v1539, 7
        %v1541 = vsub.s32 3, %v1540
        %v1542 = vrot.slane %v577, %v1541
        %v1543 = vadd.f32 %v1507, %v1542
        %v1544 = vadd.f32 %v1508, %v1542
        %v1545 = vadd.f32 %v1509, %v1542
        %v1546 = vadd.f32 %v1510, %v1542
        %v1547 = vadd.f32 %v1511, %v1542
        %v1548 = vadd.f32 %v1512, %v1542
        %v1549 = vadd.f32 %v1513, %v1542
        %v1550 = vadd.f32 %v1514, %v1542
        %v1551 = vadd.f32 %v1515, %v1542
        %v1552 = vadd.f32 %v1516, %v1542
        %v1553 = vadd.f32 %v1517, %v1542
        %v1554 = vadd.f32 %v1518, %v1542
        %v1555 = vadd.f32 %v1519, %v1542
        %v1556 = vadd.f32 %v1520, %v1542
        %v1557 = vadd.f32 %v1521, %v1542
        %v1558 = vadd.f32 %v1522, %v1542
        %v1559 = vadd.f32 %v1523, %v1542
        %v1560 = vadd.f32 %v1524, %v1542
        %v1561 = vadd.f32 %v1525, %v1542
        %v1562 = vadd.f32 %v1526, %v1542
        %v1563 = vadd.f32 %v1527, %v1542
        %v1564 = vadd.f32 %v1528, %v1542
        %v1565 = vadd.f32 %v1529, %v1542
        %v1566 = vadd.f32 %v1530, %v1542
        %v1567 = vadd.f32 %v1531, %v1542
        %v1568 = vadd.f32 %v1532, %v1542
        %v1569 = vadd.f32 %v1533, %v1542
        %v1570 = vadd.f32 %v1534, %v1542
        %v1571 = vadd.f32 %v1535, %v1542
        %v1572 = vadd.f32 %v1536, %v1542
        %v1573 = vadd.f32 %v1537, %v1542
        %v1574 = vadd.f32 %v1538, %v1542
        %v1575 = vmax.f32 %v1543, 0.0
        %v1576 = vmax.f32 %v1544, 0.0
        %v1577 = vmax.f32 %v1545, 0.0
        %v1578 = vmax.f32 %v1546, 0.0
        %v1579 = vmax.f32 %v1547, 0.0
        %v1580 = vmax.f32 %v1548, 0.0
        %v1581 = vmax.f32 %v1549, 0.0
        %v1582 = vmax.f32 %v1550, 0.0
        %v1583 = vmax.f32 %v1551, 0.0
        %v1584 = vmax.f32 %v1552, 0.0
        %v1585 = vmax.f32 %v1553, 0.0
        %v1586 = vmax.f32 %v1554, 0.0
        %v1587 = vmax.f32 %v1555, 0.0
        %v1588 = vmax.f32 %v1556, 0.0
        %v1589 = vmax.f32 %v1557, 0.0
        %v1590 = vmax.f32 %v1558, 0.0
        %v1591 = vmax.f32 %v1559, 0.0
        %v1592 = vmax.f32 %v1560, 0.0
        %v1593 = vmax.f32 %v1561, 0.0
        %v1594 = vmax.f32 %v1562, 0.0
        %v1595 = vmax.f32 %v1563, 0.0
        %v1596 = vmax.f32 %v1564, 0.0
        %v1597 = vmax.f32 %v1565, 0.0
        %v1598 = vmax.f32 %v1566, 0.0
        %v1599 = vmax.f32 %v1567, 0.0
        %v1600 = vmax.f32 %v1568, 0.0
        %v1601 = vmax.f32 %v1569, 0.0
        %v1602 = vmax.f32 %v1570, 0.0
        %v1603 = vmax.f32 %v1571, 0.0
        %v1604 = vmax.f32 %v1572, 0.0
        %v1605 = vmax.f32 %v1573, 0.0
        %v1606 = vmax.f32 %v1574, 0.0
        %v1607 = vlaneseq
        %v1608 = vshrl.u32 %v1607, 7
        %v1609 = vsub.s32 1, %v1608
        %v1610 = vrot.slane %v573, %v1609
        %v1611 = vmul.f32 %v372, %v1610
        %v1612 = vmul.f32 %v373, %v1610
        %v1613 = vmul.f32 %v374, %v1610
        %v1614 = vmul.f32 %v375, %v1610
        %v1615 = vmul.f32 %v376, %v1610
        %v1616 = vmul.f32 %v377, %v1610
        %v1617 = vmul.f32 %v378, %v1610
        %v1618 = vmul.f32 %v379, %v1610
        %v1619 = vmul.f32 %v380, %v1610
        %v1620 = vmul.f32 %v381, %v1610
        %v1621 = vmul.f32 %v382, %v1610
        %v1622 = vmul.f32 %v383, %v1610
        %v1623 = vmul.f32 %v384, %v1610
        %v1624 = vmul.f32 %v385, %v1610
        %v1625 = vmul.f32 %v386, %v1610
        %v1626 = vmul.f32 %v387, %v1610
        %v1627 = vmul.f32 %v388, %v1610
        %v1628 = vmul.f32 %v389, %v1610
        %v1629 = vmul.f32 %v390, %v1610
        %v1630 = vmul.f32 %v391, %v1610
        %v1631 = vmul.f32 %v392, %v1610
        %v1632 = vmul.f32 %v393, %v1610
        %v1633 = vmul.f32 %v394, %v1610
        %v1634 = vmul.f32 %v395, %v1610
        %v1635 = vmul.f32 %v396, %v1610
        %v1636 = vmul.f32 %v397, %v1610
        %v1637 = vmul.f32 %v398, %v1610
        %v1638 = vmul.f32 %v399, %v1610
        %v1639 = vmul.f32 %v400, %v1610
        %v1640 = vmul.f32 %v401, %v1610
        %v1641 = vmul.f32 %v402, %v1610
        %v1642 = vmul.f32 %v403, %v1610
        %v1643 = vadd.f32 %v1611, 0.0
        %v1644 = vadd.f32 %v1612, 0.0
        %v1645 = vadd.f32 %v1613, 0.0
        %v1646 = vadd.f32 %v1614, 0.0
        %v1647 = vadd.f32 %v1615, 0.0
        %v1648 = vadd.f32 %v1616, 0.0
        %v1649 = vadd.f32 %v1617, 0.0
        %v1650 = vadd.f32 %v1618, 0.0
        %v1651 = vadd.f32 %v1619, 0.0
        %v1652 = vadd.f32 %v1620, 0.0
        %v1653 = vadd.f32 %v1621, 0.0
        %v1654 = vadd.f32 %v1622, 0.0
        %v1655 = vadd.f32 %v1623, 0.0
        %v1656 = vadd.f32 %v1624, 0.0
        %v1657 = vadd.f32 %v1625, 0.0
        %v1658 = vadd.f32 %v1626, 0.0
        %v1659 = vadd.f32 %v1627, 0.0
        %v1660 = vadd.f32 %v1628, 0.0
        %v1661 = vadd.f32 %v1629, 0.0
        %v1662 = vadd.f32 %v1630, 0.0
        %v1663 = vadd.f32 %v1631, 0.0
        %v1664 = vadd.f32 %v1632, 0.0
        %v1665 = vadd.f32 %v1633, 0.0
        %v1666 = vadd.f32 %v1634, 0.0
        %v1667 = vadd.f32 %v1635, 0.0
        %v1668 = vadd.f32 %v1636, 0.0
        %v1669 = vadd.f32 %v1637, 0.0
        %v1670 = vadd.f32 %v1638, 0.0
        %v1671 = vadd.f32 %v1639, 0.0
        %v1672 = vadd.f32 %v1640, 0.0
        %v1673 = vadd.f32 %v1641, 0.0
        %v1674 = vadd.f32 %v1642, 0.0
        %v1675 = vlaneseq
        %v1676 = vshrl.u32 %v1675, 7
        %v1677 = vsub.s32 2, %v1676
        %v1678 = vrot.slane %v573, %v1677
        %v1679 = vmul.f32 %v412, %v1678
        %v1680 = vmul.f32 %v413, %v1678
        %v1681 = vmul.f32 %v414, %v1678
        %v1682 = vmul.f32 %v415, %v1678
        %v1683 = vmul.f32 %v416, %v1678
        %v1684 = vmul.f32 %v417, %v1678
        %v1685 = vmul.f32 %v418, %v1678
        %v1686 = vmul.f32 %v419, %v1678
        %v1687 = vmul.f32 %v420, %v1678
        %v1688 = vmul.f32 %v421, %v1678
        %v1689 = vmul.f32 %v422, %v1678
        %v1690 = vmul.f32 %v423, %v1678
        %v1691 = vmul.f32 %v424, %v1678
        %v1692 = vmul.f32 %v425, %v1678
        %v1693 = vmul.f32 %v426, %v1678
        %v1694 = vmul.f32 %v427, %v1678
        %v1695 = vmul.f32 %v428, %v1678
        %v1696 = vmul.f32 %v429, %v1678
        %v1697 = vmul.f32 %v430, %v1678
        %v1698 = vmul.f32 %v431, %v1678
        %v1699 = vmul.f32 %v432, %v1678
        %v1700 = vmul.f32 %v433, %v1678
        %v1701 = vmul.f32 %v434, %v1678
        %v1702 = vmul.f32 %v435, %v1678
        %v1703 = vmul.f32 %v436, %v1678
        %v1704 = vmul.f32 %v437, %v1678
        %v1705 = vmul.f32 %v438, %v1678
        %v1706 = vmul.f32 %v439, %v1678
        %v1707 = vmul.f32 %v440, %v1678
        %v1708 = vmul.f32 %v441, %v1678
        %v1709 = vmul.f32 %v442, %v1678
        %v1710 = vmul.f32 %v443, %v1678
        %v1711 = vadd.f32 %v1643, %v1679
        %v1712 = vadd.f32 %v1644, %v1680
        %v1713 = vadd.f32 %v1645, %v1681
        %v1714 = vadd.f32 %v1646, %v1682
        %v1715 = vadd.f32 %v1647, %v1683
        %v1716 = vadd.f32 %v1648, %v1684
        %v1717 = vadd.f32 %v1649, %v1685
        %v1718 = vadd.f32 %v1650, %v1686
        %v1719 = vadd.f32 %v1651, %v1687
        %v1720 = vadd.f32 %v1652, %v1688
        %v1721 = vadd.f32 %v1653, %v1689
        %v1722 = vadd.f32 %v1654, %v1690
        %v1723 = vadd.f32 %v1655, %v1691
        %v1724 = vadd.f32 %v1656, %v1692
        %v1725 = vadd.f32 %v1657, %v1693
        %v1726 = vadd.f32 %v1658, %v1694
        %v1727 = vadd.f32 %v1659, %v1695
        %v1728 = vadd.f32 %v1660, %v1696
        %v1729 = vadd.f32 %v1661, %v1697
        %v1730 = vadd.f32 %v1662, %v1698
        %v1731 = vadd.f32 %v1663, %v1699
        %v1732 = vadd.f32 %v1664, %v1700
        %v1733 = vadd.f32 %v1665, %v1701
        %v1734 = vadd.f32 %v1666, %v1702
        %v1735 = vadd.f32 %v1667, %v1703
        %v1736 = vadd.f32 %v1668, %v1704
        %v1737 = vadd.f32 %v1669, %v1705
        %v1738 = vadd.f32 %v1670, %v1706
        %v1739 = vadd.f32 %v1671, %v1707
        %v1740 = vadd.f32 %v1672, %v1708
        %v1741 = vadd.f32 %v1673, %v1709
        %v1742 = vadd.f32 %v1674, %v1710
        %v1743 = vlaneseq
        %v1744 = vshrl.u32 %v1743, 7
        %v1745 = vsub.s32 3, %v1744
        %v1746 = vrot.slane %v573, %v1745
        %v1747 = vmul.f32 %v452, %v1746
        %v1748 = vmul.f32 %v453, %v1746
        %v1749 = vmul.f32 %v454, %v1746
        %v1750 = vmul.f32 %v455, %v1746
        %v1751 = vmul.f32 %v456, %v1746
        %v1752 = vmul.f32 %v457, %v1746
        %v1753 = vmul.f32 %v458, %v1746
        %v1754 = vmul.f32 %v459, %v1746
        %v1755 = vmul.f32 %v460, %v1746
        %v1756 = vmul.f32 %v461, %v1746
        %v1757 = vmul.f32 %v462, %v1746
        %v1758 = vmul.f32 %v463, %v1746
        %v1759 = vmul.f32 %v464, %v1746
        %v1760 = vmul.f32 %v465, %v1746
        %v1761 = vmul.f32 %v466, %v1746
        %v1762 = vmul.f32 %v467, %v1746
        %v1763 = vmul.f32 %v468, %v1746
        %v1764 = vmul.f32 %v469, %v1746
        %v1765 = vmul.f32 %v470, %v1746
        %v1766 = vmul.f32 %v471, %v1746
        %v1767 = vmul.f32 %v472, %v1746
        %v1768 = vmul.f32 %v473, %v1746
        %v1769 = vmul.f32 %v474, %v1746
        %v1770 = vmul.f32 %v475, %v1746
        %v1771 = vmul.f32 %v476, %v1746
        %v1772 = vmul.f32 %v477, %v1746
        %v1773 = vmul.f32 %v478, %v1746
        %v1774 = vmul.f32 %v479, %v1746
        %v1775 = vmul.f32 %v480, %v1746
        %v1776 = vmul.f32 %v481, %v1746
        %v1777 = vmul.f32 %v482, %v1746
        %v1778 = vmul.f32 %v483, %v1746
        %v1779 = vadd.f32 %v1711, %v1747
        %v1780 = vadd.f32 %v1712, %v1748
        %v1781 = vadd.f32 %v1713, %v1749
        %v1782 = vadd.f32 %v1714, %v1750
        %v1783 = vadd.f32 %v1715, %v1751
        %v1784 = vadd.f32 %v1716, %v1752
        %v1785 = vadd.f32 %v1717, %v1753
        %v1786 = vadd.f32 %v1718, %v1754
        %v1787 = vadd.f32 %v1719, %v1755
        %v1788 = vadd.f32 %v1720, %v1756
        %v1789 = vadd.f32 %v1721, %v1757
        %v1790 = vadd.f32 %v1722, %v1758
        %v1791 = vadd.f32 %v1723, %v1759
        %v1792 = vadd.f32 %v1724, %v1760
        %v1793 = vadd.f32 %v1725, %v1761
        %v1794 = vadd.f32 %v1726, %v1762
        %v1795 = vadd.f32 %v1727, %v1763
        %v1796 = vadd.f32 %v1728, %v1764
        %v1797 = vadd.f32 %v1729, %v1765
        %v1798 = vadd.f32 %v1730, %v1766
        %v1799 = vadd.f32 %v1731, %v1767
        %v1800 = vadd.f32 %v1732, %v1768
        %v1801 = vadd.f32 %v1733, %v1769
        %v1802 = vadd.f32 %v1734, %v1770
        %v1803 = vadd.f32 %v1735, %v1771
        %v1804 = vadd.f32 %v1736, %v1772
        %v1805 = vadd.f32 %v1737, %v1773
        %v1806 = vadd.f32 %v1738, %v1774
        %v1807 = vadd.f32 %v1739, %v1775
        %v1808 = vadd.f32 %v1740, %v1776
        %v1809 = vadd.f32 %v1741, %v1777
        %v1810 = vadd.f32 %v1742, %v1778
        %v1811 = vlaneseq
        %v1812 = vshrl.u32 %v1811, 7
        %v1813 = vsub.s32 4, %v1812
        %v1814 = vrot.slane %v573, %v1813
        %v1815 = vmul.f32 %v492, %v1814
        %v1816 = vmul.f32 %v493, %v1814
        %v1817 = vmul.f32 %v494, %v1814
        %v1818 = vmul.f32 %v495, %v1814
        %v1819 = vmul.f32 %v496, %v1814
        %v1820 = vmul.f32 %v497, %v1814
        %v1821 = vmul.f32 %v498, %v1814
        %v1822 = vmul.f32 %v499, %v1814
        %v1823 = vmul.f32 %v500, %v1814
        %v1824 = vmul.f32 %v501, %v1814
        %v1825 = vmul.f32 %v502, %v1814
        %v1826 = vmul.f32 %v503, %v1814
        %v1827 = vmul.f32 %v504, %v1814
        %v1828 = vmul.f32 %v505, %v1814
        %v1829 = vmul.f32 %v506, %v1814
        %v1830 = vmul.f32 %v507, %v1814
        %v1831 = vmul.f32 %v508, %v1814
        %v1832 = vmul.f32 %v509, %v1814
        %v1833 = vmul.f32 %v510, %v1814
        %v1834 = vmul.f32 %v511, %v1814
        %v1835 = vmul.f32 %v512, %v1814
        %v1836 = vmul.f32 %v513, %v1814
        %v1837 = vmul.f32 %v514, %v1814
        %v1838 = vmul.f32 %v515, %v1814
        %v1839 = vmul.f32 %v516, %v1814
        %v1840 = vmul.f32 %v517, %v1814
        %v1841 = vmul.f32 %v518, %v1814
        %v1842 = vmul.f32 %v519, %v1814
        %v1843 = vmul.f32 %v520, %v1814
        %v1844 = vmul.f32 %v521, %v1814
        %v1845 = vmul.f32 %v522, %v1814
        %v1846 = vmul.f32 %v523, %v1814
        %v1847 = vadd.f32 %v1779, %v1815
        %v1848 = vadd.f32 %v1780, %v1816
        %v1849 = vadd.f32 %v1781, %v1817
        %v1850 = vadd.f32 %v1782, %v1818
        %v1851 = vadd.f32 %v1783, %v1819
        %v1852 = vadd.f32 %v1784, %v1820
        %v1853 = vadd.f32 %v1785, %v1821
        %v1854 = vadd.f32 %v1786, %v1822
        %v1855 = vadd.f32 %v1787, %v1823
        %v1856 = vadd.f32 %v1788, %v1824
        %v1857 = vadd.f32 %v1789, %v1825
        %v1858 = vadd.f32 %v1790, %v1826
        %v1859 = vadd.f32 %v1791, %v1827
        %v1860 = vadd.f32 %v1792, %v1828
        %v1861 = vadd.f32 %v1793, %v1829
        %v1862 = vadd.f32 %v1794, %v1830
        %v1863 = vadd.f32 %v1795, %v1831
        %v1864 = vadd.f32 %v1796, %v1832
        %v1865 = vadd.f32 %v1797, %v1833
        %v1866 = vadd.f32 %v1798, %v1834
        %v1867 = vadd.f32 %v1799, %v1835
        %v1868 = vadd.f32 %v1800, %v1836
        %v1869 = vadd.f32 %v1801, %v1837
        %v1870 = vadd.f32 %v1802, %v1838
        %v1871 = vadd.f32 %v1803, %v1839
        %v1872 = vadd.f32 %v1804, %v1840
        %v1873 = vadd.f32 %v1805, %v1841
        %v1874 = vadd.f32 %v1806, %v1842
        %v1875 = vadd.f32 %v1807, %v1843
        %v1876 = vadd.f32 %v1808, %v1844
        %v1877 = vadd.f32 %v1809, %v1845
        %v1878 = vadd.f32 %v1810, %v1846
        %v1879 = vlaneseq
        %v1880 = vshrl.u32 %v1879, 7
        %v1881 = vsub.s32 5, %v1880
        %v1882 = vrot.slane %v573, %v1881
        %v1883 = vmul.f32 %v532, %v1882
        %v1884 = vmul.f32 %v533, %v1882
        %v1885 = vmul.f32 %v534, %v1882
        %v1886 = vmul.f32 %v535, %v1882
        %v1887 = vmul.f32 %v536, %v1882
        %v1888 = vmul.f32 %v537, %v1882
        %v1889 = vmul.f32 %v538, %v1882
        %v1890 = vmul.f32 %v539, %v1882
        %v1891 = vmul.f32 %v540, %v1882
        %v1892 = vmul.f32 %v541, %v1882
        %v1893 = vmul.f32 %v542, %v1882
        %v1894 = vmul.f32 %v543, %v1882
        %v1895 = vmul.f32 %v544, %v1882
        %v1896 = vmul.f32 %v545, %v1882
        %v1897 = vmul.f32 %v546, %v1882
        %v1898 = vmul.f32 %v547, %v1882
        %v1899 = vmul.f32 %v548, %v1882
        %v1900 = vmul.f32 %v549, %v1882
        %v1901 = vmul.f32 %v550, %v1882
        %v1902 = vmul.f32 %v551, %v1882
        %v1903 = vmul.f32 %v552, %v1882
        %v1904 = vmul.f32 %v553, %v1882
        %v1905 = vmul.f32 %v554, %v1882
        %v1906 = vmul.f32 %v555, %v1882
        %v1907 = vmul.f32 %v556, %v1882
        %v1908 = vmul.f32 %v557, %v1882
        %v1909 = vmul.f32 %v558, %v1882
        %v1910 = vmul.f32 %v559, %v1882
        %v1911 = vmul.f32 %v560, %v1882
        %v1912 = vmul.f32 %v561, %v1882
        %v1913 = vmul.f32 %v562, %v1882
        %v1914 = vmul.f32 %v563, %v1882
        %v1915 = vadd.f32 %v1847, %v1883
        %v1916 = vadd.f32 %v1848, %v1884
        %v1917 = vadd.f32 %v1849, %v1885
        %v1918 = vadd.f32 %v1850, %v1886
        %v1919 = vadd.f32 %v1851, %v1887
        %v1920 = vadd.f32 %v1852, %v1888
        %v1921 = vadd.f32 %v1853, %v1889
        %v1922 = vadd.f32 %v1854, %v1890
        %v1923 = vadd.f32 %v1855, %v1891
        %v1924 = vadd.f32 %v1856, %v1892
        %v1925 = vadd.f32 %v1857, %v1893
        %v1926 = vadd.f32 %v1858, %v1894
        %v1927 = vadd.f32 %v1859, %v1895
        %v1928 = vadd.f32 %v1860, %v1896
        %v1929 = vadd.f32 %v1861, %v1897
        %v1930 = vadd.f32 %v1862, %v1898
        %v1931 = vadd.f32 %v1863, %v1899
        %v1932 = vadd.f32 %v1864, %v1900
        %v1933 = vadd.f32 %v1865, %v1901
        %v1934 = vadd.f32 %v1866, %v1902
        %v1935 = vadd.f32 %v1867, %v1903
        %v1936 = vadd.f32 %v1868, %v1904
        %v1937 = vadd.f32 %v1869, %v1905
        %v1938 = vadd.f32 %v1870, %v1906
        %v1939 = vadd.f32 %v1871, %v1907
        %v1940 = vadd.f32 %v1872, %v1908
        %v1941 = vadd.f32 %v1873, %v1909
        %v1942 = vadd.f32 %v1874, %v1910
        %v1943 = vadd.f32 %v1875, %v1911
        %v1944 = vadd.f32 %v1876, %v1912
        %v1945 = vadd.f32 %v1877, %v1913
        %v1946 = vadd.f32 %v1878, %v1914
        %v1947 = vlaneseq
        %v1948 = vshrl.u32 %v1947, 7
        %v1949 = vsub.s32 6, %v1948
        %v1950 = vrot.slane %v573, %v1949
        %v1951 = vmul.f32 %v374, %v1950
        %v1952 = vmul.f32 %v375, %v1950
        %v1953 = vmul.f32 %v376, %v1950
        %v1954 = vmul.f32 %v377, %v1950
        %v1955 = vmul.f32 %v378, %v1950
        %v1956 = vmul.f32 %v379, %v1950
        %v1957 = vmul.f32 %v380, %v1950
        %v1958 = vmul.f32 %v381, %v1950
        %v1959 = vmul.f32 %v382, %v1950
        %v1960 = vmul.f32 %v383, %v1950
        %v1961 = vmul.f32 %v384, %v1950
        %v1962 = vmul.f32 %v385, %v1950
        %v1963 = vmul.f32 %v386, %v1950
        %v1964 = vmul.f32 %v387, %v1950
        %v1965 = vmul.f32 %v388, %v1950
        %v1966 = vmul.f32 %v389, %v1950
        %v1967 = vmul.f32 %v390, %v1950
        %v1968 = vmul.f32 %v391, %v1950
        %v1969 = vmul.f32 %v392, %v1950
        %v1970 = vmul.f32 %v393, %v1950
        %v1971 = vmul.f32 %v394, %v1950
        %v1972 = vmul.f32 %v395, %v1950
        %v1973 = vmul.f32 %v396, %v1950
        %v1974 = vmul.f32 %v397, %v1950
        %v1975 = vmul.f32 %v398, %v1950
        %v1976 = vmul.f32 %v399, %v1950
        %v1977 = vmul.f32 %v400, %v1950
        %v1978 = vmul.f32 %v401, %v1950
        %v1979 = vmul.f32 %v402, %v1950
        %v1980 = vmul.f32 %v403, %v1950
        %v1981 = vmul.f32 %v404, %v1950
        %v1982 = vmul.f32 %v405, %v1950
        %v1983 = vadd.f32 %v1915, %v1951
        %v1984 = vadd.f32 %v1916, %v1952
        %v1985 = vadd.f32 %v1917, %v1953
        %v1986 = vadd.f32 %v1918, %v1954
        %v1987 = vadd.f32 %v1919, %v1955
        %v1988 = vadd.f32 %v1920, %v1956
        %v1989 = vadd.f32 %v1921, %v1957
        %v1990 = vadd.f32 %v1922, %v1958
        %v1991 = vadd.f32 %v1923, %v1959
        %v1992 = vadd.f32 %v1924, %v1960
        %v1993 = vadd.f32 %v1925, %v1961
        %v1994 = vadd.f32 %v1926, %v1962
        %v1995 = vadd.f32 %v1927, %v1963
        %v1996 = vadd.f32 %v1928, %v1964
        %v1997 = vadd.f32 %v1929, %v1965
        %v1998 = vadd.f32 %v1930, %v1966
        %v1999 = vadd.f32 %v1931, %v1967
        %v2000 = vadd.f32 %v1932, %v1968
        %v2001 = vadd.f32 %v1933, %v1969
        %v2002 = vadd.f32 %v1934, %v1970
        %v2003 = vadd.f32 %v1935, %v1971
        %v2004 = vadd.f32 %v1936, %v1972
        %v2005 = vadd.f32 %v1937, %v1973
        %v2006 = vadd.f32 %v1938, %v1974
        %v2007 = vadd.f32 %v1939, %v1975
        %v2008 = vadd.f32 %v1940, %v1976
        %v2009 = vadd.f32 %v1941, %v1977
        %v2010 = vadd.f32 %v1942, %v1978
        %v2011 = vadd.f32 %v1943, %v1979
        %v2012 = vadd.f32 %v1944, %v1980
        %v2013 = vadd.f32 %v1945, %v1981
        %v2014 = vadd.f32 %v1946, %v1982
        %v2015 = vlaneseq
        %v2016 = vshrl.u32 %v2015, 7
        %v2017 = vsub.s32 7, %v2016
        %v2018 = vrot.slane %v573, %v2017
        %v2019 = vmul.f32 %v414, %v2018
        %v2020 = vmul.f32 %v415, %v2018
        %v2021 = vmul.f32 %v416, %v2018
        %v2022 = vmul.f32 %v417, %v2018
        %v2023 = vmul.f32 %v418, %v2018
        %v2024 = vmul.f32 %v419, %v2018
        %v2025 = vmul.f32 %v420, %v2018
        %v2026 = vmul.f32 %v421, %v2018
        %v2027 = vmul.f32 %v422, %v2018
        %v2028 = vmul.f32 %v423, %v2018
        %v2029 = vmul.f32 %v424, %v2018
        %v2030 = vmul.f32 %v425, %v2018
        %v2031 = vmul.f32 %v426, %v2018
        %v2032 = vmul.f32 %v427, %v2018
        %v2033 = vmul.f32 %v428, %v2018
        %v2034 = vmul.f32 %v429, %v2018
        %v2035 = vmul.f32 %v430, %v2018
        %v2036 = vmul.f32 %v431, %v2018
        %v2037 = vmul.f32 %v432, %v2018
        %v2038 = vmul.f32 %v433, %v2018
        %v2039 = vmul.f32 %v434, %v2018
        %v2040 = vmul.f32 %v435, %v2018
        %v2041 = vmul.f32 %v436, %v2018
        %v2042 = vmul.f32 %v437, %v2018
        %v2043 = vmul.f32 %v438, %v2018
        %v2044 = vmul.f32 %v439, %v2018
        %v2045 = vmul.f32 %v440, %v2018
        %v2046 = vmul.f32 %v441, %v2018
        %v2047 = vmul.f32 %v442, %v2018
        %v2048 = vmul.f32 %v443, %v2018
        %v2049 = vmul.f32 %v444, %v2018
        %v2050 = vmul.f32 %v445, %v2018
        %v2051 = vadd.f32 %v1983, %v2019
        %v2052 = vadd.f32 %v1984, %v2020
        %v2053 = vadd.f32 %v1985, %v2021
        %v2054 = vadd.f32 %v1986, %v2022
        %v2055 = vadd.f32 %v1987, %v2023
        %v2056 = vadd.f32 %v1988, %v2024
        %v2057 = vadd.f32 %v1989, %v2025
        %v2058 = vadd.f32 %v1990, %v2026
        %v2059 = vadd.f32 %v1991, %v2027
        %v2060 = vadd.f32 %v1992, %v2028
        %v2061 = vadd.f32 %v1993, %v2029
        %v2062 = vadd.f32 %v1994, %v2030
        %v2063 = vadd.f32 %v1995, %v2031
        %v2064 = vadd.f32 %v1996, %v2032
        %v2065 = vadd.f32 %v1997, %v2033
        %v2066 = vadd.f32 %v1998, %v2034
        %v2067 = vadd.f32 %v1999, %v2035
        %v2068 = vadd.f32 %v2000, %v2036
        %v2069 = vadd.f32 %v2001, %v2037
        %v2070 = vadd.f32 %v2002, %v2038
        %v2071 = vadd.f32 %v2003, %v2039
        %v2072 = vadd.f32 %v2004, %v2040
        %v2073 = vadd.f32 %v2005, %v2041
        %v2074 = vadd.f32 %v2006, %v2042
        %v2075 = vadd.f32 %v2007, %v2043
        %v2076 = vadd.f32 %v2008, %v2044
        %v2077 = vadd.f32 %v2009, %v2045
        %v2078 = vadd.f32 %v2010, %v2046
        %v2079 = vadd.f32 %v2011, %v2047
        %v2080 = vadd.f32 %v2012, %v2048
        %v2081 = vadd.f32 %v2013, %v2049
        %v2082 = vadd.f32 %v2014, %v2050
        %v2083 = vlaneseq
        %v2084 = vshrl.u32 %v2083, 7
        %v2085 = vsub.s32 0, %v2084
        %v2086 = vrot.slane %v574, %v2085
        %v2087 = vmul.f32 %v454, %v2086
        %v2088 = vmul.f32 %v455, %v2086
        %v2089 = vmul.f32 %v456, %v2086
        %v2090 = vmul.f32 %v457, %v2086
        %v2091 = vmul.f32 %v458, %v2086
        %v2092 = vmul.f32 %v459, %v2086
        %v2093 = vmul.f32 %v460, %v2086
        %v2094 = vmul.f32 %v461, %v2086
        %v2095 = vmul.f32 %v462, %v2086
        %v2096 = vmul.f32 %v463, %v2086
        %v2097 = vmul.f32 %v464, %v2086
        %v2098 = vmul.f32 %v465, %v2086
        %v2099 = vmul.f32 %v466, %v2086
        %v2100 = vmul.f32 %v467, %v2086
        %v2101 = vmul.f32 %v468, %v2086
        %v2102 = vmul.f32 %v469, %v2086
        %v2103 = vmul.f32 %v470, %v2086
        %v2104 = vmul.f32 %v471, %v2086
        %v2105 = vmul.f32 %v472, %v2086
        %v2106 = vmul.f32 %v473, %v2086
        %v2107 = vmul.f32 %v474, %v2086
        %v2108 = vmul.f32 %v475, %v2086
        %v2109 = vmul.f32 %v476, %v2086
        %v2110 = vmul.f32 %v477, %v2086
        %v2111 = vmul.f32 %v478, %v2086
        %v2112 = vmul.f32 %v479, %v2086
        %v2113 = vmul.f32 %v480, %v2086
        %v2114 = vmul.f32 %v481, %v2086
        %v2115 = vmul.f32 %v482, %v2086
        %v2116 = vmul.f32 %v483, %v2086
        %v2117 = vmul.f32 %v484, %v2086
        %v2118 = vmul.f32 %v485, %v2086
        %v2119 = vadd.f32 %v2051, %v2087
        %v2120 = vadd.f32 %v2052, %v2088
        %v2121 = vadd.f32 %v2053, %v2089
        %v2122 = vadd.f32 %v2054, %v2090
        %v2123 = vadd.f32 %v2055, %v2091
        %v2124 = vadd.f32 %v2056, %v2092
        %v2125 = vadd.f32 %v2057, %v2093
        %v2126 = vadd.f32 %v2058, %v2094
        %v2127 = vadd.f32 %v2059, %v2095
        %v2128 = vadd.f32 %v2060, %v2096
        %v2129 = vadd.f32 %v2061, %v2097
        %v2130 = vadd.f32 %v2062, %v2098
        %v2131 = vadd.f32 %v2063, %v2099
        %v2132 = vadd.f32 %v2064, %v2100
        %v2133 = vadd.f32 %v2065, %v2101
        %v2134 = vadd.f32 %v2066, %v2102
        %v2135 = vadd.f32 %v2067, %v2103
        %v2136 = vadd.f32 %v2068, %v2104
        %v2137 = vadd.f32 %v2069, %v2105
        %v2138 = vadd.f32 %v2070, %v2106
        %v2139 = vadd.f32 %v2071, %v2107
        %v2140 = vadd.f32 %v2072, %v2108
        %v2141 = vadd.f32 %v2073, %v2109
        %v2142 = vadd.f32 %v2074, %v2110
        %v2143 = vadd.f32 %v2075, %v2111
        %v2144 = vadd.f32 %v2076, %v2112
        %v2145 = vadd.f32 %v2077, %v2113
        %v2146 = vadd.f32 %v2078, %v2114
        %v2147 = vadd.f32 %v2079, %v2115
        %v2148 = vadd.f32 %v2080, %v2116
        %v2149 = vadd.f32 %v2081, %v2117
        %v2150 = vadd.f32 %v2082, %v2118
        %v2151 = vlaneseq
        %v2152 = vshrl.u32 %v2151, 7
        %v2153 = vsub.s32 1, %v2152
        %v2154 = vrot.slane %v574, %v2153
        %v2155 = vmul.f32 %v494, %v2154
        %v2156 = vmul.f32 %v495, %v2154
        %v2157 = vmul.f32 %v496, %v2154
        %v2158 = vmul.f32 %v497, %v2154
        %v2159 = vmul.f32 %v498, %v2154
        %v2160 = vmul.f32 %v499, %v2154
        %v2161 = vmul.f32 %v500, %v2154
        %v2162 = vmul.f32 %v501, %v2154
        %v2163 = vmul.f32 %v502, %v2154
        %v2164 = vmul.f32 %v503, %v2154
        %v2165 = vmul.f32 %v504, %v2154
        %v2166 = vmul.f32 %v505, %v2154
        %v2167 = vmul.f32 %v506, %v2154
        %v2168 = vmul.f32 %v507, %v2154
        %v2169 = vmul.f32 %v508, %v2154
        %v2170 = vmul.f32 %v509, %v2154
        %v2171 = vmul.f32 %v510, %v2154
        %v2172 = vmul.f32 %v511, %v2154
        %v2173 = vmul.f32 %v512, %v2154
        %v2174 = vmul.f32 %v513, %v2154
        %v2175 = vmul.f32 %v514, %v2154
        %v2176 = vmul.f32 %v515, %v2154
        %v2177 = vmul.f32 %v516, %v2154
        %v2178 = vmul.f32 %v517, %v2154
        %v2179 = vmul.f32 %v518, %v2154
        %v2180 = vmul.f32 %v519, %v2154
        %v2181 = vmul.f32 %v520, %v2154
        %v2182 = vmul.f32 %v521, %v2154
        %v2183 = vmul.f32 %v522, %v2154
        %v2184 = vmul.f32 %v523, %v2154
        %v2185 = vmul.f32 %v524, %v2154
        %v2186 = vmul.f32 %v525, %v2154
        %v2187 = vadd.f32 %v2119, %v2155
        %v2188 = vadd.f32 %v2120, %v2156
        %v2189 = vadd.f32 %v2121, %v2157
        %v2190 = vadd.f32 %v2122, %v2158
        %v2191 = vadd.f32 %v2123, %v2159
        %v2192 = vadd.f32 %v2124, %v2160
        %v2193 = vadd.f32 %v2125, %v2161
        %v2194 = vadd.f32 %v2126, %v2162
        %v2195 = vadd.f32 %v2127, %v2163
        %v2196 = vadd.f32 %v2128, %v2164
        %v2197 = vadd.f32 %v2129, %v2165
        %v2198 = vadd.f32 %v2130, %v2166
        %v2199 = vadd.f32 %v2131, %v2167
        %v2200 = vadd.f32 %v2132, %v2168
        %v2201 = vadd.f32 %v2133, %v2169
        %v2202 = vadd.f32 %v2134, %v2170
        %v2203 = vadd.f32 %v2135, %v2171
        %v2204 = vadd.f32 %v2136, %v2172
        %v2205 = vadd.f32 %v2137, %v2173
        %v2206 = vadd.f32 %v2138, %v2174
        %v2207 = vadd.f32 %v2139, %v2175
        %v2208 = vadd.f32 %v2140, %v2176
        %v2209 = vadd.f32 %v2141, %v2177
        %v2210 = vadd.f32 %v2142, %v2178
        %v2211 = vadd.f32 %v2143, %v2179
        %v2212 = vadd.f32 %v2144, %v2180
        %v2213 = vadd.f32 %v2145, %v2181
        %v2214 = vadd.f32 %v2146, %v2182
        %v2215 = vadd.f32 %v2147, %v2183
        %v2216 = vadd.f32 %v2148, %v2184
        %v2217 = vadd.f32 %v2149, %v2185
        %v2218 = vadd.f32 %v2150, %v2186
        %v2219 = vlaneseq
        %v2220 = vshrl.u32 %v2219, 7
        %v2221 = vsub.s32 2, %v2220
        %v2222 = vrot.slane %v574, %v2221
        %v2223 = vmul.f32 %v534, %v2222
        %v2224 = vmul.f32 %v535, %v2222
        %v2225 = vmul.f32 %v536, %v2222
        %v2226 = vmul.f32 %v537, %v2222
        %v2227 = vmul.f32 %v538, %v2222
        %v2228 = vmul.f32 %v539, %v2222
        %v2229 = vmul.f32 %v540, %v2222
        %v2230 = vmul.f32 %v541, %v2222
        %v2231 = vmul.f32 %v542, %v2222
        %v2232 = vmul.f32 %v543, %v2222
        %v2233 = vmul.f32 %v544, %v2222
        %v2234 = vmul.f32 %v545, %v2222
        %v2235 = vmul.f32 %v546, %v2222
        %v2236 = vmul.f32 %v547, %v2222
        %v2237 = vmul.f32 %v548, %v2222
        %v2238 = vmul.f32 %v549, %v2222
        %v2239 = vmul.f32 %v550, %v2222
        %v2240 = vmul.f32 %v551, %v2222
        %v2241 = vmul.f32 %v552, %v2222
        %v2242 = vmul.f32 %v553, %v2222
        %v2243 = vmul.f32 %v554, %v2222
        %v2244 = vmul.f32 %v555, %v2222
        %v2245 = vmul.f32 %v556, %v2222
        %v2246 = vmul.f32 %v557, %v2222
        %v2247 = vmul.f32 %v558, %v2222
        %v2248 = vmul.f32 %v559, %v2222
        %v2249 = vmul.f32 %v560, %v2222
        %v2250 = vmul.f32 %v561, %v2222
        %v2251 = vmul.f32 %v562, %v2222
        %v2252 = vmul.f32 %v563, %v2222
        %v2253 = vmul.f32 %v564, %v2222
        %v2254 = vmul.f32 %v565, %v2222
        %v2255 = vadd.f32 %v2187, %v2223
        %v2256 = vadd.f32 %v2188, %v2224
        %v2257 = vadd.f32 %v2189, %v2225
        %v2258 = vadd.f32 %v2190, %v2226
        %v2259 = vadd.f32 %v2191, %v2227
        %v2260 = vadd.f32 %v2192, %v2228
        %v2261 = vadd.f32 %v2193, %v2229
        %v2262 = vadd.f32 %v2194, %v2230
        %v2263 = vadd.f32 %v2195, %v2231
        %v2264 = vadd.f32 %v2196, %v2232
        %v2265 = vadd.f32 %v2197, %v2233
        %v2266 = vadd.f32 %v2198, %v2234
        %v2267 = vadd.f32 %v2199, %v2235
        %v2268 = vadd.f32 %v2200, %v2236
        %v2269 = vadd.f32 %v2201, %v2237
        %v2270 = vadd.f32 %v2202, %v2238
        %v2271 = vadd.f32 %v2203, %v2239
        %v2272 = vadd.f32 %v2204, %v2240
        %v2273 = vadd.f32 %v2205, %v2241
        %v2274 = vadd.f32 %v2206, %v2242
        %v2275 = vadd.f32 %v2207, %v2243
        %v2276 = vadd.f32 %v2208, %v2244
        %v2277 = vadd.f32 %v2209, %v2245
        %v2278 = vadd.f32 %v2210, %v2246
        %v2279 = vadd.f32 %v2211, %v2247
        %v2280 = vadd.f32 %v2212, %v2248
        %v2281 = vadd.f32 %v2213, %v2249
        %v2282 = vadd.f32 %v2214, %v2250
        %v2283 = vadd.f32 %v2215, %v2251
        %v2284 = vadd.f32 %v2216, %v2252
        %v2285 = vadd.f32 %v2217, %v2253
        %v2286 = vadd.f32 %v2218, %v2254
        %v2287 = vlaneseq
        %v2288 = vshrl.u32 %v2287, 7
        %v2289 = vsub.s32 3, %v2288
        %v2290 = vrot.slane %v574, %v2289
        %v2291 = vmul.f32 %v376, %v2290
        %v2292 = vmul.f32 %v377, %v2290
        %v2293 = vmul.f32 %v378, %v2290
        %v2294 = vmul.f32 %v379, %v2290
        %v2295 = vmul.f32 %v380, %v2290
        %v2296 = vmul.f32 %v381, %v2290
        %v2297 = vmul.f32 %v382, %v2290
        %v2298 = vmul.f32 %v383, %v2290
        %v2299 = vmul.f32 %v384, %v2290
        %v2300 = vmul.f32 %v385, %v2290
        %v2301 = vmul.f32 %v386, %v2290
        %v2302 = vmul.f32 %v387, %v2290
        %v2303 = vmul.f32 %v388, %v2290
        %v2304 = vmul.f32 %v389, %v2290
        %v2305 = vmul.f32 %v390, %v2290
        %v2306 = vmul.f32 %v391, %v2290
        %v2307 = vmul.f32 %v392, %v2290
        %v2308 = vmul.f32 %v393, %v2290
        %v2309 = vmul.f32 %v394, %v2290
        %v2310 = vmul.f32 %v395, %v2290
        %v2311 = vmul.f32 %v396, %v2290
        %v2312 = vmul.f32 %v397, %v2290
        %v2313 = vmul.f32 %v398, %v2290
        %v2314 = vmul.f32 %v399, %v2290
        %v2315 = vmul.f32 %v400, %v2290
        %v2316 = vmul.f32 %v401, %v2290
        %v2317 = vmul.f32 %v402, %v2290
        %v2318 = vmul.f32 %v403, %v2290
        %v2319 = vmul.f32 %v404, %v2290
        %v2320 = vmul.f32 %v405, %v2290
        %v2321 = vmul.f32 %v406, %v2290
        %v2322 = vmul.f32 %v407, %v2290
        %v2323 = vadd.f32 %v2255, %v2291
        %v2324 = vadd.f32 %v2256, %v2292
        %v2325 = vadd.f32 %v2257, %v2293
        %v2326 = vadd.f32 %v2258, %v2294
        %v2327 = vadd.f32 %v2259, %v2295
        %v2328 = vadd.f32 %v2260, %v2296
        %v2329 = vadd.f32 %v2261, %v2297
        %v2330 = vadd.f32 %v2262, %v2298
        %v2331 = vadd.f32 %v2263, %v2299
        %v2332 = vadd.f32 %v2264, %v2300
        %v2333 = vadd.f32 %v2265, %v2301
        %v2334 = vadd.f32 %v2266, %v2302
        %v2335 = vadd.f32 %v2267, %v2303
        %v2336 = vadd.f32 %v2268, %v2304
        %v2337 = vadd.f32 %v2269, %v2305
        %v2338 = vadd.f32 %v2270, %v2306
        %v2339 = vadd.f32 %v2271, %v2307
        %v2340 = vadd.f32 %v2272, %v2308
        %v2341 = vadd.f32 %v2273, %v2309
        %v2342 = vadd.f32 %v2274, %v2310
        %v2343 = vadd.f32 %v2275, %v2311
        %v2344 = vadd.f32 %v2276, %v2312
        %v2345 = vadd.f32 %v2277, %v2313
        %v2346 = vadd.f32 %v2278, %v2314
        %v2347 = vadd.f32 %v2279, %v2315
        %v2348 = vadd.f32 %v2280, %v2316
        %v2349 = vadd.f32 %v2281, %v2317
        %v2350 = vadd.f32 %v2282, %v2318
        %v2351 = vadd.f32 %v2283, %v2319
        %v2352 = vadd.f32 %v2284, %v2320
        %v2353 = vadd.f32 %v2285, %v2321
        %v2354 = vadd.f32 %v2286, %v2322
        %v2355 = vlaneseq
        %v2356 = vshrl.u32 %v2355, 7
        %v2357 = vsub.s32 4, %v2356
        %v2358 = vrot.slane %v574, %v2357
        %v2359 = vmul.f32 %v416, %v2358
        %v2360 = vmul.f32 %v417, %v2358
        %v2361 = vmul.f32 %v418, %v2358
        %v2362 = vmul.f32 %v419, %v2358
        %v2363 = vmul.f32 %v420, %v2358
        %v2364 = vmul.f32 %v421, %v2358
        %v2365 = vmul.f32 %v422, %v2358
        %v2366 = vmul.f32 %v423, %v2358
        %v2367 = vmul.f32 %v424, %v2358
        %v2368 = vmul.f32 %v425, %v2358
        %v2369 = vmul.f32 %v426, %v2358
        %v2370 = vmul.f32 %v427, %v2358
        %v2371 = vmul.f32 %v428, %v2358
        %v2372 = vmul.f32 %v429, %v2358
        %v2373 = vmul.f32 %v430, %v2358
        %v2374 = vmul.f32 %v431, %v2358
        %v2375 = vmul.f32 %v432, %v2358
        %v2376 = vmul.f32 %v433, %v2358
        %v2377 = vmul.f32 %v434, %v2358
        %v2378 = vmul.f32 %v435, %v2358
        %v2379 = vmul.f32 %v436, %v2358
        %v2380 = vmul.f32 %v437, %v2358
        %v2381 = vmul.f32 %v438, %v2358
        %v2382 = vmul.f32 %v439, %v2358
        %v2383 = vmul.f32 %v440, %v2358
        %v2384 = vmul.f32 %v441, %v2358
        %v2385 = vmul.f32 %v442, %v2358
        %v2386 = vmul.f32 %v443, %v2358
        %v2387 = vmul.f32 %v444, %v2358
        %v2388 = vmul.f32 %v445, %v2358
        %v2389 = vmul.f32 %v446, %v2358
        %v2390 = vmul.f32 %v447, %v2358
        %v2391 = vadd.f32 %v2323, %v2359
        %v2392 = vadd.f32 %v2324, %v2360
        %v2393 = vadd.f32 %v2325, %v2361
        %v2394 = vadd.f32 %v2326, %v2362
        %v2395 = vadd.f32 %v2327, %v2363
        %v2396 = vadd.f32 %v2328, %v2364
        %v2397 = vadd.f32 %v2329, %v2365
        %v2398 = vadd.f32 %v2330, %v2366
        %v2399 = vadd.f32 %v2331, %v2367
        %v2400 = vadd.f32 %v2332, %v2368
        %v2401 = vadd.f32 %v2333, %v2369
        %v2402 = vadd.f32 %v2334, %v2370
        %v2403 = vadd.f32 %v2335, %v2371
        %v2404 = vadd.f32 %v2336, %v2372
        %v2405 = vadd.f32 %v2337, %v2373
        %v2406 = vadd.f32 %v2338, %v2374
        %v2407 = vadd.f32 %v2339, %v2375
        %v2408 = vadd.f32 %v2340, %v2376
        %v2409 = vadd.f32 %v2341, %v2377
        %v2410 = vadd.f32 %v2342, %v2378
        %v2411 = vadd.f32 %v2343, %v2379
        %v2412 = vadd.f32 %v2344, %v2380
        %v2413 = vadd.f32 %v2345, %v2381
        %v2414 = vadd.f32 %v2346, %v2382
        %v2415 = vadd.f32 %v2347, %v2383
        %v2416 = vadd.f32 %v2348, %v2384
        %v2417 = vadd.f32 %v2349, %v2385
        %v2418 = vadd.f32 %v2350, %v2386
        %v2419 = vadd.f32 %v2351, %v2387
        %v2420 = vadd.f32 %v2352, %v2388
        %v2421 = vadd.f32 %v2353, %v2389
        %v2422 = vadd.f32 %v2354, %v2390
        %v2423 = vlaneseq
        %v2424 = vshrl.u32 %v2423, 7
        %v2425 = vsub.s32 5, %v2424
        %v2426 = vrot.slane %v574, %v2425
        %v2427 = vmul.f32 %v456, %v2426
        %v2428 = vmul.f32 %v457, %v2426
        %v2429 = vmul.f32 %v458, %v2426
        %v2430 = vmul.f32 %v459, %v2426
        %v2431 = vmul.f32 %v460, %v2426
        %v2432 = vmul.f32 %v461, %v2426
        %v2433 = vmul.f32 %v462, %v2426
        %v2434 = vmul.f32 %v463, %v2426
        %v2435 = vmul.f32 %v464, %v2426
        %v2436 = vmul.f32 %v465, %v2426
        %v2437 = vmul.f32 %v466, %v2426
        %v2438 = vmul.f32 %v467, %v2426
        %v2439 = vmul.f32 %v468, %v2426
        %v2440 = vmul.f32 %v469, %v2426
        %v2441 = vmul.f32 %v470, %v2426
        %v2442 = vmul.f32 %v471, %v2426
        %v2443 = vmul.f32 %v472, %v2426
        %v2444 = vmul.f32 %v473, %v2426
        %v2445 = vmul.f32 %v474, %v2426
        %v2446 = vmul.f32 %v475, %v2426
        %v2447 = vmul.f32 %v476, %v2426
        %v2448 = vmul.f32 %v477, %v2426
        %v2449 = vmul.f32 %v478, %v2426
        %v2450 = vmul.f32 %v479, %v2426
        %v2451 = vmul.f32 %v480, %v2426
        %v2452 = vmul.f32 %v481, %v2426
        %v2453 = vmul.f32 %v482, %v2426
        %v2454 = vmul.f32 %v483, %v2426
        %v2455 = vmul.f32 %v484, %v2426
        %v2456 = vmul.f32 %v485, %v2426
        %v2457 = vmul.f32 %v486, %v2426
        %v2458 = vmul.f32 %v487, %v2426
        %v2459 = vadd.f32 %v2391, %v2427
        %v2460 = vadd.f32 %v2392, %v2428
        %v2461 = vadd.f32 %v2393, %v2429
        %v2462 = vadd.f32 %v2394, %v2430
        %v2463 = vadd.f32 %v2395, %v2431
        %v2464 = vadd.f32 %v2396, %v2432
        %v2465 = vadd.f32 %v2397, %v2433
        %v2466 = vadd.f32 %v2398, %v2434
        %v2467 = vadd.f32 %v2399, %v2435
        %v2468 = vadd.f32 %v2400, %v2436
        %v2469 = vadd.f32 %v2401, %v2437
        %v2470 = vadd.f32 %v2402, %v2438
        %v2471 = vadd.f32 %v2403, %v2439
        %v2472 = vadd.f32 %v2404, %v2440
        %v2473 = vadd.f32 %v2405, %v2441
        %v2474 = vadd.f32 %v2406, %v2442
        %v2475 = vadd.f32 %v2407, %v2443
        %v2476 = vadd.f32 %v2408, %v2444
        %v2477 = vadd.f32 %v2409, %v2445
        %v2478 = vadd.f32 %v2410, %v2446
        %v2479 = vadd.f32 %v2411, %v2447
        %v2480 = vadd.f32 %v2412, %v2448
        %v2481 = vadd.f32 %v2413, %v2449
        %v2482 = vadd.f32 %v2414, %v2450
        %v2483 = vadd.f32 %v2415, %v2451
        %v2484 = vadd.f32 %v2416, %v2452
        %v2485 = vadd.f32 %v2417, %v2453
        %v2486 = vadd.f32 %v2418, %v2454
        %v2487 = vadd.f32 %v2419, %v2455
        %v2488 = vadd.f32 %v2420, %v2456
        %v2489 = vadd.f32 %v2421, %v2457
        %v2490 = vadd.f32 %v2422, %v2458
        %v2491 = vlaneseq
        %v2492 = vshrl.u32 %v2491, 7
        %v2493 = vsub.s32 6, %v2492
        %v2494 = vrot.slane %v574, %v2493
        %v2495 = vmul.f32 %v496, %v2494
        %v2496 = vmul.f32 %v497, %v2494
        %v2497 = vmul.f32 %v498, %v2494
        %v2498 = vmul.f32 %v499, %v2494
        %v2499 = vmul.f32 %v500, %v2494
        %v2500 = vmul.f32 %v501, %v2494
        %v2501 = vmul.f32 %v502, %v2494
        %v2502 = vmul.f32 %v503, %v2494
        %v2503 = vmul.f32 %v504, %v2494
        %v2504 = vmul.f32 %v505, %v2494
        %v2505 = vmul.f32 %v506, %v2494
        %v2506 = vmul.f32 %v507, %v2494
        %v2507 = vmul.f32 %v508, %v2494
        %v2508 = vmul.f32 %v509, %v2494
        %v2509 = vmul.f32 %v510, %v2494
        %v2510 = vmul.f32 %v511, %v2494
        %v2511 = vmul.f32 %v512, %v2494
        %v2512 = vmul.f32 %v513, %v2494
        %v2513 = vmul.f32 %v514, %v2494
        %v2514 = vmul.f32 %v515, %v2494
        %v2515 = vmul.f32 %v516, %v2494
        %v2516 = vmul.f32 %v517, %v2494
        %v2517 = vmul.f32 %v518, %v2494
        %v2518 = vmul.f32 %v519, %v2494
        %v2519 = vmul.f32 %v520, %v2494
        %v2520 = vmul.f32 %v521, %v2494
        %v2521 = vmul.f32 %v522, %v2494
        %v2522 = vmul.f32 %v523, %v2494
        %v2523 = vmul.f32 %v524, %v2494
        %v2524 = vmul.f32 %v525, %v2494
        %v2525 = vmul.f32 %v526, %v2494
        %v2526 = vmul.f32 %v527, %v2494
        %v2527 = vadd.f32 %v2459, %v2495
        %v2528 = vadd.f32 %v2460, %v2496
        %v2529 = vadd.f32 %v2461, %v2497
        %v2530 = vadd.f32 %v2462, %v2498
        %v2531 = vadd.f32 %v2463, %v2499
        %v2532 = vadd.f32 %v2464, %v2500
        %v2533 = vadd.f32 %v2465, %v2501
        %v2534 = vadd.f32 %v2466, %v2502
        %v2535 = vadd.f32 %v2467, %v2503
        %v2536 = vadd.f32 %v2468, %v2504
        %v2537 = vadd.f32 %v2469, %v2505
        %v2538 = vadd.f32 %v2470, %v2506
        %v2539 = vadd.f32 %v2471, %v2507
        %v2540 = vadd.f32 %v2472, %v2508
        %v2541 = vadd.f32 %v2473, %v2509
        %v2542 = vadd.f32 %v2474, %v2510
        %v2543 = vadd.f32 %v2475, %v2511
        %v2544 = vadd.f32 %v2476, %v2512
        %v2545 = vadd.f32 %v2477, %v2513
        %v2546 = vadd.f32 %v2478, %v2514
        %v2547 = vadd.f32 %v2479, %v2515
        %v2548 = vadd.f32 %v2480, %v2516
        %v2549 = vadd.f32 %v2481, %v2517
        %v2550 = vadd.f32 %v2482, %v2518
        %v2551 = vadd.f32 %v2483, %v2519
        %v2552 = vadd.f32 %v2484, %v2520
        %v2553 = vadd.f32 %v2485, %v2521
        %v2554 = vadd.f32 %v2486, %v2522
        %v2555 = vadd.f32 %v2487, %v2523
        %v2556 = vadd.f32 %v2488, %v2524
        %v2557 = vadd.f32 %v2489, %v2525
        %v2558 = vadd.f32 %v2490, %v2526
        %v2559 = vlaneseq
        %v2560 = vshrl.u32 %v2559, 7
        %v2561 = vsub.s32 7, %v2560
        %v2562 = vrot.slane %v574, %v2561
        %v2563 = vmul.f32 %v536, %v2562
        %v2564 = vmul.f32 %v537, %v2562
        %v2565 = vmul.f32 %v538, %v2562
        %v2566 = vmul.f32 %v539, %v2562
        %v2567 = vmul.f32 %v540, %v2562
        %v2568 = vmul.f32 %v541, %v2562
        %v2569 = vmul.f32 %v542, %v2562
        %v2570 = vmul.f32 %v543, %v2562
        %v2571 = vmul.f32 %v544, %v2562
        %v2572 = vmul.f32 %v545, %v2562
        %v2573 = vmul.f32 %v546, %v2562
        %v2574 = vmul.f32 %v547, %v2562
        %v2575 = vmul.f32 %v548, %v2562
        %v2576 = vmul.f32 %v549, %v2562
        %v2577 = vmul.f32 %v550, %v2562
        %v2578 = vmul.f32 %v551, %v2562
        %v2579 = vmul.f32 %v552, %v2562
        %v2580 = vmul.f32 %v553, %v2562
        %v2581 = vmul.f32 %v554, %v2562
        %v2582 = vmul.f32 %v555, %v2562
        %v2583 = vmul.f32 %v556, %v2562
        %v2584 = vmul.f32 %v557, %v2562
        %v2585 = vmul.f32 %v558, %v2562
        %v2586 = vmul.f32 %v559, %v2562
        %v2587 = vmul.f32 %v560, %v2562
        %v2588 = vmul.f32 %v561, %v2562
        %v2589 = vmul.f32 %v562, %v2562
        %v2590 = vmul.f32 %v563, %v2562
        %v2591 = vmul.f32 %v564, %v2562
        %v2592 = vmul.f32 %v565, %v2562
        %v2593 = vmul.f32 %v566, %v2562
        %v2594 = vmul.f32 %v567, %v2562
        %v2595 = vadd.f32 %v2527, %v2563
        %v2596 = vadd.f32 %v2528, %v2564
        %v2597 = vadd.f32 %v2529, %v2565
        %v2598 = vadd.f32 %v2530, %v2566
        %v2599 = vadd.f32 %v2531, %v2567
        %v2600 = vadd.f32 %v2532, %v2568
        %v2601 = vadd.f32 %v2533, %v2569
        %v2602 = vadd.f32 %v2534, %v2570
        %v2603 = vadd.f32 %v2535, %v2571
        %v2604 = vadd.f32 %v2536, %v2572
        %v2605 = vadd.f32 %v2537, %v2573
        %v2606 = vadd.f32 %v2538, %v2574
        %v2607 = vadd.f32 %v2539, %v2575
        %v2608 = vadd.f32 %v2540, %v2576
        %v2609 = vadd.f32 %v2541, %v2577
        %v2610 = vadd.f32 %v2542, %v2578
        %v2611 = vadd.f32 %v2543, %v2579
        %v2612 = vadd.f32 %v2544, %v2580
        %v2613 = vadd.f32 %v2545, %v2581
        %v2614 = vadd.f32 %v2546, %v2582
        %v2615 = vadd.f32 %v2547, %v2583
        %v2616 = vadd.f32 %v2548, %v2584
        %v2617 = vadd.f32 %v2549, %v2585
        %v2618 = vadd.f32 %v2550, %v2586
        %v2619 = vadd.f32 %v2551, %v2587
        %v2620 = vadd.f32 %v2552, %v2588
        %v2621 = vadd.f32 %v2553, %v2589
        %v2622 = vadd.f32 %v2554, %v2590
        %v2623 = vadd.f32 %v2555, %v2591
        %v2624 = vadd.f32 %v2556, %v2592
        %v2625 = vadd.f32 %v2557, %v2593
        %v2626 = vadd.f32 %v2558, %v2594
        %v2627 = vlaneseq
        %v2628 = vshrl.u32 %v2627, 7
        %v2629 = vsub.s32 0, %v2628
        %v2630 = vrot.slane %v575, %v2629
        %v2631 = vmul.f32 %v378, %v2630
        %v2632 = vmul.f32 %v379, %v2630
        %v2633 = vmul.f32 %v380, %v2630
        %v2634 = vmul.f32 %v381, %v2630
        %v2635 = vmul.f32 %v382, %v2630
        %v2636 = vmul.f32 %v383, %v2630
        %v2637 = vmul.f32 %v384, %v2630
        %v2638 = vmul.f32 %v385, %v2630
        %v2639 = vmul.f32 %v386, %v2630
        %v2640 = vmul.f32 %v387, %v2630
        %v2641 = vmul.f32 %v388, %v2630
        %v2642 = vmul.f32 %v389, %v2630
        %v2643 = vmul.f32 %v390, %v2630
        %v2644 = vmul.f32 %v391, %v2630
        %v2645 = vmul.f32 %v392, %v2630
        %v2646 = vmul.f32 %v393, %v2630
        %v2647 = vmul.f32 %v394, %v2630
        %v2648 = vmul.f32 %v395, %v2630
        %v2649 = vmul.f32 %v396, %v2630
        %v2650 = vmul.f32 %v397, %v2630
        %v2651 = vmul.f32 %v398, %v2630
        %v2652 = vmul.f32 %v399, %v2630
        %v2653 = vmul.f32 %v400, %v2630
        %v2654 = vmul.f32 %v401, %v2630
        %v2655 = vmul.f32 %v402, %v2630
        %v2656 = vmul.f32 %v403, %v2630
        %v2657 = vmul.f32 %v404, %v2630
        %v2658 = vmul.f32 %v405, %v2630
        %v2659 = vmul.f32 %v406, %v2630
        %v2660 = vmul.f32 %v407, %v2630
        %v2661 = vmul.f32 %v408, %v2630
        %v2662 = vmul.f32 %v409, %v2630
        %v2663 = vadd.f32 %v2595, %v2631
        %v2664 = vadd.f32 %v2596, %v2632
        %v2665 = vadd.f32 %v2597, %v2633
        %v2666 = vadd.f32 %v2598, %v2634
        %v2667 = vadd.f32 %v2599, %v2635
        %v2668 = vadd.f32 %v2600, %v2636
        %v2669 = vadd.f32 %v2601, %v2637
        %v2670 = vadd.f32 %v2602, %v2638
        %v2671 = vadd.f32 %v2603, %v2639
        %v2672 = vadd.f32 %v2604, %v2640
        %v2673 = vadd.f32 %v2605, %v2641
        %v2674 = vadd.f32 %v2606, %v2642
        %v2675 = vadd.f32 %v2607, %v2643
        %v2676 = vadd.f32 %v2608, %v2644
        %v2677 = vadd.f32 %v2609, %v2645
        %v2678 = vadd.f32 %v2610, %v2646
        %v2679 = vadd.f32 %v2611, %v2647
        %v2680 = vadd.f32 %v2612, %v2648
        %v2681 = vadd.f32 %v2613, %v2649
        %v2682 = vadd.f32 %v2614, %v2650
        %v2683 = vadd.f32 %v2615, %v2651
        %v2684 = vadd.f32 %v2616, %v2652
        %v2685 = vadd.f32 %v2617, %v2653
        %v2686 = vadd.f32 %v2618, %v2654
        %v2687 = vadd.f32 %v2619, %v2655
        %v2688 = vadd.f32 %v2620, %v2656
        %v2689 = vadd.f32 %v2621, %v2657
        %v2690 = vadd.f32 %v2622, %v2658
        %v2691 = vadd.f32 %v2623, %v2659
        %v2692 = vadd.f32 %v2624, %v2660
        %v2693 = vadd.f32 %v2625, %v2661
        %v2694 = vadd.f32 %v2626, %v2662
        %v2695 = vlaneseq
        %v2696 = vshrl.u32 %v2695, 7
        %v2697 = vsub.s32 1, %v2696
        %v2698 = vrot.slane %v575, %v2697
        %v2699 = vmul.f32 %v418, %v2698
        %v2700 = vmul.f32 %v419, %v2698
        %v2701 = vmul.f32 %v420, %v2698
        %v2702 = vmul.f32 %v421, %v2698
        %v2703 = vmul.f32 %v422, %v2698
        %v2704 = vmul.f32 %v423, %v2698
        %v2705 = vmul.f32 %v424, %v2698
        %v2706 = vmul.f32 %v425, %v2698
        %v2707 = vmul.f32 %v426, %v2698
        %v2708 = vmul.f32 %v427, %v2698
        %v2709 = vmul.f32 %v428, %v2698
        %v2710 = vmul.f32 %v429, %v2698
        %v2711 = vmul.f32 %v430, %v2698
        %v2712 = vmul.f32 %v431, %v2698
        %v2713 = vmul.f32 %v432, %v2698
        %v2714 = vmul.f32 %v433, %v2698
        %v2715 = vmul.f32 %v434, %v2698
        %v2716 = vmul.f32 %v435, %v2698
        %v2717 = vmul.f32 %v436, %v2698
        %v2718 = vmul.f32 %v437, %v2698
        %v2719 = vmul.f32 %v438, %v2698
        %v2720 = vmul.f32 %v439, %v2698
        %v2721 = vmul.f32 %v440, %v2698
        %v2722 = vmul.f32 %v441, %v2698
        %v2723 = vmul.f32 %v442, %v2698
        %v2724 = vmul.f32 %v443, %v2698
        %v2725 = vmul.f32 %v444, %v2698
        %v2726 = vmul.f32 %v445, %v2698
        %v2727 = vmul.f32 %v446, %v2698
        %v2728 = vmul.f32 %v447, %v2698
        %v2729 = vmul.f32 %v448, %v2698
        %v2730 = vmul.f32 %v449, %v2698
        %v2731 = vadd.f32 %v2663, %v2699
        %v2732 = vadd.f32 %v2664, %v2700
        %v2733 = vadd.f32 %v2665, %v2701
        %v2734 = vadd.f32 %v2666, %v2702
        %v2735 = vadd.f32 %v2667, %v2703
        %v2736 = vadd.f32 %v2668, %v2704
        %v2737 = vadd.f32 %v2669, %v2705
        %v2738 = vadd.f32 %v2670, %v2706
        %v2739 = vadd.f32 %v2671, %v2707
        %v2740 = vadd.f32 %v2672, %v2708
        %v2741 = vadd.f32 %v2673, %v2709
        %v2742 = vadd.f32 %v2674, %v2710
        %v2743 = vadd.f32 %v2675, %v2711
        %v2744 = vadd.f32 %v2676, %v2712
        %v2745 = vadd.f32 %v2677, %v2713
        %v2746 = vadd.f32 %v2678, %v2714
        %v2747 = vadd.f32 %v2679, %v2715
        %v2748 = vadd.f32 %v2680, %v2716
        %v2749 = vadd.f32 %v2681, %v2717
        %v2750 = vadd.f32 %v2682, %v2718
        %v2751 = vadd.f32 %v2683, %v2719
        %v2752 = vadd.f32 %v2684, %v2720
        %v2753 = vadd.f32 %v2685, %v2721
        %v2754 = vadd.f32 %v2686, %v2722
        %v2755 = vadd.f32 %v2687, %v2723
        %v2756 = vadd.f32 %v2688, %v2724
        %v2757 = vadd.f32 %v2689, %v2725
        %v2758 = vadd.f32 %v2690, %v2726
        %v2759 = vadd.f32 %v2691, %v2727
        %v2760 = vadd.f32 %v2692, %v2728
        %v2761 = vadd.f32 %v2693, %v2729
        %v2762 = vadd.f32 %v2694, %v2730
        %v2763 = vlaneseq
        %v2764 = vshrl.u32 %v2763, 7
        %v2765 = vsub.s32 2, %v2764
        %v2766 = vrot.slane %v575, %v2765
        %v2767 = vmul.f32 %v458, %v2766
        %v2768 = vmul.f32 %v459, %v2766
        %v2769 = vmul.f32 %v460, %v2766
        %v2770 = vmul.f32 %v461, %v2766
        %v2771 = vmul.f32 %v462, %v2766
        %v2772 = vmul.f32 %v463, %v2766
        %v2773 = vmul.f32 %v464, %v2766
        %v2774 = vmul.f32 %v465, %v2766
        %v2775 = vmul.f32 %v466, %v2766
        %v2776 = vmul.f32 %v467, %v2766
        %v2777 = vmul.f32 %v468, %v2766
        %v2778 = vmul.f32 %v469, %v2766
        %v2779 = vmul.f32 %v470, %v2766
        %v2780 = vmul.f32 %v471, %v2766
        %v2781 = vmul.f32 %v472, %v2766
        %v2782 = vmul.f32 %v473, %v2766
        %v2783 = vmul.f32 %v474, %v2766
        %v2784 = vmul.f32 %v475, %v2766
        %v2785 = vmul.f32 %v476, %v2766
        %v2786 = vmul.f32 %v477, %v2766
        %v2787 = vmul.f32 %v478, %v2766
        %v2788 = vmul.f32 %v479, %v2766
        %v2789 = vmul.f32 %v480, %v2766
        %v2790 = vmul.f32 %v481, %v2766
        %v2791 = vmul.f32 %v482, %v2766
        %v2792 = vmul.f32 %v483, %v2766
        %v2793 = vmul.f32 %v484, %v2766
        %v2794 = vmul.f32 %v485, %v2766
        %v2795 = vmul.f32 %v486, %v2766
        %v2796 = vmul.f32 %v487, %v2766
        %v2797 = vmul.f32 %v488, %v2766
        %v2798 = vmul.f32 %v489, %v2766
        %v2799 = vadd.f32 %v2731, %v2767
        %v2800 = vadd.f32 %v2732, %v2768
        %v2801 = vadd.f32 %v2733, %v2769
        %v2802 = vadd.f32 %v2734, %v2770
        %v2803 = vadd.f32 %v2735, %v2771
        %v2804 = vadd.f32 %v2736, %v2772
        %v2805 = vadd.f32 %v2737, %v2773
        %v2806 = vadd.f32 %v2738, %v2774
        %v2807 = vadd.f32 %v2739, %v2775
        %v2808 = vadd.f32 %v2740, %v2776
        %v2809 = vadd.f32 %v2741, %v2777
        %v2810 = vadd.f32 %v2742, %v2778
        %v2811 = vadd.f32 %v2743, %v2779
        %v2812 = vadd.f32 %v2744, %v2780
        %v2813 = vadd.f32 %v2745, %v2781
        %v2814 = vadd.f32 %v2746, %v2782
        %v2815 = vadd.f32 %v2747, %v2783
        %v2816 = vadd.f32 %v2748, %v2784
        %v2817 = vadd.f32 %v2749, %v2785
        %v2818 = vadd.f32 %v2750, %v2786
        %v2819 = vadd.f32 %v2751, %v2787
        %v2820 = vadd.f32 %v2752, %v2788
        %v2821 = vadd.f32 %v2753, %v2789
        %v2822 = vadd.f32 %v2754, %v2790
        %v2823 = vadd.f32 %v2755, %v2791
        %v2824 = vadd.f32 %v2756, %v2792
        %v2825 = vadd.f32 %v2757, %v2793
        %v2826 = vadd.f32 %v2758, %v2794
        %v2827 = vadd.f32 %v2759, %v2795
        %v2828 = vadd.f32 %v2760, %v2796
        %v2829 = vadd.f32 %v2761, %v2797
        %v2830 = vadd.f32 %v2762, %v2798
        %v2831 = vlaneseq
        %v2832 = vshrl.u32 %v2831, 7
        %v2833 = vsub.s32 3, %v2832
        %v2834 = vrot.slane %v575, %v2833
        %v2835 = vmul.f32 %v498, %v2834
        %v2836 = vmul.f32 %v499, %v2834
        %v2837 = vmul.f32 %v500, %v2834
        %v2838 = vmul.f32 %v501, %v2834
        %v2839 = vmul.f32 %v502, %v2834
        %v2840 = vmul.f32 %v503, %v2834
        %v2841 = vmul.f32 %v504, %v2834
        %v2842 = vmul.f32 %v505, %v2834
        %v2843 = vmul.f32 %v506, %v2834
        %v2844 = vmul.f32 %v507, %v2834
        %v2845 = vmul.f32 %v508, %v2834
        %v2846 = vmul.f32 %v509, %v2834
        %v2847 = vmul.f32 %v510, %v2834
        %v2848 = vmul.f32 %v511, %v2834
        %v2849 = vmul.f32 %v512, %v2834
        %v2850 = vmul.f32 %v513, %v2834
        %v2851 = vmul.f32 %v514, %v2834
        %v2852 = vmul.f32 %v515, %v2834
        %v2853 = vmul.f32 %v516, %v2834
        %v2854 = vmul.f32 %v517, %v2834
        %v2855 = vmul.f32 %v518, %v2834
        %v2856 = vmul.f32 %v519, %v2834
        %v2857 = vmul.f32 %v520, %v2834
        %v2858 = vmul.f32 %v521, %v2834
        %v2859 = vmul.f32 %v522, %v2834
        %v2860 = vmul.f32 %v523, %v2834
        %v2861 = vmul.f32 %v524, %v2834
        %v2862 = vmul.f32 %v525, %v2834
        %v2863 = vmul.f32 %v526, %v2834
        %v2864 = vmul.f32 %v527, %v2834
        %v2865 = vmul.f32 %v528, %v2834
        %v2866 = vmul.f32 %v529, %v2834
        %v2867 = vadd.f32 %v2799, %v2835
        %v2868 = vadd.f32 %v2800, %v2836
        %v2869 = vadd.f32 %v2801, %v2837
        %v2870 = vadd.f32 %v2802, %v2838
        %v2871 = vadd.f32 %v2803, %v2839
        %v2872 = vadd.f32 %v2804, %v2840
        %v2873 = vadd.f32 %v2805, %v2841
        %v2874 = vadd.f32 %v2806, %v2842
        %v2875 = vadd.f32 %v2807, %v2843
        %v2876 = vadd.f32 %v2808, %v2844
        %v2877 = vadd.f32 %v2809, %v2845
        %v2878 = vadd.f32 %v2810, %v2846
        %v2879 = vadd.f32 %v2811, %v2847
        %v2880 = vadd.f32 %v2812, %v2848
        %v2881 = vadd.f32 %v2813, %v2849
        %v2882 = vadd.f32 %v2814, %v2850
        %v2883 = vadd.f32 %v2815, %v2851
        %v2884 = vadd.f32 %v2816, %v2852
        %v2885 = vadd.f32 %v2817, %v2853
        %v2886 = vadd.f32 %v2818, %v2854
        %v2887 = vadd.f32 %v2819, %v2855
        %v2888 = vadd.f32 %v2820, %v2856
        %v2889 = vadd.f32 %v2821, %v2857
        %v2890 = vadd.f32 %v2822, %v2858
        %v2891 = vadd.f32 %v2823, %v2859
        %v2892 = vadd.f32 %v2824, %v2860
        %v2893 = vadd.f32 %v2825, %v2861
        %v2894 = vadd.f32 %v2826, %v2862
        %v2895 = vadd.f32 %v2827, %v2863
        %v2896 = vadd.f32 %v2828, %v2864
        %v2897 = vadd.f32 %v2829, %v2865
        %v2898 = vadd.f32 %v2830, %v2866
        %v2899 = vlaneseq
        %v2900 = vshrl.u32 %v2899, 7
        %v2901 = vsub.s32 4, %v2900
        %v2902 = vrot.slane %v575, %v2901
        %v2903 = vmul.f32 %v538, %v2902
        %v2904 = vmul.f32 %v539, %v2902
        %v2905 = vmul.f32 %v540, %v2902
        %v2906 = vmul.f32 %v541, %v2902
        %v2907 = vmul.f32 %v542, %v2902
        %v2908 = vmul.f32 %v543, %v2902
        %v2909 = vmul.f32 %v544, %v2902
        %v2910 = vmul.f32 %v545, %v2902
        %v2911 = vmul.f32 %v546, %v2902
        %v2912 = vmul.f32 %v547, %v2902
        %v2913 = vmul.f32 %v548, %v2902
        %v2914 = vmul.f32 %v549, %v2902
        %v2915 = vmul.f32 %v550, %v2902
        %v2916 = vmul.f32 %v551, %v2902
        %v2917 = vmul.f32 %v552, %v2902
        %v2918 = vmul.f32 %v553, %v2902
        %v2919 = vmul.f32 %v554, %v2902
        %v2920 = vmul.f32 %v555, %v2902
        %v2921 = vmul.f32 %v556, %v2902
        %v2922 = vmul.f32 %v557, %v2902
        %v2923 = vmul.f32 %v558, %v2902
        %v2924 = vmul.f32 %v559, %v2902
        %v2925 = vmul.f32 %v560, %v2902
        %v2926 = vmul.f32 %v561, %v2902
        %v2927 = vmul.f32 %v562, %v2902
        %v2928 = vmul.f32 %v563, %v2902
        %v2929 = vmul.f32 %v564, %v2902
        %v2930 = vmul.f32 %v565, %v2902
        %v2931 = vmul.f32 %v566, %v2902
        %v2932 = vmul.f32 %v567, %v2902
        %v2933 = vmul.f32 %v568, %v2902
        %v2934 = vmul.f32 %v569, %v2902
        %v2935 = vadd.f32 %v2867, %v2903
        %v2936 = vadd.f32 %v2868, %v2904
        %v2937 = vadd.f32 %v2869, %v2905
        %v2938 = vadd.f32 %v2870, %v2906
        %v2939 = vadd.f32 %v2871, %v2907
        %v2940 = vadd.f32 %v2872, %v2908
        %v2941 = vadd.f32 %v2873, %v2909
        %v2942 = vadd.f32 %v2874, %v2910
        %v2943 = vadd.f32 %v2875, %v2911
        %v2944 = vadd.f32 %v2876, %v2912
        %v2945 = vadd.f32 %v2877, %v2913
        %v2946 = vadd.f32 %v2878, %v2914
        %v2947 = vadd.f32 %v2879, %v2915
        %v2948 = vadd.f32 %v2880, %v2916
        %v2949 = vadd.f32 %v2881, %v2917
        %v2950 = vadd.f32 %v2882, %v2918
        %v2951 = vadd.f32 %v2883, %v2919
        %v2952 = vadd.f32 %v2884, %v2920
        %v2953 = vadd.f32 %v2885, %v2921
        %v2954 = vadd.f32 %v2886, %v2922
        %v2955 = vadd.f32 %v2887, %v2923
        %v2956 = vadd.f32 %v2888, %v2924
        %v2957 = vadd.f32 %v2889, %v2925
        %v2958 = vadd.f32 %v2890, %v2926
        %v2959 = vadd.f32 %v2891, %v2927
        %v2960 = vadd.f32 %v2892, %v2928
        %v2961 = vadd.f32 %v2893, %v2929
        %v2962 = vadd.f32 %v2894, %v2930
        %v2963 = vadd.f32 %v2895, %v2931
        %v2964 = vadd.f32 %v2896, %v2932
        %v2965 = vadd.f32 %v2897, %v2933
        %v2966 = vadd.f32 %v2898, %v2934
        %v2967 = vlaneseq
        %v2968 = vshrl.u32 %v2967, 7
        %v2969 = vsub.s32 5, %v2968
        %v2970 = vrot.slane %v575, %v2969
        %v2971 = vmul.f32 %v380, %v2970
        %v2972 = vmul.f32 %v381, %v2970
        %v2973 = vmul.f32 %v382, %v2970
        %v2974 = vmul.f32 %v383, %v2970
        %v2975 = vmul.f32 %v384, %v2970
        %v2976 = vmul.f32 %v385, %v2970
        %v2977 = vmul.f32 %v386, %v2970
        %v2978 = vmul.f32 %v387, %v2970
        %v2979 = vmul.f32 %v388, %v2970
        %v2980 = vmul.f32 %v389, %v2970
        %v2981 = vmul.f32 %v390, %v2970
        %v2982 = vmul.f32 %v391, %v2970
        %v2983 = vmul.f32 %v392, %v2970
        %v2984 = vmul.f32 %v393, %v2970
        %v2985 = vmul.f32 %v394, %v2970
        %v2986 = vmul.f32 %v395, %v2970
        %v2987 = vmul.f32 %v396, %v2970
        %v2988 = vmul.f32 %v397, %v2970
        %v2989 = vmul.f32 %v398, %v2970
        %v2990 = vmul.f32 %v399, %v2970
        %v2991 = vmul.f32 %v400, %v2970
        %v2992 = vmul.f32 %v401, %v2970
        %v2993 = vmul.f32 %v402, %v2970
        %v2994 = vmul.f32 %v403, %v2970
        %v2995 = vmul.f32 %v404, %v2970
        %v2996 = vmul.f32 %v405, %v2970
        %v2997 = vmul.f32 %v406, %v2970
        %v2998 = vmul.f32 %v407, %v2970
        %v2999 = vmul.f32 %v408, %v2970
        %v3000 = vmul.f32 %v409, %v2970
        %v3001 = vmul.f32 %v410, %v2970
        %v3002 = vmul.f32 %v411, %v2970
        %v3003 = vadd.f32 %v2935, %v2971
        %v3004 = vadd.f32 %v2936, %v2972
        %v3005 = vadd.f32 %v2937, %v2973
        %v3006 = vadd.f32 %v2938, %v2974
        %v3007 = vadd.f32 %v2939, %v2975
        %v3008 = vadd.f32 %v2940, %v2976
        %v3009 = vadd.f32 %v2941, %v2977
        %v3010 = vadd.f32 %v2942, %v2978
        %v3011 = vadd.f32 %v2943, %v2979
        %v3012 = vadd.f32 %v2944, %v2980
        %v3013 = vadd.f32 %v2945, %v2981
        %v3014 = vadd.f32 %v2946, %v2982
        %v3015 = vadd.f32 %v2947, %v2983
        %v3016 = vadd.f32 %v2948, %v2984
        %v3017 = vadd.f32 %v2949, %v2985
        %v3018 = vadd.f32 %v2950, %v2986
        %v3019 = vadd.f32 %v2951, %v2987
        %v3020 = vadd.f32 %v2952, %v2988
        %v3021 = vadd.f32 %v2953, %v2989
        %v3022 = vadd.f32 %v2954, %v2990
        %v3023 = vadd.f32 %v2955, %v2991
        %v3024 = vadd.f32 %v2956, %v2992
        %v3025 = vadd.f32 %v2957, %v2993
        %v3026 = vadd.f32 %v2958, %v2994
        %v3027 = vadd.f32 %v2959, %v2995
        %v3028 = vadd.f32 %v2960, %v2996
        %v3029 = vadd.f32 %v2961, %v2997
        %v3030 = vadd.f32 %v2962, %v2998
        %v3031 = vadd.f32 %v2963, %v2999
        %v3032 = vadd.f32 %v2964, %v3000
        %v3033 = vadd.f32 %v2965, %v3001
        %v3034 = vadd.f32 %v2966, %v3002
        %v3035 = vlaneseq
        %v3036 = vshrl.u32 %v3035, 7
        %v3037 = vsub.s32 6, %v3036
        %v3038 = vrot.slane %v575, %v3037
        %v3039 = vmul.f32 %v420, %v3038
        %v3040 = vmul.f32 %v421, %v3038
        %v3041 = vmul.f32 %v422, %v3038
        %v3042 = vmul.f32 %v423, %v3038
        %v3043 = vmul.f32 %v424, %v3038
        %v3044 = vmul.f32 %v425, %v3038
        %v3045 = vmul.f32 %v426, %v3038
        %v3046 = vmul.f32 %v427, %v3038
        %v3047 = vmul.f32 %v428, %v3038
        %v3048 = vmul.f32 %v429, %v3038
        %v3049 = vmul.f32 %v430, %v3038
        %v3050 = vmul.f32 %v431, %v3038
        %v3051 = vmul.f32 %v432, %v3038
        %v3052 = vmul.f32 %v433, %v3038
        %v3053 = vmul.f32 %v434, %v3038
        %v3054 = vmul.f32 %v435, %v3038
        %v3055 = vmul.f32 %v436, %v3038
        %v3056 = vmul.f32 %v437, %v3038
        %v3057 = vmul.f32 %v438, %v3038
        %v3058 = vmul.f32 %v439, %v3038
        %v3059 = vmul.f32 %v440, %v3038
        %v3060 = vmul.f32 %v441, %v3038
        %v3061 = vmul.f32 %v442, %v3038
        %v3062 = vmul.f32 %v443, %v3038
        %v3063 = vmul.f32 %v444, %v3038
        %v3064 = vmul.f32 %v445, %v3038
        %v3065 = vmul.f32 %v446, %v3038
        %v3066 = vmul.f32 %v447, %v3038
        %v3067 = vmul.f32 %v448, %v3038
        %v3068 = vmul.f32 %v449, %v3038
        %v3069 = vmul.f32 %v450, %v3038
        %v3070 = vmul.f32 %v451, %v3038
        %v3071 = vadd.f32 %v3003, %v3039
        %v3072 = vadd.f32 %v3004, %v3040
        %v3073 = vadd.f32 %v3005, %v3041
        %v3074 = vadd.f32 %v3006, %v3042
        %v3075 = vadd.f32 %v3007, %v3043
        %v3076 = vadd.f32 %v3008, %v3044
        %v3077 = vadd.f32 %v3009, %v3045
        %v3078 = vadd.f32 %v3010, %v3046
        %v3079 = vadd.f32 %v3011, %v3047
        %v3080 = vadd.f32 %v3012, %v3048
        %v3081 = vadd.f32 %v3013, %v3049
        %v3082 = vadd.f32 %v3014, %v3050
        %v3083 = vadd.f32 %v3015, %v3051
        %v3084 = vadd.f32 %v3016, %v3052
        %v3085 = vadd.f32 %v3017, %v3053
        %v3086 = vadd.f32 %v3018, %v3054
        %v3087 = vadd.f32 %v3019, %v3055
        %v3088 = vadd.f32 %v3020, %v3056
        %v3089 = vadd.f32 %v3021, %v3057
        %v3090 = vadd.f32 %v3022, %v3058
        %v3091 = vadd.f32 %v3023, %v3059
        %v3092 = vadd.f32 %v3024, %v3060
        %v3093 = vadd.f32 %v3025, %v3061
        %v3094 = vadd.f32 %v3026, %v3062
        %v3095 = vadd.f32 %v3027, %v3063
        %v3096 = vadd.f32 %v3028, %v3064
        %v3097 = vadd.f32 %v3029, %v3065
        %v3098 = vadd.f32 %v3030, %v3066
        %v3099 = vadd.f32 %v3031, %v3067
        %v3100 = vadd.f32 %v3032, %v3068
        %v3101 = vadd.f32 %v3033, %v3069
        %v3102 = vadd.f32 %v3034, %v3070
        %v3103 = vlaneseq
        %v3104 = vshrl.u32 %v3103, 7
        %v3105 = vsub.s32 7, %v3104
        %v3106 = vrot.slane %v575, %v3105
        %v3107 = vmul.f32 %v460, %v3106
        %v3108 = vmul.f32 %v461, %v3106
        %v3109 = vmul.f32 %v462, %v3106
        %v3110 = vmul.f32 %v463, %v3106
        %v3111 = vmul.f32 %v464, %v3106
        %v3112 = vmul.f32 %v465, %v3106
        %v3113 = vmul.f32 %v466, %v3106
        %v3114 = vmul.f32 %v467, %v3106
        %v3115 = vmul.f32 %v468, %v3106
        %v3116 = vmul.f32 %v469, %v3106
        %v3117 = vmul.f32 %v470, %v3106
        %v3118 = vmul.f32 %v471, %v3106
        %v3119 = vmul.f32 %v472, %v3106
        %v3120 = vmul.f32 %v473, %v3106
        %v3121 = vmul.f32 %v474, %v3106
        %v3122 = vmul.f32 %v475, %v3106
        %v3123 = vmul.f32 %v476, %v3106
        %v3124 = vmul.f32 %v477, %v3106
        %v3125 = vmul.f32 %v478, %v3106
        %v3126 = vmul.f32 %v479, %v3106
        %v3127 = vmul.f32 %v480, %v3106
        %v3128 = vmul.f32 %v481, %v3106
        %v3129 = vmul.f32 %v482, %v3106
        %v3130 = vmul.f32 %v483, %v3106
        %v3131 = vmul.f32 %v484, %v3106
        %v3132 = vmul.f32 %v485, %v3106
        %v3133 = vmul.f32 %v486, %v3106
        %v3134 = vmul.f32 %v487, %v3106
        %v3135 = vmul.f32 %v488, %v3106
        %v3136 = vmul.f32 %v489, %v3106
        %v3137 = vmul.f32 %v490, %v3106
        %v3138 = vmul.f32 %v491, %v3106
        %v3139 = vadd.f32 %v3071, %v3107
        %v3140 = vadd.f32 %v3072, %v3108
        %v3141 = vadd.f32 %v3073, %v3109
        %v3142 = vadd.f32 %v3074, %v3110
        %v3143 = vadd.f32 %v3075, %v3111
        %v3144 = vadd.f32 %v3076, %v3112
        %v3145 = vadd.f32 %v3077, %v3113
        %v3146 = vadd.f32 %v3078, %v3114
        %v3147 = vadd.f32 %v3079, %v3115
        %v3148 = vadd.f32 %v3080, %v3116
        %v3149 = vadd.f32 %v3081, %v3117
        %v3150 = vadd.f32 %v3082, %v3118
        %v3151 = vadd.f32 %v3083, %v3119
        %v3152 = vadd.f32 %v3084, %v3120
        %v3153 = vadd.f32 %v3085, %v3121
        %v3154 = vadd.f32 %v3086, %v3122
        %v3155 = vadd.f32 %v3087, %v3123
        %v3156 = vadd.f32 %v3088, %v3124
        %v3157 = vadd.f32 %v3089, %v3125
        %v3158 = vadd.f32 %v3090, %v3126
        %v3159 = vadd.f32 %v3091, %v3127
        %v3160 = vadd.f32 %v3092, %v3128
        %v3161 = vadd.f32 %v3093, %v3129
        %v3162 = vadd.f32 %v3094, %v3130
        %v3163 = vadd.f32 %v3095, %v3131
        %v3164 = vadd.f32 %v3096, %v3132
        %v3165 = vadd.f32 %v3097, %v3133
        %v3166 = vadd.f32 %v3098, %v3134
        %v3167 = vadd.f32 %v3099, %v3135
        %v3168 = vadd.f32 %v3100, %v3136
        %v3169 = vadd.f32 %v3101, %v3137
        %v3170 = vadd.f32 %v3102, %v3138
        %v3171 = vlaneseq
        %v3172 = vshrl.u32 %v3171, 7
        %v3173 = vsub.s32 0, %v3172
        %v3174 = vrot.slane %v576, %v3173
        %v3175 = vmul.f32 %v500, %v3174
        %v3176 = vmul.f32 %v501, %v3174
        %v3177 = vmul.f32 %v502, %v3174
        %v3178 = vmul.f32 %v503, %v3174
        %v3179 = vmul.f32 %v504, %v3174
        %v3180 = vmul.f32 %v505, %v3174
        %v3181 = vmul.f32 %v506, %v3174
        %v3182 = vmul.f32 %v507, %v3174
        %v3183 = vmul.f32 %v508, %v3174
        %v3184 = vmul.f32 %v509, %v3174
        %v3185 = vmul.f32 %v510, %v3174
        %v3186 = vmul.f32 %v511, %v3174
        %v3187 = vmul.f32 %v512, %v3174
        %v3188 = vmul.f32 %v513, %v3174
        %v3189 = vmul.f32 %v514, %v3174
        %v3190 = vmul.f32 %v515, %v3174
        %v3191 = vmul.f32 %v516, %v3174
        %v3192 = vmul.f32 %v517, %v3174
        %v3193 = vmul.f32 %v518, %v3174
        %v3194 = vmul.f32 %v519, %v3174
        %v3195 = vmul.f32 %v520, %v3174
        %v3196 = vmul.f32 %v521, %v3174
        %v3197 = vmul.f32 %v522, %v3174
        %v3198 = vmul.f32 %v523, %v3174
        %v3199 = vmul.f32 %v524, %v3174
        %v3200 = vmul.f32 %v525, %v3174
        %v3201 = vmul.f32 %v526, %v3174
        %v3202 = vmul.f32 %v527, %v3174
        %v3203 = vmul.f32 %v528, %v3174
        %v3204 = vmul.f32 %v529, %v3174
        %v3205 = vmul.f32 %v530, %v3174
        %v3206 = vmul.f32 %v531, %v3174
        %v3207 = vadd.f32 %v3139, %v3175
        %v3208 = vadd.f32 %v3140, %v3176
        %v3209 = vadd.f32 %v3141, %v3177
        %v3210 = vadd.f32 %v3142, %v3178
        %v3211 = vadd.f32 %v3143, %v3179
        %v3212 = vadd.f32 %v3144, %v3180
        %v3213 = vadd.f32 %v3145, %v3181
        %v3214 = vadd.f32 %v3146, %v3182
        %v3215 = vadd.f32 %v3147, %v3183
        %v3216 = vadd.f32 %v3148, %v3184
        %v3217 = vadd.f32 %v3149, %v3185
        %v3218 = vadd.f32 %v3150, %v3186
        %v3219 = vadd.f32 %v3151, %v3187
        %v3220 = vadd.f32 %v3152, %v3188
        %v3221 = vadd.f32 %v3153, %v3189
        %v3222 = vadd.f32 %v3154, %v3190
        %v3223 = vadd.f32 %v3155, %v3191
        %v3224 = vadd.f32 %v3156, %v3192
        %v3225 = vadd.f32 %v3157, %v3193
        %v3226 = vadd.f32 %v3158, %v3194
        %v3227 = vadd.f32 %v3159, %v3195
        %v3228 = vadd.f32 %v3160, %v3196
        %v3229 = vadd.f32 %v3161, %v3197
        %v3230 = vadd.f32 %v3162, %v3198
        %v3231 = vadd.f32 %v3163, %v3199
        %v3232 = vadd.f32 %v3164, %v3200
        %v3233 = vadd.f32 %v3165, %v3201
        %v3234 = vadd.f32 %v3166, %v3202
        %v3235 = vadd.f32 %v3167, %v3203
        %v3236 = vadd.f32 %v3168, %v3204
        %v3237 = vadd.f32 %v3169, %v3205
        %v3238 = vadd.f32 %v3170, %v3206
        %v3239 = vlaneseq
        %v3240 = vshrl.u32 %v3239, 7
        %v3241 = vsub.s32 1, %v3240
        %v3242 = vrot.slane %v576, %v3241
        %v3243 = vmul.f32 %v540, %v3242
        %v3244 = vmul.f32 %v541, %v3242
        %v3245 = vmul.f32 %v542, %v3242
        %v3246 = vmul.f32 %v543, %v3242
        %v3247 = vmul.f32 %v544, %v3242
        %v3248 = vmul.f32 %v545, %v3242
        %v3249 = vmul.f32 %v546, %v3242
        %v3250 = vmul.f32 %v547, %v3242
        %v3251 = vmul.f32 %v548, %v3242
        %v3252 = vmul.f32 %v549, %v3242
        %v3253 = vmul.f32 %v550, %v3242
        %v3254 = vmul.f32 %v551, %v3242
        %v3255 = vmul.f32 %v552, %v3242
        %v3256 = vmul.f32 %v553, %v3242
        %v3257 = vmul.f32 %v554, %v3242
        %v3258 = vmul.f32 %v555, %v3242
        %v3259 = vmul.f32 %v556, %v3242
        %v3260 = vmul.f32 %v557, %v3242
        %v3261 = vmul.f32 %v558, %v3242
        %v3262 = vmul.f32 %v559, %v3242
        %v3263 = vmul.f32 %v560, %v3242
        %v3264 = vmul.f32 %v561, %v3242
        %v3265 = vmul.f32 %v562, %v3242
        %v3266 = vmul.f32 %v563, %v3242
        %v3267 = vmul.f32 %v564, %v3242
        %v3268 = vmul.f32 %v565, %v3242
        %v3269 = vmul.f32 %v566, %v3242
        %v3270 = vmul.f32 %v567, %v3242
        %v3271 = vmul.f32 %v568, %v3242
        %v3272 = vmul.f32 %v569, %v3242
        %v3273 = vmul.f32 %v570, %v3242
        %v3274 = vmul.f32 %v571, %v3242
        %v3275 = vadd.f32 %v3207, %v3243
        %v3276 = vadd.f32 %v3208, %v3244
        %v3277 = vadd.f32 %v3209, %v3245
        %v3278 = vadd.f32 %v3210, %v3246
        %v3279 = vadd.f32 %v3211, %v3247
        %v3280 = vadd.f32 %v3212, %v3248
        %v3281 = vadd.f32 %v3213, %v3249
        %v3282 = vadd.f32 %v3214, %v3250
        %v3283 = vadd.f32 %v3215, %v3251
        %v3284 = vadd.f32 %v3216, %v3252
        %v3285 = vadd.f32 %v3217, %v3253
        %v3286 = vadd.f32 %v3218, %v3254
        %v3287 = vadd.f32 %v3219, %v3255
        %v3288 = vadd.f32 %v3220, %v3256
        %v3289 = vadd.f32 %v3221, %v3257
        %v3290 = vadd.f32 %v3222, %v3258
        %v3291 = vadd.f32 %v3223, %v3259
        %v3292 = vadd.f32 %v3224, %v3260
        %v3293 = vadd.f32 %v3225, %v3261
        %v3294 = vadd.f32 %v3226, %v3262
        %v3295 = vadd.f32 %v3227, %v3263
        %v3296 = vadd.f32 %v3228, %v3264
        %v3297 = vadd.f32 %v3229, %v3265
        %v3298 = vadd.f32 %v3230, %v3266
        %v3299 = vadd.f32 %v3231, %v3267
        %v3300 = vadd.f32 %v3232, %v3268
        %v3301 = vadd.f32 %v3233, %v3269
        %v3302 = vadd.f32 %v3234, %v3270
        %v3303 = vadd.f32 %v3235, %v3271
        %v3304 = vadd.f32 %v3236, %v3272
        %v3305 = vadd.f32 %v3237, %v3273
        %v3306 = vadd.f32 %v3238, %v3274
        %v3307 = vlaneseq
        %v3308 = vshrl.u32 %v3307, 7
        %v3309 = vsub.s32 4, %v3308
        %v3310 = vrot.slane %v577, %v3309
        %v3311 = vmul.f32 %v3275, %v3310
        %v3312 = vmul.f32 %v3276, %v3310
        %v3313 = vmul.f32 %v3277, %v3310
        %v3314 = vmul.f32 %v3278, %v3310
        %v3315 = vmul.f32 %v3279, %v3310
        %v3316 = vmul.f32 %v3280, %v3310
        %v3317 = vmul.f32 %v3281, %v3310
        %v3318 = vmul.f32 %v3282, %v3310
        %v3319 = vmul.f32 %v3283, %v3310
        %v3320 = vmul.f32 %v3284, %v3310
        %v3321 = vmul.f32 %v3285, %v3310
        %v3322 = vmul.f32 %v3286, %v3310
        %v3323 = vmul.f32 %v3287, %v3310
        %v3324 = vmul.f32 %v3288, %v3310
        %v3325 = vmul.f32 %v3289, %v3310
        %v3326 = vmul.f32 %v3290, %v3310
        %v3327 = vmul.f32 %v3291, %v3310
        %v3328 = vmul.f32 %v3292, %v3310
        %v3329 = vmul.f32 %v3293, %v3310
        %v3330 = vmul.f32 %v3294, %v3310
        %v3331 = vmul.f32 %v3295, %v3310
        %v3332 = vmul.f32 %v3296, %v3310
        %v3333 = vmul.f32 %v3297, %v3310
        %v3334 = vmul.f32 %v3298, %v3310
        %v3335 = vmul.f32 %v3299, %v3310
        %v3336 = vmul.f32 %v3300, %v3310
        %v3337 = vmul.f32 %v3301, %v3310
        %v3338 = vmul.f32 %v3302, %v3310
        %v3339 = vmul.f32 %v3303, %v3310
        %v3340 = vmul.f32 %v3304, %v3310
        %v3341 = vmul.f32 %v3305, %v3310
        %v3342 = vmul.f32 %v3306, %v3310
        %v3343 = vlaneseq
        %v3344 = vshrl.u32 %v3343, 7
        %v3345 = vsub.s32 5, %v3344
        %v3346 = vrot.slane %v577, %v3345
        %v3347 = vadd.f32 %v3311, %v3346
        %v3348 = vadd.f32 %v3312, %v3346
        %v3349 = vadd.f32 %v3313, %v3346
        %v3350 = vadd.f32 %v3314, %v3346
        %v3351 = vadd.f32 %v3315, %v3346
        %v3352 = vadd.f32 %v3316, %v3346
        %v3353 = vadd.f32 %v3317, %v3346
        %v3354 = vadd.f32 %v3318, %v3346
        %v3355 = vadd.f32 %v3319, %v3346
        %v3356 = vadd.f32 %v3320, %v3346
        %v3357 = vadd.f32 %v3321, %v3346
        %v3358 = vadd.f32 %v3322, %v3346
        %v3359 = vadd.f32 %v3323, %v3346
        %v3360 = vadd.f32 %v3324, %v3346
        %v3361 = vadd.f32 %v3325, %v3346
        %v3362 = vadd.f32 %v3326, %v3346
        %v3363 = vadd.f32 %v3327, %v3346
        %v3364 = vadd.f32 %v3328, %v3346
        %v3365 = vadd.f32 %v3329, %v3346
        %v3366 = vadd.f32 %v3330, %v3346
        %v3367 = vadd.f32 %v3331, %v3346
        %v3368 = vadd.f32 %v3332, %v3346
        %v3369 = vadd.f32 %v3333, %v3346
        %v3370 = vadd.f32 %v3334, %v3346
        %v3371 = vadd.f32 %v3335, %v3346
        %v3372 = vadd.f32 %v3336, %v3346
        %v3373 = vadd.f32 %v3337, %v3346
        %v3374 = vadd.f32 %v3338, %v3346
        %v3375 = vadd.f32 %v3339, %v3346
        %v3376 = vadd.f32 %v3340, %v3346
        %v3377 = vadd.f32 %v3341, %v3346
        %v3378 = vadd.f32 %v3342, %v3346
        %s3379 = scalar_lea.vmem [#allocation8], 128
        %v3380 = vld [vmem:[%s3379] sm:$0xff]
        %v3381 = vld [vmem:[%s3379 + $0x8] sm:$0xff]
        %v3382 = vld [vmem:[%s3379 + $0x10] sm:$0xff]
        %v3383 = vld [vmem:[%s3379 + $0x18] sm:$0xff]
        %v3384 = vld [vmem:[%s3379 + $0x20] sm:$0xff]
        %v3385 = vld [vmem:[%s3379 + $0x28] sm:$0xff]
        %v3386 = vld [vmem:[%s3379 + $0x30] sm:$0xff]
        %v3387 = vld [vmem:[%s3379 + $0x38] sm:$0xff]
        %v3388 = vld [vmem:[%s3379 + $0x40] sm:$0xff]
        %v3389 = vld [vmem:[%s3379 + $0x48] sm:$0xff]
        %v3390 = vld [vmem:[%s3379 + $0x50] sm:$0xff]
        %v3391 = vld [vmem:[%s3379 + $0x58] sm:$0xff]
        %v3392 = vld [vmem:[%s3379 + $0x60] sm:$0xff]
        %v3393 = vld [vmem:[%s3379 + $0x68] sm:$0xff]
        %v3394 = vld [vmem:[%s3379 + $0x70] sm:$0xff]
        %v3395 = vld [vmem:[%s3379 + $0x78] sm:$0xff]
        %3396 = vmatprep.subr.mxu0 0.0
        %3397 = vmatpush1.msra.mxu0 %v3380
        %3398 = vmatprep.subr.mxu0 0.0
        %3399 = vmatpush1.msra.mxu0 %v3381
        %3400 = vmatprep.subr.mxu0 0.0
        %3401 = vmatpush1.msra.mxu0 %v3382
        %3402 = vmatprep.subr.mxu0 0.0
        %3403 = vmatpush1.msra.mxu0 %v3383
        %3404 = vmatprep.subr.mxu0 0.0
        %3405 = vmatpush1.msra.mxu0 %v3384
        %3406 = vmatprep.subr.mxu0 0.0
        %3407 = vmatpush1.msra.mxu0 %v3385
        %3408 = vmatprep.subr.mxu0 0.0
        %3409 = vmatpush1.msra.mxu0 %v3386
        %3410 = vmatprep.subr.mxu0 0.0
        %3411 = vmatpush1.msra.mxu0 %v3387
        %3412 = vmatprep.subr.mxu0 0.0
        %3413 = vmatpush1.msra.mxu0 %v3388
        %3414 = vmatprep.subr.mxu0 0.0
        %3415 = vmatpush1.msra.mxu0 %v3389
        %3416 = vmatprep.subr.mxu0 0.0
        %3417 = vmatpush1.msra.mxu0 %v3390
        %3418 = vmatprep.subr.mxu0 0.0
        %3419 = vmatpush1.msra.mxu0 %v3391
        %3420 = vmatprep.subr.mxu0 0.0
        %3421 = vmatpush1.msra.mxu0 %v3392
        %3422 = vmatprep.subr.mxu0 0.0
        %3423 = vmatpush1.msra.mxu0 %v3393
        %3424 = vmatprep.subr.mxu0 0.0
        %3425 = vmatpush1.msra.mxu0 %v3394
        %3426 = vmatprep.subr.mxu0 0.0
        %3427 = vmatpush1.msra.mxu0 %v3395
        %3428 = vmatprep.subr.mxu0 0.0
        %3429 = vmatpush1.msra.mxu0 0.0
        %3430 = vmatprep.subr.mxu0 0.0
        %3431 = vmatpush1.msra.mxu0 0.0
        %3432 = vmatprep.subr.mxu0 0.0
        %3433 = vmatpush1.msra.mxu0 0.0
        %3434 = vmatprep.subr.mxu0 0.0
        %3435 = vmatpush1.msra.mxu0 0.0
        %3436 = vmatprep.subr.mxu0 0.0
        %3437 = vmatpush1.msra.mxu0 0.0
        %3438 = vmatprep.subr.mxu0 0.0
        %3439 = vmatpush1.msra.mxu0 0.0
        %3440 = vmatprep.subr.mxu0 0.0
        %3441 = vmatpush1.msra.mxu0 0.0
        %3442 = vmatprep.subr.mxu0 0.0
        %3443 = vmatpush1.msra.mxu0 0.0
        %3444 = vmatprep.subr.mxu0 0.0
        %3445 = vmatpush1.msra.mxu0 0.0
        %3446 = vmatprep.subr.mxu0 0.0
        %3447 = vmatpush1.msra.mxu0 0.0
        %3448 = vmatprep.subr.mxu0 0.0
        %3449 = vmatpush1.msra.mxu0 0.0
        %3450 = vmatprep.subr.mxu0 0.0
        %3451 = vmatpush1.msra.mxu0 0.0
        %3452 = vmatprep.subr.mxu0 0.0
        %3453 = vmatpush1.msra.mxu0 0.0
        %3454 = vmatprep.subr.mxu0 0.0
        %3455 = vmatpush1.msra.mxu0 0.0
        %3456 = vmatprep.subr.mxu0 0.0
        %3457 = vmatpush1.msra.mxu0 0.0
        %3458 = vmatprep.subr.mxu0 0.0
        %3459 = vmatpush1.msra.mxu0 0.0
        %3460 = vmatprep.mubr.f32.mxu0 0.0
        %3461 = vmatmul.mubr.f32.gmra.mrb[0].mxu0 %v3347
        %v3462 = vpop.f32.mrb[0].mxu0
        %v3463 = vadd.f32 0.0, %v3462
        %v3464 = vpop.f32.mrb[0].mxu0
        %3465 = vmatprep.mubr.f32.mxu0 0.0
        %3466 = vmatmul.mubr.f32.gmra.mrb[0].mxu0 %v3348
        %v3467 = vpop.f32.mrb[0].mxu0
        %v3468 = vadd.f32 0.0, %v3467
        %v3469 = vpop.f32.mrb[0].mxu0
        %3470 = vmatprep.mubr.f32.mxu0 0.0
        %3471 = vmatmul.mubr.f32.gmra.mrb[0].mxu0 %v3349
        %v3472 = vpop.f32.mrb[0].mxu0
        %v3473 = vadd.f32 0.0, %v3472
        %v3474 = vpop.f32.mrb[0].mxu0
        %3475 = vmatprep.mubr.f32.mxu0 0.0
        %3476 = vmatmul.mubr.f32.gmra.mrb[0].mxu0 %v3350
        %v3477 = vpop.f32.mrb[0].mxu0
        %v3478 = vadd.f32 0.0, %v3477
        %v3479 = vpop.f32.mrb[0].mxu0
        %3480 = vmatprep.mubr.f32.mxu0 0.0
        %3481 = vmatmul.mubr.f32.gmra.mrb[0].mxu0 %v3351
        %v3482 = vpop.f32.mrb[0].mxu0
        %v3483 = vadd.f32 0.0, %v3482
        %v3484 = vpop.f32.mrb[0].mxu0
        %3485 = vmatprep.mubr.f32.mxu0 0.0
        %3486 = vmatmul.mubr.f32.gmra.mrb[0].mxu0 %v3352
        %v3487 = vpop.f32.mrb[0].mxu0
        %v3488 = vadd.f32 0.0, %v3487
        %v3489 = vpop.f32.mrb[0].mxu0
        %3490 = vmatprep.mubr.f32.mxu0 0.0
        %3491 = vmatmul.mubr.f32.gmra.mrb[0].mxu0 %v3353
        %v3492 = vpop.f32.mrb[0].mxu0
        %v3493 = vadd.f32 0.0, %v3492
        %v3494 = vpop.f32.mrb[0].mxu0
        %3495 = vmatprep.mubr.f32.mxu0 0.0
        %3496 = vmatmul.mubr.f32.gmra.mrb[0].mxu0 %v3354
        %v3497 = vpop.f32.mrb[0].mxu0
        %v3498 = vadd.f32 0.0, %v3497
        %v3499 = vpop.f32.mrb[0].mxu0
        %3500 = vmatprep.mubr.f32.mxu0 0.0
        %3501 = vmatmul.mubr.f32.gmra.mrb[0].mxu0 %v3355
        %v3502 = vpop.f32.mrb[0].mxu0
        %v3503 = vadd.f32 0.0, %v3502
        %v3504 = vpop.f32.mrb[0].mxu0
        %3505 = vmatprep.mubr.f32.mxu0 0.0
        %3506 = vmatmul.mubr.f32.gmra.mrb[0].mxu0 %v3356
        %v3507 = vpop.f32.mrb[0].mxu0
        %v3508 = vadd.f32 0.0, %v3507
        %v3509 = vpop.f32.mrb[0].mxu0
        %3510 = vmatprep.mubr.f32.mxu0 0.0
        %3511 = vmatmul.mubr.f32.gmra.mrb[0].mxu0 %v3357
        %v3512 = vpop.f32.mrb[0].mxu0
        %v3513 = vadd.f32 0.0, %v3512
        %v3514 = vpop.f32.mrb[0].mxu0
        %3515 = vmatprep.mubr.f32.mxu0 0.0
        %3516 = vmatmul.mubr.f32.gmra.mrb[0].mxu0 %v3358
        %v3517 = vpop.f32.mrb[0].mxu0
        %v3518 = vadd.f32 0.0, %v3517
        %v3519 = vpop.f32.mrb[0].mxu0
        %3520 = vmatprep.mubr.f32.mxu0 0.0
        %3521 = vmatmul.mubr.f32.gmra.mrb[0].mxu0 %v3359
        %v3522 = vpop.f32.mrb[0].mxu0
        %v3523 = vadd.f32 0.0, %v3522
        %v3524 = vpop.f32.mrb[0].mxu0
        %3525 = vmatprep.mubr.f32.mxu0 0.0
        %3526 = vmatmul.mubr.f32.gmra.mrb[0].mxu0 %v3360
        %v3527 = vpop.f32.mrb[0].mxu0
        %v3528 = vadd.f32 0.0, %v3527
        %v3529 = vpop.f32.mrb[0].mxu0
        %3530 = vmatprep.mubr.f32.mxu0 0.0
        %3531 = vmatmul.mubr.f32.gmra.mrb[0].mxu0 %v3361
        %v3532 = vpop.f32.mrb[0].mxu0
        %v3533 = vadd.f32 0.0, %v3532
        %v3534 = vpop.f32.mrb[0].mxu0
        %3535 = vmatprep.mubr.f32.mxu0 0.0
        %3536 = vmatmul.mubr.f32.gmra.mrb[0].mxu0 %v3362
        %v3537 = vpop.f32.mrb[0].mxu0
        %v3538 = vadd.f32 0.0, %v3537
        %v3539 = vpop.f32.mrb[0].mxu0
        %3540 = vmatprep.mubr.f32.mxu0 0.0
        %3541 = vmatmul.mubr.f32.gmra.mrb[0].mxu0 %v3363
        %v3542 = vpop.f32.mrb[0].mxu0
        %v3543 = vadd.f32 0.0, %v3542
        %v3544 = vpop.f32.mrb[0].mxu0
        %3545 = vmatprep.mubr.f32.mxu0 0.0
        %3546 = vmatmul.mubr.f32.gmra.mrb[0].mxu0 %v3364
        %v3547 = vpop.f32.mrb[0].mxu0
        %v3548 = vadd.f32 0.0, %v3547
        %v3549 = vpop.f32.mrb[0].mxu0
        %3550 = vmatprep.mubr.f32.mxu0 0.0
        %3551 = vmatmul.mubr.f32.gmra.mrb[0].mxu0 %v3365
        %v3552 = vpop.f32.mrb[0].mxu0
        %v3553 = vadd.f32 0.0, %v3552
        %v3554 = vpop.f32.mrb[0].mxu0
        %3555 = vmatprep.mubr.f32.mxu0 0.0
        %3556 = vmatmul.mubr.f32.gmra.mrb[0].mxu0 %v3366
        %v3557 = vpop.f32.mrb[0].mxu0
        %v3558 = vadd.f32 0.0, %v3557
        %v3559 = vpop.f32.mrb[0].mxu0
        %3560 = vmatprep.mubr.f32.mxu0 0.0
        %3561 = vmatmul.mubr.f32.gmra.mrb[0].mxu0 %v3367
        %v3562 = vpop.f32.mrb[0].mxu0
        %v3563 = vadd.f32 0.0, %v3562
        %v3564 = vpop.f32.mrb[0].mxu0
        %3565 = vmatprep.mubr.f32.mxu0 0.0
        %3566 = vmatmul.mubr.f32.gmra.mrb[0].mxu0 %v3368
        %v3567 = vpop.f32.mrb[0].mxu0
        %v3568 = vadd.f32 0.0, %v3567
        %v3569 = vpop.f32.mrb[0].mxu0
        %3570 = vmatprep.mubr.f32.mxu0 0.0
        %3571 = vmatmul.mubr.f32.gmra.mrb[0].mxu0 %v3369
        %v3572 = vpop.f32.mrb[0].mxu0
        %v3573 = vadd.f32 0.0, %v3572
        %v3574 = vpop.f32.mrb[0].mxu0
        %3575 = vmatprep.mubr.f32.mxu0 0.0
        %3576 = vmatmul.mubr.f32.gmra.mrb[0].mxu0 %v3370
        %v3577 = vpop.f32.mrb[0].mxu0
        %v3578 = vadd.f32 0.0, %v3577
        %v3579 = vpop.f32.mrb[0].mxu0
        %3580 = vmatprep.mubr.f32.mxu0 0.0
        %3581 = vmatmul.mubr.f32.gmra.mrb[0].mxu0 %v3371
        %v3582 = vpop.f32.mrb[0].mxu0
        %v3583 = vadd.f32 0.0, %v3582
        %v3584 = vpop.f32.mrb[0].mxu0
        %3585 = vmatprep.mubr.f32.mxu0 0.0
        %3586 = vmatmul.mubr.f32.gmra.mrb[0].mxu0 %v3372
        %v3587 = vpop.f32.mrb[0].mxu0
        %v3588 = vadd.f32 0.0, %v3587
        %v3589 = vpop.f32.mrb[0].mxu0
        %3590 = vmatprep.mubr.f32.mxu0 0.0
        %3591 = vmatmul.mubr.f32.gmra.mrb[0].mxu0 %v3373
        %v3592 = vpop.f32.mrb[0].mxu0
        %v3593 = vadd.f32 0.0, %v3592
        %v3594 = vpop.f32.mrb[0].mxu0
        %3595 = vmatprep.mubr.f32.mxu0 0.0
        %3596 = vmatmul.mubr.f32.gmra.mrb[0].mxu0 %v3374
        %v3597 = vpop.f32.mrb[0].mxu0
        %v3598 = vadd.f32 0.0, %v3597
        %v3599 = vpop.f32.mrb[0].mxu0
        %3600 = vmatprep.mubr.f32.mxu0 0.0
        %3601 = vmatmul.mubr.f32.gmra.mrb[0].mxu0 %v3375
        %v3602 = vpop.f32.mrb[0].mxu0
        %v3603 = vadd.f32 0.0, %v3602
        %v3604 = vpop.f32.mrb[0].mxu0
        %3605 = vmatprep.mubr.f32.mxu0 0.0
        %3606 = vmatmul.mubr.f32.gmra.mrb[0].mxu0 %v3376
        %v3607 = vpop.f32.mrb[0].mxu0
        %v3608 = vadd.f32 0.0, %v3607
        %v3609 = vpop.f32.mrb[0].mxu0
        %3610 = vmatprep.mubr.f32.mxu0 0.0
        %3611 = vmatmul.mubr.f32.gmra.mrb[0].mxu0 %v3377
        %v3612 = vpop.f32.mrb[0].mxu0
        %v3613 = vadd.f32 0.0, %v3612
        %v3614 = vpop.f32.mrb[0].mxu0
        %3615 = vmatprep.mubr.f32.mxu0 0.0
        %3616 = vmatmul.mubr.f32.gmra.mrb[0].mxu0 %v3378
        %v3617 = vpop.f32.mrb[0].mxu0
        %v3618 = vadd.f32 0.0, %v3617
        %v3619 = vpop.f32.mrb[0].mxu0
        %3620 = vdwg.mxu0
        %v3621 = vlaneseq
        %v3622 = vshrl.u32 %v3621, 7
        %v3623 = vsub.s32 6, %v3622
        %v3624 = vrot.slane %v577, %v3623
        %v3625 = vmul.f32 %v3463, %v3624
        %v3626 = vmul.f32 %v3468, %v3624
        %v3627 = vmul.f32 %v3473, %v3624
        %v3628 = vmul.f32 %v3478, %v3624
        %v3629 = vmul.f32 %v3483, %v3624
        %v3630 = vmul.f32 %v3488, %v3624
        %v3631 = vmul.f32 %v3493, %v3624
        %v3632 = vmul.f32 %v3498, %v3624
        %v3633 = vmul.f32 %v3503, %v3624
        %v3634 = vmul.f32 %v3508, %v3624
        %v3635 = vmul.f32 %v3513, %v3624
        %v3636 = vmul.f32 %v3518, %v3624
        %v3637 = vmul.f32 %v3523, %v3624
        %v3638 = vmul.f32 %v3528, %v3624
        %v3639 = vmul.f32 %v3533, %v3624
        %v3640 = vmul.f32 %v3538, %v3624
        %v3641 = vmul.f32 %v3543, %v3624
        %v3642 = vmul.f32 %v3548, %v3624
        %v3643 = vmul.f32 %v3553, %v3624
        %v3644 = vmul.f32 %v3558, %v3624
        %v3645 = vmul.f32 %v3563, %v3624
        %v3646 = vmul.f32 %v3568, %v3624
        %v3647 = vmul.f32 %v3573, %v3624
        %v3648 = vmul.f32 %v3578, %v3624
        %v3649 = vmul.f32 %v3583, %v3624
        %v3650 = vmul.f32 %v3588, %v3624
        %v3651 = vmul.f32 %v3593, %v3624
        %v3652 = vmul.f32 %v3598, %v3624
        %v3653 = vmul.f32 %v3603, %v3624
        %v3654 = vmul.f32 %v3608, %v3624
        %v3655 = vmul.f32 %v3613, %v3624
        %v3656 = vmul.f32 %v3618, %v3624
        %v3657 = vlaneseq
        %v3658 = vshrl.u32 %v3657, 7
        %v3659 = vsub.s32 7, %v3658
        %v3660 = vrot.slane %v577, %v3659
        %v3661 = vadd.f32 %v3625, %v3660
        %v3662 = vadd.f32 %v3626, %v3660
        %v3663 = vadd.f32 %v3627, %v3660
        %v3664 = vadd.f32 %v3628, %v3660
        %v3665 = vadd.f32 %v3629, %v3660
        %v3666 = vadd.f32 %v3630, %v3660
        %v3667 = vadd.f32 %v3631, %v3660
        %v3668 = vadd.f32 %v3632, %v3660
        %v3669 = vadd.f32 %v3633, %v3660
        %v3670 = vadd.f32 %v3634, %v3660
        %v3671 = vadd.f32 %v3635, %v3660
        %v3672 = vadd.f32 %v3636, %v3660
        %v3673 = vadd.f32 %v3637, %v3660
        %v3674 = vadd.f32 %v3638, %v3660
        %v3675 = vadd.f32 %v3639, %v3660
        %v3676 = vadd.f32 %v3640, %v3660
        %v3677 = vadd.f32 %v3641, %v3660
        %v3678 = vadd.f32 %v3642, %v3660
        %v3679 = vadd.f32 %v3643, %v3660
        %v3680 = vadd.f32 %v3644, %v3660
        %v3681 = vadd.f32 %v3645, %v3660
        %v3682 = vadd.f32 %v3646, %v3660
        %v3683 = vadd.f32 %v3647, %v3660
        %v3684 = vadd.f32 %v3648, %v3660
        %v3685 = vadd.f32 %v3649, %v3660
        %v3686 = vadd.f32 %v3650, %v3660
        %v3687 = vadd.f32 %v3651, %v3660
        %v3688 = vadd.f32 %v3652, %v3660
        %v3689 = vadd.f32 %v3653, %v3660
        %v3690 = vadd.f32 %v3654, %v3660
        %v3691 = vadd.f32 %v3655, %v3660
        %v3692 = vadd.f32 %v3656, %v3660
        %v3693 = vmax.f32 %v3661, 0.0
        %v3694 = vmax.f32 %v3662, 0.0
        %v3695 = vmax.f32 %v3663, 0.0
        %v3696 = vmax.f32 %v3664, 0.0
        %v3697 = vmax.f32 %v3665, 0.0
        %v3698 = vmax.f32 %v3666, 0.0
        %v3699 = vmax.f32 %v3667, 0.0
        %v3700 = vmax.f32 %v3668, 0.0
        %v3701 = vmax.f32 %v3669, 0.0
        %v3702 = vmax.f32 %v3670, 0.0
        %v3703 = vmax.f32 %v3671, 0.0
        %v3704 = vmax.f32 %v3672, 0.0
        %v3705 = vmax.f32 %v3673, 0.0
        %v3706 = vmax.f32 %v3674, 0.0
        %v3707 = vmax.f32 %v3675, 0.0
        %v3708 = vmax.f32 %v3676, 0.0
        %v3709 = vmax.f32 %v3677, 0.0
        %v3710 = vmax.f32 %v3678, 0.0
        %v3711 = vmax.f32 %v3679, 0.0
        %v3712 = vmax.f32 %v3680, 0.0
        %v3713 = vmax.f32 %v3681, 0.0
        %v3714 = vmax.f32 %v3682, 0.0
        %v3715 = vmax.f32 %v3683, 0.0
        %v3716 = vmax.f32 %v3684, 0.0
        %v3717 = vmax.f32 %v3685, 0.0
        %v3718 = vmax.f32 %v3686, 0.0
        %v3719 = vmax.f32 %v3687, 0.0
        %v3720 = vmax.f32 %v3688, 0.0
        %v3721 = vmax.f32 %v3689, 0.0
        %v3722 = vmax.f32 %v3690, 0.0
        %v3723 = vmax.f32 %v3691, 0.0
        %v3724 = vmax.f32 %v3692, 0.0
        %v3725 = vadd.f32 %v1575, %v3693
        %v3726 = vadd.f32 %v1576, %v3694
        %v3727 = vadd.f32 %v1577, %v3695
        %v3728 = vadd.f32 %v1578, %v3696
        %v3729 = vadd.f32 %v1579, %v3697
        %v3730 = vadd.f32 %v1580, %v3698
        %v3731 = vadd.f32 %v1581, %v3699
        %v3732 = vadd.f32 %v1582, %v3700
        %v3733 = vadd.f32 %v1583, %v3701
        %v3734 = vadd.f32 %v1584, %v3702
        %v3735 = vadd.f32 %v1585, %v3703
        %v3736 = vadd.f32 %v1586, %v3704
        %v3737 = vadd.f32 %v1587, %v3705
        %v3738 = vadd.f32 %v1588, %v3706
        %v3739 = vadd.f32 %v1589, %v3707
        %v3740 = vadd.f32 %v1590, %v3708
        %v3741 = vadd.f32 %v1591, %v3709
        %v3742 = vadd.f32 %v1592, %v3710
        %v3743 = vadd.f32 %v1593, %v3711
        %v3744 = vadd.f32 %v1594, %v3712
        %v3745 = vadd.f32 %v1595, %v3713
        %v3746 = vadd.f32 %v1596, %v3714
        %v3747 = vadd.f32 %v1597, %v3715
        %v3748 = vadd.f32 %v1598, %v3716
        %v3749 = vadd.f32 %v1599, %v3717
        %v3750 = vadd.f32 %v1600, %v3718
        %v3751 = vadd.f32 %v1601, %v3719
        %v3752 = vadd.f32 %v1602, %v3720
        %v3753 = vadd.f32 %v1603, %v3721
        %v3754 = vadd.f32 %v1604, %v3722
        %v3755 = vadd.f32 %v1605, %v3723
        %v3756 = vadd.f32 %v1606, %v3724
        %v3757 = vmul.f32 %v3725, 0.25
        %v3758 = vmul.f32 %v3726, 0.25
        %v3759 = vmul.f32 %v3727, 0.25
        %v3760 = vmul.f32 %v3728, 0.25
        %v3761 = vmul.f32 %v3729, 0.25
        %v3762 = vmul.f32 %v3730, 0.25
        %v3763 = vmul.f32 %v3731, 0.25
        %v3764 = vmul.f32 %v3732, 0.25
        %v3765 = vmul.f32 %v3733, 0.25
        %v3766 = vmul.f32 %v3734, 0.25
        %v3767 = vmul.f32 %v3735, 0.25
        %v3768 = vmul.f32 %v3736, 0.25
        %v3769 = vmul.f32 %v3737, 0.25
        %v3770 = vmul.f32 %v3738, 0.25
        %v3771 = vmul.f32 %v3739, 0.25
        %v3772 = vmul.f32 %v3740, 0.25
        %v3773 = vmul.f32 %v3741, 0.25
        %v3774 = vmul.f32 %v3742, 0.25
        %v3775 = vmul.f32 %v3743, 0.25
        %v3776 = vmul.f32 %v3744, 0.25
        %v3777 = vmul.f32 %v3745, 0.25
        %v3778 = vmul.f32 %v3746, 0.25
        %v3779 = vmul.f32 %v3747, 0.25
        %v3780 = vmul.f32 %v3748, 0.25
        %v3781 = vmul.f32 %v3749, 0.25
        %v3782 = vmul.f32 %v3750, 0.25
        %v3783 = vmul.f32 %v3751, 0.25
        %v3784 = vmul.f32 %v3752, 0.25
        %v3785 = vmul.f32 %v3753, 0.25
        %v3786 = vmul.f32 %v3754, 0.25
        %v3787 = vmul.f32 %v3725, 0.75
        %v3788 = vmul.f32 %v3726, 0.75
        %v3789 = vmul.f32 %v3727, 0.75
        %v3790 = vmul.f32 %v3728, 0.75
        %v3791 = vmul.f32 %v3729, 0.75
        %v3792 = vmul.f32 %v3730, 0.75
        %v3793 = vmul.f32 %v3731, 0.75
        %v3794 = vmul.f32 %v3732, 0.75
        %v3795 = vmul.f32 %v3733, 0.75
        %v3796 = vmul.f32 %v3734, 0.75
        %v3797 = vmul.f32 %v3735, 0.75
        %v3798 = vmul.f32 %v3736, 0.75
        %v3799 = vmul.f32 %v3737, 0.75
        %v3800 = vmul.f32 %v3738, 0.75
        %v3801 = vmul.f32 %v3739, 0.75
        %v3802 = vmul.f32 %v3740, 0.75
        %v3803 = vmul.f32 %v3741, 0.75
        %v3804 = vmul.f32 %v3742, 0.75
        %v3805 = vmul.f32 %v3743, 0.75
        %v3806 = vmul.f32 %v3744, 0.75
        %v3807 = vmul.f32 %v3745, 0.75
        %v3808 = vmul.f32 %v3746, 0.75
        %v3809 = vmul.f32 %v3747, 0.75
        %v3810 = vmul.f32 %v3748, 0.75
        %v3811 = vmul.f32 %v3749, 0.75
        %v3812 = vmul.f32 %v3750, 0.75
        %v3813 = vmul.f32 %v3751, 0.75
        %v3814 = vmul.f32 %v3752, 0.75
        %v3815 = vmul.f32 %v3753, 0.75
        %v3816 = vmul.f32 %v3754, 0.75
        %v3817 = vmul.f32 %v3755, 0.75
        %v3818 = vmul.f32 %v3756, 0.75
        %v3819 = vadd.f32 %v3757, %v3787
        %v3820 = vadd.f32 %v3758, %v3788
        %v3821 = vadd.f32 %v3757, %v3789
        %v3822 = vadd.f32 %v3758, %v3790
        %v3823 = vadd.f32 %v3759, %v3791
        %v3824 = vadd.f32 %v3760, %v3792
        %v3825 = vadd.f32 %v3761, %v3793
        %v3826 = vadd.f32 %v3762, %v3794
        %v3827 = vadd.f32 %v3763, %v3795
        %v3828 = vadd.f32 %v3764, %v3796
        %v3829 = vadd.f32 %v3765, %v3797
        %v3830 = vadd.f32 %v3766, %v3798
        %v3831 = vadd.f32 %v3767, %v3799
        %v3832 = vadd.f32 %v3768, %v3800
        %v3833 = vadd.f32 %v3769, %v3801
        %v3834 = vadd.f32 %v3770, %v3802
        %v3835 = vadd.f32 %v3771, %v3803
        %v3836 = vadd.f32 %v3772, %v3804
        %v3837 = vadd.f32 %v3773, %v3805
        %v3838 = vadd.f32 %v3774, %v3806
        %v3839 = vadd.f32 %v3775, %v3807
        %v3840 = vadd.f32 %v3776, %v3808
        %v3841 = vadd.f32 %v3777, %v3809
        %v3842 = vadd.f32 %v3778, %v3810
        %v3843 = vadd.f32 %v3779, %v3811
        %v3844 = vadd.f32 %v3780, %v3812
        %v3845 = vadd.f32 %v3781, %v3813
        %v3846 = vadd.f32 %v3782, %v3814
        %v3847 = vadd.f32 %v3783, %v3815
        %v3848 = vadd.f32 %v3784, %v3816
        %v3849 = vadd.f32 %v3785, %v3817
        %v3850 = vadd.f32 %v3786, %v3818
        %v3851 = vmul.f32 %v3755, 0.25
        %v3852 = vmul.f32 %v3756, 0.25
        %v3853 = vadd.f32 %v3787, %v3759
        %v3854 = vadd.f32 %v3788, %v3760
        %v3855 = vadd.f32 %v3789, %v3761
        %v3856 = vadd.f32 %v3790, %v3762
        %v3857 = vadd.f32 %v3791, %v3763
        %v3858 = vadd.f32 %v3792, %v3764
        %v3859 = vadd.f32 %v3793, %v3765
        %v3860 = vadd.f32 %v3794, %v3766
        %v3861 = vadd.f32 %v3795, %v3767
        %v3862 = vadd.f32 %v3796, %v3768
        %v3863 = vadd.f32 %v3797, %v3769
        %v3864 = vadd.f32 %v3798, %v3770
        %v3865 = vadd.f32 %v3799, %v3771
        %v3866 = vadd.f32 %v3800, %v3772
        %v3867 = vadd.f32 %v3801, %v3773
        %v3868 = vadd.f32 %v3802, %v3774
        %v3869 = vadd.f32 %v3803, %v3775
        %v3870 = vadd.f32 %v3804, %v3776
        %v3871 = vadd.f32 %v3805, %v3777
        %v3872 = vadd.f32 %v3806, %v3778
        %v3873 = vadd.f32 %v3807, %v3779
        %v3874 = vadd.f32 %v3808, %v3780
        %v3875 = vadd.f32 %v3809, %v3781
        %v3876 = vadd.f32 %v3810, %v3782
        %v3877 = vadd.f32 %v3811, %v3783
        %v3878 = vadd.f32 %v3812, %v3784
        %v3879 = vadd.f32 %v3813, %v3785
        %v3880 = vadd.f32 %v3814, %v3786
        %v3881 = vadd.f32 %v3815, %v3851
        %v3882 = vadd.f32 %v3816, %v3852
        %v3883 = vadd.f32 %v3817, %v3851
        %v3884 = vadd.f32 %v3818, %v3852
        %3885 = vst [vmem:[#allocation3 + $0x1] sm:$0xff] %v3819
        %3886 = vst [vmem:[#allocation3 + $0x9] sm:$0xff] %v3820
        %3887 = vst [vmem:[#allocation3 + $0x19] sm:$0xff] %v3821
        %3888 = vst [vmem:[#allocation3 + $0x21] sm:$0xff] %v3822
        %3889 = vst [vmem:[#allocation3 + $0x31] sm:$0xff] %v3823
        %3890 = vst [vmem:[#allocation3 + $0x39] sm:$0xff] %v3824
        %3891 = vst [vmem:[#allocation3 + $0x49] sm:$0xff] %v3825
        %3892 = vst [vmem:[#allocation3 + $0x51] sm:$0xff] %v3826
        %3893 = vst [vmem:[#allocation3 + $0x61] sm:$0xff] %v3827
        %3894 = vst [vmem:[#allocation3 + $0x69] sm:$0xff] %v3828
        %3895 = vst [vmem:[#allocation3 + $0x79] sm:$0xff] %v3829
        %3896 = vst [vmem:[#allocation3 + $0x81] sm:$0xff] %v3830
        %3897 = vst [vmem:[#allocation3 + $0x91] sm:$0xff] %v3831
        %3898 = vst [vmem:[#allocation3 + $0x99] sm:$0xff] %v3832
        %3899 = vst [vmem:[#allocation3 + $0xa9] sm:$0xff] %v3833
        %3900 = vst [vmem:[#allocation3 + $0xb1] sm:$0xff] %v3834
        %3901 = vst [vmem:[#allocation3 + $0xc1] sm:$0xff] %v3835
        %3902 = vst [vmem:[#allocation3 + $0xc9] sm:$0xff] %v3836
        %3903 = vst [vmem:[#allocation3 + $0xd9] sm:$0xff] %v3837
        %3904 = vst [vmem:[#allocation3 + $0xe1] sm:$0xff] %v3838
        %3905 = vst [vmem:[#allocation3 + $0xf1] sm:$0xff] %v3839
        %3906 = vst [vmem:[#allocation3 + $0xf9] sm:$0xff] %v3840
        %3907 = vst [vmem:[#allocation3 + $0x109] sm:$0xff] %v3841
        %3908 = vst [vmem:[#allocation3 + $0x111] sm:$0xff] %v3842
        %3909 = vst [vmem:[#allocation3 + $0x121] sm:$0xff] %v3843
        %3910 = vst [vmem:[#allocation3 + $0x129] sm:$0xff] %v3844
        %3911 = vst [vmem:[#allocation3 + $0x139] sm:$0xff] %v3845
        %3912 = vst [vmem:[#allocation3 + $0x141] sm:$0xff] %v3846
        %3913 = vst [vmem:[#allocation3 + $0x151] sm:$0xff] %v3847
        %3914 = vst [vmem:[#allocation3 + $0x159] sm:$0xff] %v3848
        %3915 = vst [vmem:[#allocation3 + $0x169] sm:$0xff] %v3849
        %3916 = vst [vmem:[#allocation3 + $0x171] sm:$0xff] %v3850
        %3917 = vst [vmem:[#allocation3] sm:$0x1] %v3819
        %3918 = vst [vmem:[#allocation3 + $0x18] sm:$0x1] %v3821
        %3919 = vst [vmem:[#allocation3 + $0x30] sm:$0x1] %v3823
        %3920 = vst [vmem:[#allocation3 + $0x48] sm:$0x1] %v3825
        %3921 = vst [vmem:[#allocation3 + $0x60] sm:$0x1] %v3827
        %3922 = vst [vmem:[#allocation3 + $0x78] sm:$0x1] %v3829
        %3923 = vst [vmem:[#allocation3 + $0x90] sm:$0x1] %v3831
        %3924 = vst [vmem:[#allocation3 + $0xa8] sm:$0x1] %v3833
        %3925 = vst [vmem:[#allocation3 + $0xc0] sm:$0x1] %v3835
        %3926 = vst [vmem:[#allocation3 + $0xd8] sm:$0x1] %v3837
        %3927 = vst [vmem:[#allocation3 + $0xf0] sm:$0x1] %v3839
        %3928 = vst [vmem:[#allocation3 + $0x108] sm:$0x1] %v3841
        %3929 = vst [vmem:[#allocation3 + $0x120] sm:$0x1] %v3843
        %3930 = vst [vmem:[#allocation3 + $0x138] sm:$0x1] %v3845
        %3931 = vst [vmem:[#allocation3 + $0x150] sm:$0x1] %v3847
        %3932 = vst [vmem:[#allocation3 + $0x168] sm:$0x1] %v3849
        %3933 = vst [vmem:[#allocation3 + $0xa] sm:$0x80] %v3820
        %3934 = vst [vmem:[#allocation3 + $0x22] sm:$0x80] %v3822
        %3935 = vst [vmem:[#allocation3 + $0x3a] sm:$0x80] %v3824
        %3936 = vst [vmem:[#allocation3 + $0x52] sm:$0x80] %v3826
        %3937 = vst [vmem:[#allocation3 + $0x6a] sm:$0x80] %v3828
        %3938 = vst [vmem:[#allocation3 + $0x82] sm:$0x80] %v3830
        %3939 = vst [vmem:[#allocation3 + $0x9a] sm:$0x80] %v3832
        %3940 = vst [vmem:[#allocation3 + $0xb2] sm:$0x80] %v3834
        %3941 = vst [vmem:[#allocation3 + $0xca] sm:$0x80] %v3836
        %3942 = vst [vmem:[#allocation3 + $0xe2] sm:$0x80] %v3838
        %3943 = vst [vmem:[#allocation3 + $0xfa] sm:$0x80] %v3840
        %3944 = vst [vmem:[#allocation3 + $0x112] sm:$0x80] %v3842
        %3945 = vst [vmem:[#allocation3 + $0x12a] sm:$0x80] %v3844
        %3946 = vst [vmem:[#allocation3 + $0x142] sm:$0x80] %v3846
        %3947 = vst [vmem:[#allocation3 + $0x15a] sm:$0x80] %v3848
        %3948 = vst [vmem:[#allocation3 + $0x172] sm:$0x80] %v3850
        %v3949 = vld [vmem:[#allocation3] sm:$0xff]
        %v3950 = vld [vmem:[#allocation3 + $0x8] sm:$0xff]
        %v3951 = vld [vmem:[#allocation3 + $0x18] sm:$0xff]
        %v3952 = vld [vmem:[#allocation3 + $0x20] sm:$0xff]
        %v3953 = vld [vmem:[#allocation3 + $0x30] sm:$0xff]
        %v3954 = vld [vmem:[#allocation3 + $0x38] sm:$0xff]
        %v3955 = vld [vmem:[#allocation3 + $0x48] sm:$0xff]
        %v3956 = vld [vmem:[#allocation3 + $0x50] sm:$0xff]
        %v3957 = vld [vmem:[#allocation3 + $0x60] sm:$0xff]
        %v3958 = vld [vmem:[#allocation3 + $0x68] sm:$0xff]
        %v3959 = vld [vmem:[#allocation3 + $0x78] sm:$0xff]
        %v3960 = vld [vmem:[#allocation3 + $0x80] sm:$0xff]
        %v3961 = vld [vmem:[#allocation3 + $0x90] sm:$0xff]
        %v3962 = vld [vmem:[#allocation3 + $0x98] sm:$0xff]
        %v3963 = vld [vmem:[#allocation3 + $0xa8] sm:$0xff]
        %v3964 = vld [vmem:[#allocation3 + $0xb0] sm:$0xff]
        %v3965 = vld [vmem:[#allocation3 + $0xc0] sm:$0xff]
        %v3966 = vld [vmem:[#allocation3 + $0xc8] sm:$0xff]
        %v3967 = vld [vmem:[#allocation3 + $0xd8] sm:$0xff]
        %v3968 = vld [vmem:[#allocation3 + $0xe0] sm:$0xff]
        %v3969 = vld [vmem:[#allocation3 + $0xf0] sm:$0xff]
        %v3970 = vld [vmem:[#allocation3 + $0xf8] sm:$0xff]
        %v3971 = vld [vmem:[#allocation3 + $0x108] sm:$0xff]
        %v3972 = vld [vmem:[#allocation3 + $0x110] sm:$0xff]
        %v3973 = vld [vmem:[#allocation3 + $0x120] sm:$0xff]
        %v3974 = vld [vmem:[#allocation3 + $0x128] sm:$0xff]
        %v3975 = vld [vmem:[#allocation3 + $0x138] sm:$0xff]
        %v3976 = vld [vmem:[#allocation3 + $0x140] sm:$0xff]
        %v3977 = vld [vmem:[#allocation3 + $0x150] sm:$0xff]
        %v3978 = vld [vmem:[#allocation3 + $0x158] sm:$0xff]
        %v3979 = vld [vmem:[#allocation3 + $0x168] sm:$0xff]
        %v3980 = vld [vmem:[#allocation3 + $0x170] sm:$0xff]
        %v3981 = vld [vmem:[#allocation3 + $0x2] sm:$0xff]
        %v3982 = vld [vmem:[#allocation3 + $0xa] sm:$0xff]
        %v3983 = vld [vmem:[#allocation3 + $0x1a] sm:$0xff]
        %v3984 = vld [vmem:[#allocation3 + $0x22] sm:$0xff]
        %v3985 = vld [vmem:[#allocation3 + $0x32] sm:$0xff]
        %v3986 = vld [vmem:[#allocation3 + $0x3a] sm:$0xff]
        %v3987 = vld [vmem:[#allocation3 + $0x4a] sm:$0xff]
        %v3988 = vld [vmem:[#allocation3 + $0x52] sm:$0xff]
        %v3989 = vld [vmem:[#allocation3 + $0x62] sm:$0xff]
        %v3990 = vld [vmem:[#allocation3 + $0x6a] sm:$0xff]
        %v3991 = vld [vmem:[#allocation3 + $0x7a] sm:$0xff]
        %v3992 = vld [vmem:[#allocation3 + $0x82] sm:$0xff]
        %v3993 = vld [vmem:[#allocation3 + $0x92] sm:$0xff]
        %v3994 = vld [vmem:[#allocation3 + $0x9a] sm:$0xff]
        %v3995 = vld [vmem:[#allocation3 + $0xaa] sm:$0xff]
        %v3996 = vld [vmem:[#allocation3 + $0xb2] sm:$0xff]
        %v3997 = vld [vmem:[#allocation3 + $0xc2] sm:$0xff]
        %v3998 = vld [vmem:[#allocation3 + $0xca] sm:$0xff]
        %v3999 = vld [vmem:[#allocation3 + $0xda] sm:$0xff]
        %v4000 = vld [vmem:[#allocation3 + $0xe2] sm:$0xff]
        %v4001 = vld [vmem:[#allocation3 + $0xf2] sm:$0xff]
        %v4002 = vld [vmem:[#allocation3 + $0xfa] sm:$0xff]
        %v4003 = vld [vmem:[#allocation3 + $0x10a] sm:$0xff]
        %v4004 = vld [vmem:[#allocation3 + $0x112] sm:$0xff]
        %v4005 = vld [vmem:[#allocation3 + $0x122] sm:$0xff]
        %v4006 = vld [vmem:[#allocation3 + $0x12a] sm:$0xff]
        %v4007 = vld [vmem:[#allocation3 + $0x13a] sm:$0xff]
        %v4008 = vld [vmem:[#allocation3 + $0x142] sm:$0xff]
        %v4009 = vld [vmem:[#allocation3 + $0x152] sm:$0xff]
        %v4010 = vld [vmem:[#allocation3 + $0x15a] sm:$0xff]
        %v4011 = vld [vmem:[#allocation3 + $0x16a] sm:$0xff]
        %v4012 = vld [vmem:[#allocation3 + $0x172] sm:$0xff]
        %v4013 = vmul.f32 %v3949, 0.25
        %v4014 = vmul.f32 %v3950, 0.25
        %v4015 = vmul.f32 %v3951, 0.25
        %v4016 = vmul.f32 %v3952, 0.25
        %v4017 = vmul.f32 %v3953, 0.25
        %v4018 = vmul.f32 %v3954, 0.25
        %v4019 = vmul.f32 %v3955, 0.25
        %v4020 = vmul.f32 %v3956, 0.25
        %v4021 = vmul.f32 %v3957, 0.25
        %v4022 = vmul.f32 %v3958, 0.25
        %v4023 = vmul.f32 %v3959, 0.25
        %v4024 = vmul.f32 %v3960, 0.25
        %v4025 = vmul.f32 %v3961, 0.25
        %v4026 = vmul.f32 %v3962, 0.25
        %v4027 = vmul.f32 %v3963, 0.25
        %v4028 = vmul.f32 %v3964, 0.25
        %v4029 = vmul.f32 %v3965, 0.25
        %v4030 = vmul.f32 %v3966, 0.25
        %v4031 = vmul.f32 %v3967, 0.25
        %v4032 = vmul.f32 %v3968, 0.25
        %v4033 = vmul.f32 %v3969, 0.25
        %v4034 = vmul.f32 %v3970, 0.25
        %v4035 = vmul.f32 %v3971, 0.25
        %v4036 = vmul.f32 %v3972, 0.25
        %v4037 = vmul.f32 %v3973, 0.25
        %v4038 = vmul.f32 %v3974, 0.25
        %v4039 = vmul.f32 %v3975, 0.25
        %v4040 = vmul.f32 %v3976, 0.25
        %v4041 = vmul.f32 %v3977, 0.25
        %v4042 = vmul.f32 %v3978, 0.25
        %v4043 = vmul.f32 %v3979, 0.25
        %v4044 = vmul.f32 %v3980, 0.25
        %v4045 = vmul.f32 %v3819, 0.75
        %v4046 = vmul.f32 %v3820, 0.75
        %v4047 = vmul.f32 %v3821, 0.75
        %v4048 = vmul.f32 %v3822, 0.75
        %v4049 = vmul.f32 %v3823, 0.75
        %v4050 = vmul.f32 %v3824, 0.75
        %v4051 = vmul.f32 %v3825, 0.75
        %v4052 = vmul.f32 %v3826, 0.75
        %v4053 = vmul.f32 %v3827, 0.75
        %v4054 = vmul.f32 %v3828, 0.75
        %v4055 = vmul.f32 %v3829, 0.75
        %v4056 = vmul.f32 %v3830, 0.75
        %v4057 = vmul.f32 %v3831, 0.75
        %v4058 = vmul.f32 %v3832, 0.75
        %v4059 = vmul.f32 %v3833, 0.75
        %v4060 = vmul.f32 %v3834, 0.75
        %v4061 = vmul.f32 %v3835, 0.75
        %v4062 = vmul.f32 %v3836, 0.75
        %v4063 = vmul.f32 %v3837, 0.75
        %v4064 = vmul.f32 %v3838, 0.75
        %v4065 = vmul.f32 %v3839, 0.75
        %v4066 = vmul.f32 %v3840, 0.75
        %v4067 = vmul.f32 %v3841, 0.75
        %v4068 = vmul.f32 %v3842, 0.75
        %v4069 = vmul.f32 %v3843, 0.75
        %v4070 = vmul.f32 %v3844, 0.75
        %v4071 = vmul.f32 %v3845, 0.75
        %v4072 = vmul.f32 %v3846, 0.75
        %v4073 = vmul.f32 %v3847, 0.75
        %v4074 = vmul.f32 %v3848, 0.75
        %v4075 = vmul.f32 %v3849, 0.75
        %v4076 = vmul.f32 %v3850, 0.75
        %v4077 = vadd.f32 %v4013, %v4045
        %v4078 = vadd.f32 %v4014, %v4046
        %v4079 = vadd.f32 %v4015, %v4047
        %v4080 = vadd.f32 %v4016, %v4048
        %v4081 = vadd.f32 %v4017, %v4049
        %v4082 = vadd.f32 %v4018, %v4050
        %v4083 = vadd.f32 %v4019, %v4051
        %v4084 = vadd.f32 %v4020, %v4052
        %v4085 = vadd.f32 %v4021, %v4053
        %v4086 = vadd.f32 %v4022, %v4054
        %v4087 = vadd.f32 %v4023, %v4055
        %v4088 = vadd.f32 %v4024, %v4056
        %v4089 = vadd.f32 %v4025, %v4057
        %v4090 = vadd.f32 %v4026, %v4058
        %v4091 = vadd.f32 %v4027, %v4059
        %v4092 = vadd.f32 %v4028, %v4060
        %v4093 = vadd.f32 %v4029, %v4061
        %v4094 = vadd.f32 %v4030, %v4062
        %v4095 = vadd.f32 %v4031, %v4063
        %v4096 = vadd.f32 %v4032, %v4064
        %v4097 = vadd.f32 %v4033, %v4065
        %v4098 = vadd.f32 %v4034, %v4066
        %v4099 = vadd.f32 %v4035, %v4067
        %v4100 = vadd.f32 %v4036, %v4068
        %v4101 = vadd.f32 %v4037, %v4069
        %v4102 = vadd.f32 %v4038, %v4070
        %v4103 = vadd.f32 %v4039, %v4071
        %v4104 = vadd.f32 %v4040, %v4072
        %v4105 = vadd.f32 %v4041, %v4073
        %v4106 = vadd.f32 %v4042, %v4074
        %v4107 = vadd.f32 %v4043, %v4075
        %v4108 = vadd.f32 %v4044, %v4076
        %v4109 = vmul.f32 %v3981, 0.25
        %v4110 = vmul.f32 %v3982, 0.25
        %v4111 = vmul.f32 %v3983, 0.25
        %v4112 = vmul.f32 %v3984, 0.25
        %v4113 = vmul.f32 %v3985, 0.25
        %v4114 = vmul.f32 %v3986, 0.25
        %v4115 = vmul.f32 %v3987, 0.25
        %v4116 = vmul.f32 %v3988, 0.25
        %v4117 = vmul.f32 %v3989, 0.25
        %v4118 = vmul.f32 %v3990, 0.25
        %v4119 = vmul.f32 %v3991, 0.25
        %v4120 = vmul.f32 %v3992, 0.25
        %v4121 = vmul.f32 %v3993, 0.25
        %v4122 = vmul.f32 %v3994, 0.25
        %v4123 = vmul.f32 %v3995, 0.25
        %v4124 = vmul.f32 %v3996, 0.25
        %v4125 = vmul.f32 %v3997, 0.25
        %v4126 = vmul.f32 %v3998, 0.25
        %v4127 = vmul.f32 %v3999, 0.25
        %v4128 = vmul.f32 %v4000, 0.25
        %v4129 = vmul.f32 %v4001, 0.25
        %v4130 = vmul.f32 %v4002, 0.25
        %v4131 = vmul.f32 %v4003, 0.25
        %v4132 = vmul.f32 %v4004, 0.25
        %v4133 = vmul.f32 %v4005, 0.25
        %v4134 = vmul.f32 %v4006, 0.25
        %v4135 = vmul.f32 %v4007, 0.25
        %v4136 = vmul.f32 %v4008, 0.25
        %v4137 = vmul.f32 %v4009, 0.25
        %v4138 = vmul.f32 %v4010, 0.25
        %v4139 = vmul.f32 %v4011, 0.25
        %v4140 = vmul.f32 %v4012, 0.25
        %v4141 = vadd.f32 %v4045, %v4109
        %v4142 = vadd.f32 %v4046, %v4110
        %v4143 = vadd.f32 %v4047, %v4111
        %v4144 = vadd.f32 %v4048, %v4112
        %v4145 = vadd.f32 %v4049, %v4113
        %v4146 = vadd.f32 %v4050, %v4114
        %v4147 = vadd.f32 %v4051, %v4115
        %v4148 = vadd.f32 %v4052, %v4116
        %v4149 = vadd.f32 %v4053, %v4117
        %v4150 = vadd.f32 %v4054, %v4118
        %v4151 = vadd.f32 %v4055, %v4119
        %v4152 = vadd.f32 %v4056, %v4120
        %v4153 = vadd.f32 %v4057, %v4121
        %v4154 = vadd.f32 %v4058, %v4122
        %v4155 = vadd.f32 %v4059, %v4123
        %v4156 = vadd.f32 %v4060, %v4124
        %v4157 = vadd.f32 %v4061, %v4125
        %v4158 = vadd.f32 %v4062, %v4126
        %v4159 = vadd.f32 %v4063, %v4127
        %v4160 = vadd.f32 %v4064, %v4128
        %v4161 = vadd.f32 %v4065, %v4129
        %v4162 = vadd.f32 %v4066, %v4130
        %v4163 = vadd.f32 %v4067, %v4131
        %v4164 = vadd.f32 %v4068, %v4132
        %v4165 = vadd.f32 %v4069, %v4133
        %v4166 = vadd.f32 %v4070, %v4134
        %v4167 = vadd.f32 %v4071, %v4135
        %v4168 = vadd.f32 %v4072, %v4136
        %v4169 = vadd.f32 %v4073, %v4137
        %v4170 = vadd.f32 %v4074, %v4138
        %v4171 = vadd.f32 %v4075, %v4139
        %v4172 = vadd.f32 %v4076, %v4140
        %4173 = vst [vmem:[#allocation3 + $0x1] sm:$0xff] %v3853
        %4174 = vst [vmem:[#allocation3 + $0x9] sm:$0xff] %v3854
        %4175 = vst [vmem:[#allocation3 + $0x19] sm:$0xff] %v3855
        %4176 = vst [vmem:[#allocation3 + $0x21] sm:$0xff] %v3856
        %4177 = vst [vmem:[#allocation3 + $0x31] sm:$0xff] %v3857
        %4178 = vst [vmem:[#allocation3 + $0x39] sm:$0xff] %v3858
        %4179 = vst [vmem:[#allocation3 + $0x49] sm:$0xff] %v3859
        %4180 = vst [vmem:[#allocation3 + $0x51] sm:$0xff] %v3860
        %4181 = vst [vmem:[#allocation3 + $0x61] sm:$0xff] %v3861
        %4182 = vst [vmem:[#allocation3 + $0x69] sm:$0xff] %v3862
        %4183 = vst [vmem:[#allocation3 + $0x79] sm:$0xff] %v3863
        %4184 = vst [vmem:[#allocation3 + $0x81] sm:$0xff] %v3864
        %4185 = vst [vmem:[#allocation3 + $0x91] sm:$0xff] %v3865
        %4186 = vst [vmem:[#allocation3 + $0x99] sm:$0xff] %v3866
        %4187 = vst [vmem:[#allocation3 + $0xa9] sm:$0xff] %v3867
        %4188 = vst [vmem:[#allocation3 + $0xb1] sm:$0xff] %v3868
        %4189 = vst [vmem:[#allocation3 + $0xc1] sm:$0xff] %v3869
        %4190 = vst [vmem:[#allocation3 + $0xc9] sm:$0xff] %v3870
        %4191 = vst [vmem:[#allocation3 + $0xd9] sm:$0xff] %v3871
        %4192 = vst [vmem:[#allocation3 + $0xe1] sm:$0xff] %v3872
        %4193 = vst [vmem:[#allocation3 + $0xf1] sm:$0xff] %v3873
        %4194 = vst [vmem:[#allocation3 + $0xf9] sm:$0xff] %v3874
        %4195 = vst [vmem:[#allocation3 + $0x109] sm:$0xff] %v3875
        %4196 = vst [vmem:[#allocation3 + $0x111] sm:$0xff] %v3876
        %4197 = vst [vmem:[#allocation3 + $0x121] sm:$0xff] %v3877
        %4198 = vst [vmem:[#allocation3 + $0x129] sm:$0xff] %v3878
        %4199 = vst [vmem:[#allocation3 + $0x139] sm:$0xff] %v3879
        %4200 = vst [vmem:[#allocation3 + $0x141] sm:$0xff] %v3880
        %4201 = vst [vmem:[#allocation3 + $0x151] sm:$0xff] %v3881
        %4202 = vst [vmem:[#allocation3 + $0x159] sm:$0xff] %v3882
        %4203 = vst [vmem:[#allocation3 + $0x169] sm:$0xff] %v3883
        %4204 = vst [vmem:[#allocation3 + $0x171] sm:$0xff] %v3884
        %4205 = vst [vmem:[#allocation3] sm:$0x1] %v3853
        %4206 = vst [vmem:[#allocation3 + $0x18] sm:$0x1] %v3855
        %4207 = vst [vmem:[#allocation3 + $0x30] sm:$0x1] %v3857
        %4208 = vst [vmem:[#allocation3 + $0x48] sm:$0x1] %v3859
        %4209 = vst [vmem:[#allocation3 + $0x60] sm:$0x1] %v3861
        %4210 = vst [vmem:[#allocation3 + $0x78] sm:$0x1] %v3863
        %4211 = vst [vmem:[#allocation3 + $0x90] sm:$0x1] %v3865
        %4212 = vst [vmem:[#allocation3 + $0xa8] sm:$0x1] %v3867
        %4213 = vst [vmem:[#allocation3 + $0xc0] sm:$0x1] %v3869
        %4214 = vst [vmem:[#allocation3 + $0xd8] sm:$0x1] %v3871
        %4215 = vst [vmem:[#allocation3 + $0xf0] sm:$0x1] %v3873
        %4216 = vst [vmem:[#allocation3 + $0x108] sm:$0x1] %v3875
        %4217 = vst [vmem:[#allocation3 + $0x120] sm:$0x1] %v3877
        %4218 = vst [vmem:[#allocation3 + $0x138] sm:$0x1] %v3879
        %4219 = vst [vmem:[#allocation3 + $0x150] sm:$0x1] %v3881
        %4220 = vst [vmem:[#allocation3 + $0x168] sm:$0x1] %v3883
        %4221 = vst [vmem:[#allocation3 + $0xa] sm:$0x80] %v3854
        %4222 = vst [vmem:[#allocation3 + $0x22] sm:$0x80] %v3856
        %4223 = vst [vmem:[#allocation3 + $0x3a] sm:$0x80] %v3858
        %4224 = vst [vmem:[#allocation3 + $0x52] sm:$0x80] %v3860
        %4225 = vst [vmem:[#allocation3 + $0x6a] sm:$0x80] %v3862
        %4226 = vst [vmem:[#allocation3 + $0x82] sm:$0x80] %v3864
        %4227 = vst [vmem:[#allocation3 + $0x9a] sm:$0x80] %v3866
        %4228 = vst [vmem:[#allocation3 + $0xb2] sm:$0x80] %v3868
        %4229 = vst [vmem:[#allocation3 + $0xca] sm:$0x80] %v3870
        %4230 = vst [vmem:[#allocation3 + $0xe2] sm:$0x80] %v3872
        %4231 = vst [vmem:[#allocation3 + $0xfa] sm:$0x80] %v3874
        %4232 = vst [vmem:[#allocation3 + $0x112] sm:$0x80] %v3876
        %4233 = vst [vmem:[#allocation3 + $0x12a] sm:$0x80] %v3878
        %4234 = vst [vmem:[#allocation3 + $0x142] sm:$0x80] %v3880
        %4235 = vst [vmem:[#allocation3 + $0x15a] sm:$0x80] %v3882
        %4236 = vst [vmem:[#allocation3 + $0x172] sm:$0x80] %v3884
        %v4237 = vld [vmem:[#allocation3] sm:$0xff]
        %v4238 = vld [vmem:[#allocation3 + $0x8] sm:$0xff]
        %v4239 = vld [vmem:[#allocation3 + $0x18] sm:$0xff]
        %v4240 = vld [vmem:[#allocation3 + $0x20] sm:$0xff]
        %v4241 = vld [vmem:[#allocation3 + $0x30] sm:$0xff]
        %v4242 = vld [vmem:[#allocation3 + $0x38] sm:$0xff]
        %v4243 = vld [vmem:[#allocation3 + $0x48] sm:$0xff]
        %v4244 = vld [vmem:[#allocation3 + $0x50] sm:$0xff]
        %v4245 = vld [vmem:[#allocation3 + $0x60] sm:$0xff]
        %v4246 = vld [vmem:[#allocation3 + $0x68] sm:$0xff]
        %v4247 = vld [vmem:[#allocation3 + $0x78] sm:$0xff]
        %v4248 = vld [vmem:[#allocation3 + $0x80] sm:$0xff]
        %v4249 = vld [vmem:[#allocation3 + $0x90] sm:$0xff]
        %v4250 = vld [vmem:[#allocation3 + $0x98] sm:$0xff]
        %v4251 = vld [vmem:[#allocation3 + $0xa8] sm:$0xff]
        %v4252 = vld [vmem:[#allocation3 + $0xb0] sm:$0xff]
        %v4253 = vld [vmem:[#allocation3 + $0xc0] sm:$0xff]
        %v4254 = vld [vmem:[#allocation3 + $0xc8] sm:$0xff]
        %v4255 = vld [vmem:[#allocation3 + $0xd8] sm:$0xff]
        %v4256 = vld [vmem:[#allocation3 + $0xe0] sm:$0xff]
        %v4257 = vld [vmem:[#allocation3 + $0xf0] sm:$0xff]
        %v4258 = vld [vmem:[#allocation3 + $0xf8] sm:$0xff]
        %v4259 = vld [vmem:[#allocation3 + $0x108] sm:$0xff]
        %v4260 = vld [vmem:[#allocation3 + $0x110] sm:$0xff]
        %v4261 = vld [vmem:[#allocation3 + $0x120] sm:$0xff]
        %v4262 = vld [vmem:[#allocation3 + $0x128] sm:$0xff]
        %v4263 = vld [vmem:[#allocation3 + $0x138] sm:$0xff]
        %v4264 = vld [vmem:[#allocation3 + $0x140] sm:$0xff]
        %v4265 = vld [vmem:[#allocation3 + $0x150] sm:$0xff]
        %v4266 = vld [vmem:[#allocation3 + $0x158] sm:$0xff]
        %v4267 = vld [vmem:[#allocation3 + $0x168] sm:$0xff]
        %v4268 = vld [vmem:[#allocation3 + $0x170] sm:$0xff]
        %v4269 = vld [vmem:[#allocation3 + $0x2] sm:$0xff]
        %v4270 = vld [vmem:[#allocation3 + $0xa] sm:$0xff]
        %v4271 = vld [vmem:[#allocation3 + $0x1a] sm:$0xff]
        %v4272 = vld [vmem:[#allocation3 + $0x22] sm:$0xff]
        %v4273 = vld [vmem:[#allocation3 + $0x32] sm:$0xff]
        %v4274 = vld [vmem:[#allocation3 + $0x3a] sm:$0xff]
        %v4275 = vld [vmem:[#allocation3 + $0x4a] sm:$0xff]
        %v4276 = vld [vmem:[#allocation3 + $0x52] sm:$0xff]
        %v4277 = vld [vmem:[#allocation3 + $0x62] sm:$0xff]
        %v4278 = vld [vmem:[#allocation3 + $0x6a] sm:$0xff]
        %v4279 = vld [vmem:[#allocation3 + $0x7a] sm:$0xff]
        %v4280 = vld [vmem:[#allocation3 + $0x82] sm:$0xff]
        %v4281 = vld [vmem:[#allocation3 + $0x92] sm:$0xff]
        %v4282 = vld [vmem:[#allocation3 + $0x9a] sm:$0xff]
        %v4283 = vld [vmem:[#allocation3 + $0xaa] sm:$0xff]
        %v4284 = vld [vmem:[#allocation3 + $0xb2] sm:$0xff]
        %v4285 = vld [vmem:[#allocation3 + $0xc2] sm:$0xff]
        %v4286 = vld [vmem:[#allocation3 + $0xca] sm:$0xff]
        %v4287 = vld [vmem:[#allocation3 + $0xda] sm:$0xff]
        %v4288 = vld [vmem:[#allocation3 + $0xe2] sm:$0xff]
        %v4289 = vld [vmem:[#allocation3 + $0xf2] sm:$0xff]
        %v4290 = vld [vmem:[#allocation3 + $0xfa] sm:$0xff]
        %v4291 = vld [vmem:[#allocation3 + $0x10a] sm:$0xff]
        %v4292 = vld [vmem:[#allocation3 + $0x112] sm:$0xff]
        %v4293 = vld [vmem:[#allocation3 + $0x122] sm:$0xff]
        %v4294 = vld [vmem:[#allocation3 + $0x12a] sm:$0xff]
        %v4295 = vld [vmem:[#allocation3 + $0x13a] sm:$0xff]
        %v4296 = vld [vmem:[#allocation3 + $0x142] sm:$0xff]
        %v4297 = vld [vmem:[#allocation3 + $0x152] sm:$0xff]
        %v4298 = vld [vmem:[#allocation3 + $0x15a] sm:$0xff]
        %v4299 = vld [vmem:[#allocation3 + $0x16a] sm:$0xff]
        %v4300 = vld [vmem:[#allocation3 + $0x172] sm:$0xff]
        %v4301 = vmul.f32 %v4237, 0.25
        %v4302 = vmul.f32 %v4238, 0.25
        %v4303 = vmul.f32 %v4239, 0.25
        %v4304 = vmul.f32 %v4240, 0.25
        %v4305 = vmul.f32 %v4241, 0.25
        %v4306 = vmul.f32 %v4242, 0.25
        %v4307 = vmul.f32 %v4243, 0.25
        %v4308 = vmul.f32 %v4244, 0.25
        %v4309 = vmul.f32 %v4245, 0.25
        %v4310 = vmul.f32 %v4246, 0.25
        %v4311 = vmul.f32 %v4247, 0.25
        %v4312 = vmul.f32 %v4248, 0.25
        %v4313 = vmul.f32 %v4249, 0.25
        %v4314 = vmul.f32 %v4250, 0.25
        %v4315 = vmul.f32 %v4251, 0.25
        %v4316 = vmul.f32 %v4252, 0.25
        %v4317 = vmul.f32 %v4253, 0.25
        %v4318 = vmul.f32 %v4254, 0.25
        %v4319 = vmul.f32 %v4255, 0.25
        %v4320 = vmul.f32 %v4256, 0.25
        %v4321 = vmul.f32 %v4257, 0.25
        %v4322 = vmul.f32 %v4258, 0.25
        %v4323 = vmul.f32 %v4259, 0.25
        %v4324 = vmul.f32 %v4260, 0.25
        %v4325 = vmul.f32 %v4261, 0.25
        %v4326 = vmul.f32 %v4262, 0.25
        %v4327 = vmul.f32 %v4263, 0.25
        %v4328 = vmul.f32 %v4264, 0.25
        %v4329 = vmul.f32 %v4265, 0.25
        %v4330 = vmul.f32 %v4266, 0.25
        %v4331 = vmul.f32 %v4267, 0.25
        %v4332 = vmul.f32 %v4268, 0.25
        %v4333 = vmul.f32 %v3853, 0.75
        %v4334 = vmul.f32 %v3854, 0.75
        %v4335 = vmul.f32 %v3855, 0.75
        %v4336 = vmul.f32 %v3856, 0.75
        %v4337 = vmul.f32 %v3857, 0.75
        %v4338 = vmul.f32 %v3858, 0.75
        %v4339 = vmul.f32 %v3859, 0.75
        %v4340 = vmul.f32 %v3860, 0.75
        %v4341 = vmul.f32 %v3861, 0.75
        %v4342 = vmul.f32 %v3862, 0.75
        %v4343 = vmul.f32 %v3863, 0.75
        %v4344 = vmul.f32 %v3864, 0.75
        %v4345 = vmul.f32 %v3865, 0.75
        %v4346 = vmul.f32 %v3866, 0.75
        %v4347 = vmul.f32 %v3867, 0.75
        %v4348 = vmul.f32 %v3868, 0.75
        %v4349 = vmul.f32 %v3869, 0.75
        %v4350 = vmul.f32 %v3870, 0.75
        %v4351 = vmul.f32 %v3871, 0.75
        %v4352 = vmul.f32 %v3872, 0.75
        %v4353 = vmul.f32 %v3873, 0.75
        %v4354 = vmul.f32 %v3874, 0.75
        %v4355 = vmul.f32 %v3875, 0.75
        %v4356 = vmul.f32 %v3876, 0.75
        %v4357 = vmul.f32 %v3877, 0.75
        %v4358 = vmul.f32 %v3878, 0.75
        %v4359 = vmul.f32 %v3879, 0.75
        %v4360 = vmul.f32 %v3880, 0.75
        %v4361 = vmul.f32 %v3881, 0.75
        %v4362 = vmul.f32 %v3882, 0.75
        %v4363 = vmul.f32 %v3883, 0.75
        %v4364 = vmul.f32 %v3884, 0.75
        %v4365 = vadd.f32 %v4301, %v4333
        %v4366 = vadd.f32 %v4302, %v4334
        %v4367 = vadd.f32 %v4303, %v4335
        %v4368 = vadd.f32 %v4304, %v4336
        %v4369 = vadd.f32 %v4305, %v4337
        %v4370 = vadd.f32 %v4306, %v4338
        %v4371 = vadd.f32 %v4307, %v4339
        %v4372 = vadd.f32 %v4308, %v4340
        %v4373 = vadd.f32 %v4309, %v4341
        %v4374 = vadd.f32 %v4310, %v4342
        %v4375 = vadd.f32 %v4311, %v4343
        %v4376 = vadd.f32 %v4312, %v4344
        %v4377 = vadd.f32 %v4313, %v4345
        %v4378 = vadd.f32 %v4314, %v4346
        %v4379 = vadd.f32 %v4315, %v4347
        %v4380 = vadd.f32 %v4316, %v4348
        %v4381 = vadd.f32 %v4317, %v4349
        %v4382 = vadd.f32 %v4318, %v4350
        %v4383 = vadd.f32 %v4319, %v4351
        %v4384 = vadd.f32 %v4320, %v4352
        %v4385 = vadd.f32 %v4321, %v4353
        %v4386 = vadd.f32 %v4322, %v4354
        %v4387 = vadd.f32 %v4323, %v4355
        %v4388 = vadd.f32 %v4324, %v4356
        %v4389 = vadd.f32 %v4325, %v4357
        %v4390 = vadd.f32 %v4326, %v4358
        %v4391 = vadd.f32 %v4327, %v4359
        %v4392 = vadd.f32 %v4328, %v4360
        %v4393 = vadd.f32 %v4329, %v4361
        %v4394 = vadd.f32 %v4330, %v4362
        %v4395 = vadd.f32 %v4331, %v4363
        %v4396 = vadd.f32 %v4332, %v4364
        %v4397 = vmul.f32 %v4269, 0.25
        %v4398 = vmul.f32 %v4270, 0.25
        %v4399 = vmul.f32 %v4271, 0.25
        %v4400 = vmul.f32 %v4272, 0.25
        %v4401 = vmul.f32 %v4273, 0.25
        %v4402 = vmul.f32 %v4274, 0.25
        %v4403 = vmul.f32 %v4275, 0.25
        %v4404 = vmul.f32 %v4276, 0.25
        %v4405 = vmul.f32 %v4277, 0.25
        %v4406 = vmul.f32 %v4278, 0.25
        %v4407 = vmul.f32 %v4279, 0.25
        %v4408 = vmul.f32 %v4280, 0.25
        %v4409 = vmul.f32 %v4281, 0.25
        %v4410 = vmul.f32 %v4282, 0.25
        %v4411 = vmul.f32 %v4283, 0.25
        %v4412 = vmul.f32 %v4284, 0.25
        %v4413 = vmul.f32 %v4285, 0.25
        %v4414 = vmul.f32 %v4286, 0.25
        %v4415 = vmul.f32 %v4287, 0.25
        %v4416 = vmul.f32 %v4288, 0.25
        %v4417 = vmul.f32 %v4289, 0.25
        %v4418 = vmul.f32 %v4290, 0.25
        %v4419 = vmul.f32 %v4291, 0.25
        %v4420 = vmul.f32 %v4292, 0.25
        %v4421 = vmul.f32 %v4293, 0.25
        %v4422 = vmul.f32 %v4294, 0.25
        %v4423 = vmul.f32 %v4295, 0.25
        %v4424 = vmul.f32 %v4296, 0.25
        %v4425 = vmul.f32 %v4297, 0.25
        %v4426 = vmul.f32 %v4298, 0.25
        %v4427 = vmul.f32 %v4299, 0.25
        %v4428 = vmul.f32 %v4300, 0.25
        %v4429 = vadd.f32 %v4333, %v4397
        %v4430 = vadd.f32 %v4334, %v4398
        %v4431 = vadd.f32 %v4335, %v4399
        %v4432 = vadd.f32 %v4336, %v4400
        %v4433 = vadd.f32 %v4337, %v4401
        %v4434 = vadd.f32 %v4338, %v4402
        %v4435 = vadd.f32 %v4339, %v4403
        %v4436 = vadd.f32 %v4340, %v4404
        %v4437 = vadd.f32 %v4341, %v4405
        %v4438 = vadd.f32 %v4342, %v4406
        %v4439 = vadd.f32 %v4343, %v4407
        %v4440 = vadd.f32 %v4344, %v4408
        %v4441 = vadd.f32 %v4345, %v4409
        %v4442 = vadd.f32 %v4346, %v4410
        %v4443 = vadd.f32 %v4347, %v4411
        %v4444 = vadd.f32 %v4348, %v4412
        %v4445 = vadd.f32 %v4349, %v4413
        %v4446 = vadd.f32 %v4350, %v4414
        %v4447 = vadd.f32 %v4351, %v4415
        %v4448 = vadd.f32 %v4352, %v4416
        %v4449 = vadd.f32 %v4353, %v4417
        %v4450 = vadd.f32 %v4354, %v4418
        %v4451 = vadd.f32 %v4355, %v4419
        %v4452 = vadd.f32 %v4356, %v4420
        %v4453 = vadd.f32 %v4357, %v4421
        %v4454 = vadd.f32 %v4358, %v4422
        %v4455 = vadd.f32 %v4359, %v4423
        %v4456 = vadd.f32 %v4360, %v4424
        %v4457 = vadd.f32 %v4361, %v4425
        %v4458 = vadd.f32 %v4362, %v4426
        %v4459 = vadd.f32 %v4363, %v4427
        %v4460 = vadd.f32 %v4364, %v4428
        %4461 = vst [vmem:[%s246] sm:$0xff] %v4077
        %4462 = vst [vmem:[%s246 + $0x8] sm:$0xff] %v4078
        %4463 = vst [vmem:[%s246 + $0x20] sm:$0xff] %v4079
        %4464 = vst [vmem:[%s246 + $0x28] sm:$0xff] %v4080
        %4465 = vst [vmem:[%s246 + $0x40] sm:$0xff] %v4081
        %4466 = vst [vmem:[%s246 + $0x48] sm:$0xff] %v4082
        %4467 = vst [vmem:[%s246 + $0x60] sm:$0xff] %v4083
        %4468 = vst [vmem:[%s246 + $0x68] sm:$0xff] %v4084
        %4469 = vst [vmem:[%s246 + $0x80] sm:$0xff] %v4085
        %4470 = vst [vmem:[%s246 + $0x88] sm:$0xff] %v4086
        %4471 = vst [vmem:[%s246 + $0xa0] sm:$0xff] %v4087
        %4472 = vst [vmem:[%s246 + $0xa8] sm:$0xff] %v4088
        %4473 = vst [vmem:[%s246 + $0xc0] sm:$0xff] %v4089
        %4474 = vst [vmem:[%s246 + $0xc8] sm:$0xff] %v4090
        %4475 = vst [vmem:[%s246 + $0xe0] sm:$0xff] %v4091
        %4476 = vst [vmem:[%s246 + $0xe8] sm:$0xff] %v4092
        %4477 = vst [vmem:[%s246 + $0x100] sm:$0xff] %v4093
        %4478 = vst [vmem:[%s246 + $0x108] sm:$0xff] %v4094
        %4479 = vst [vmem:[%s246 + $0x120] sm:$0xff] %v4095
        %4480 = vst [vmem:[%s246 + $0x128] sm:$0xff] %v4096
        %4481 = vst [vmem:[%s246 + $0x140] sm:$0xff] %v4097
        %4482 = vst [vmem:[%s246 + $0x148] sm:$0xff] %v4098
        %4483 = vst [vmem:[%s246 + $0x160] sm:$0xff] %v4099
        %4484 = vst [vmem:[%s246 + $0x168] sm:$0xff] %v4100
        %4485 = vst [vmem:[%s246 + $0x180] sm:$0xff] %v4101
        %4486 = vst [vmem:[%s246 + $0x188] sm:$0xff] %v4102
        %4487 = vst [vmem:[%s246 + $0x1a0] sm:$0xff] %v4103
        %4488 = vst [vmem:[%s246 + $0x1a8] sm:$0xff] %v4104
        %4489 = vst [vmem:[%s246 + $0x1c0] sm:$0xff] %v4105
        %4490 = vst [vmem:[%s246 + $0x1c8] sm:$0xff] %v4106
        %4491 = vst [vmem:[%s246 + $0x1e0] sm:$0xff] %v4107
        %4492 = vst [vmem:[%s246 + $0x1e8] sm:$0xff] %v4108
        %s4493 = scalar_lea.vmem %s246, 16
        %4494 = vst [vmem:[%s4493] sm:$0xff] %v4141
        %4495 = vst [vmem:[%s4493 + $0x8] sm:$0xff] %v4142
        %4496 = vst [vmem:[%s4493 + $0x20] sm:$0xff] %v4143
        %4497 = vst [vmem:[%s4493 + $0x28] sm:$0xff] %v4144
        %4498 = vst [vmem:[%s4493 + $0x40] sm:$0xff] %v4145
        %4499 = vst [vmem:[%s4493 + $0x48] sm:$0xff] %v4146
        %4500 = vst [vmem:[%s4493 + $0x60] sm:$0xff] %v4147
        %4501 = vst [vmem:[%s4493 + $0x68] sm:$0xff] %v4148
        %4502 = vst [vmem:[%s4493 + $0x80] sm:$0xff] %v4149
        %4503 = vst [vmem:[%s4493 + $0x88] sm:$0xff] %v4150
        %4504 = vst [vmem:[%s4493 + $0xa0] sm:$0xff] %v4151
        %4505 = vst [vmem:[%s4493 + $0xa8] sm:$0xff] %v4152
        %4506 = vst [vmem:[%s4493 + $0xc0] sm:$0xff] %v4153
        %4507 = vst [vmem:[%s4493 + $0xc8] sm:$0xff] %v4154
        %4508 = vst [vmem:[%s4493 + $0xe0] sm:$0xff] %v4155
        %4509 = vst [vmem:[%s4493 + $0xe8] sm:$0xff] %v4156
        %4510 = vst [vmem:[%s4493 + $0x100] sm:$0xff] %v4157
        %4511 = vst [vmem:[%s4493 + $0x108] sm:$0xff] %v4158
        %4512 = vst [vmem:[%s4493 + $0x120] sm:$0xff] %v4159
        %4513 = vst [vmem:[%s4493 + $0x128] sm:$0xff] %v4160
        %4514 = vst [vmem:[%s4493 + $0x140] sm:$0xff] %v4161
        %4515 = vst [vmem:[%s4493 + $0x148] sm:$0xff] %v4162
        %4516 = vst [vmem:[%s4493 + $0x160] sm:$0xff] %v4163
        %4517 = vst [vmem:[%s4493 + $0x168] sm:$0xff] %v4164
        %4518 = vst [vmem:[%s4493 + $0x180] sm:$0xff] %v4165
        %4519 = vst [vmem:[%s4493 + $0x188] sm:$0xff] %v4166
        %4520 = vst [vmem:[%s4493 + $0x1a0] sm:$0xff] %v4167
        %4521 = vst [vmem:[%s4493 + $0x1a8] sm:$0xff] %v4168
        %4522 = vst [vmem:[%s4493 + $0x1c0] sm:$0xff] %v4169
        %4523 = vst [vmem:[%s4493 + $0x1c8] sm:$0xff] %v4170
        %4524 = vst [vmem:[%s4493 + $0x1e0] sm:$0xff] %v4171
        %4525 = vst [vmem:[%s4493 + $0x1e8] sm:$0xff] %v4172
        %s4526 = scalar_lea.vmem %s246, 512
        %4527 = vst [vmem:[%s4526] sm:$0xff] %v4365
        %4528 = vst [vmem:[%s4526 + $0x8] sm:$0xff] %v4366
        %4529 = vst [vmem:[%s4526 + $0x20] sm:$0xff] %v4367
        %4530 = vst [vmem:[%s4526 + $0x28] sm:$0xff] %v4368
        %4531 = vst [vmem:[%s4526 + $0x40] sm:$0xff] %v4369
        %4532 = vst [vmem:[%s4526 + $0x48] sm:$0xff] %v4370
        %4533 = vst [vmem:[%s4526 + $0x60] sm:$0xff] %v4371
        %4534 = vst [vmem:[%s4526 + $0x68] sm:$0xff] %v4372
        %4535 = vst [vmem:[%s4526 + $0x80] sm:$0xff] %v4373
        %4536 = vst [vmem:[%s4526 + $0x88] sm:$0xff] %v4374
        %4537 = vst [vmem:[%s4526 + $0xa0] sm:$0xff] %v4375
        %4538 = vst [vmem:[%s4526 + $0xa8] sm:$0xff] %v4376
        %4539 = vst [vmem:[%s4526 + $0xc0] sm:$0xff] %v4377
        %4540 = vst [vmem:[%s4526 + $0xc8] sm:$0xff] %v4378
        %4541 = vst [vmem:[%s4526 + $0xe0] sm:$0xff] %v4379
        %4542 = vst [vmem:[%s4526 + $0xe8] sm:$0xff] %v4380
        %4543 = vst [vmem:[%s4526 + $0x100] sm:$0xff] %v4381
        %4544 = vst [vmem:[%s4526 + $0x108] sm:$0xff] %v4382
        %4545 = vst [vmem:[%s4526 + $0x120] sm:$0xff] %v4383
        %4546 = vst [vmem:[%s4526 + $0x128] sm:$0xff] %v4384
        %4547 = vst [vmem:[%s4526 + $0x140] sm:$0xff] %v4385
        %4548 = vst [vmem:[%s4526 + $0x148] sm:$0xff] %v4386
        %4549 = vst [vmem:[%s4526 + $0x160] sm:$0xff] %v4387
        %4550 = vst [vmem:[%s4526 + $0x168] sm:$0xff] %v4388
        %4551 = vst [vmem:[%s4526 + $0x180] sm:$0xff] %v4389
        %4552 = vst [vmem:[%s4526 + $0x188] sm:$0xff] %v4390
        %4553 = vst [vmem:[%s4526 + $0x1a0] sm:$0xff] %v4391
        %4554 = vst [vmem:[%s4526 + $0x1a8] sm:$0xff] %v4392
        %4555 = vst [vmem:[%s4526 + $0x1c0] sm:$0xff] %v4393
        %4556 = vst [vmem:[%s4526 + $0x1c8] sm:$0xff] %v4394
        %4557 = vst [vmem:[%s4526 + $0x1e0] sm:$0xff] %v4395
        %4558 = vst [vmem:[%s4526 + $0x1e8] sm:$0xff] %v4396
        %s4559 = scalar_lea.vmem %s246, 528
        %4560 = vst [vmem:[%s4559] sm:$0xff] %v4429
        %4561 = vst [vmem:[%s4559 + $0x8] sm:$0xff] %v4430
        %4562 = vst [vmem:[%s4559 + $0x20] sm:$0xff] %v4431
        %4563 = vst [vmem:[%s4559 + $0x28] sm:$0xff] %v4432
        %4564 = vst [vmem:[%s4559 + $0x40] sm:$0xff] %v4433
        %4565 = vst [vmem:[%s4559 + $0x48] sm:$0xff] %v4434
        %4566 = vst [vmem:[%s4559 + $0x60] sm:$0xff] %v4435
        %4567 = vst [vmem:[%s4559 + $0x68] sm:$0xff] %v4436
        %4568 = vst [vmem:[%s4559 + $0x80] sm:$0xff] %v4437
        %4569 = vst [vmem:[%s4559 + $0x88] sm:$0xff] %v4438
        %4570 = vst [vmem:[%s4559 + $0xa0] sm:$0xff] %v4439
        %4571 = vst [vmem:[%s4559 + $0xa8] sm:$0xff] %v4440
        %4572 = vst [vmem:[%s4559 + $0xc0] sm:$0xff] %v4441
        %4573 = vst [vmem:[%s4559 + $0xc8] sm:$0xff] %v4442
        %4574 = vst [vmem:[%s4559 + $0xe0] sm:$0xff] %v4443
        %4575 = vst [vmem:[%s4559 + $0xe8] sm:$0xff] %v4444
        %4576 = vst [vmem:[%s4559 + $0x100] sm:$0xff] %v4445
        %4577 = vst [vmem:[%s4559 + $0x108] sm:$0xff] %v4446
        %4578 = vst [vmem:[%s4559 + $0x120] sm:$0xff] %v4447
        %4579 = vst [vmem:[%s4559 + $0x128] sm:$0xff] %v4448
        %4580 = vst [vmem:[%s4559 + $0x140] sm:$0xff] %v4449
        %4581 = vst [vmem:[%s4559 + $0x148] sm:$0xff] %v4450
        %4582 = vst [vmem:[%s4559 + $0x160] sm:$0xff] %v4451
        %4583 = vst [vmem:[%s4559 + $0x168] sm:$0xff] %v4452
        %4584 = vst [vmem:[%s4559 + $0x180] sm:$0xff] %v4453
        %4585 = vst [vmem:[%s4559 + $0x188] sm:$0xff] %v4454
        %4586 = vst [vmem:[%s4559 + $0x1a0] sm:$0xff] %v4455
        %4587 = vst [vmem:[%s4559 + $0x1a8] sm:$0xff] %v4456
        %4588 = vst [vmem:[%s4559 + $0x1c0] sm:$0xff] %v4457
        %4589 = vst [vmem:[%s4559 + $0x1c8] sm:$0xff] %v4458
        %4590 = vst [vmem:[%s4559 + $0x1e0] sm:$0xff] %v4459
        %4591 = vst [vmem:[%s4559 + $0x1e8] sm:$0xff] %v4460
        %p4592 = scmp.lt.s32.totalorder %s19, 1
        %s4593 = scalar_select %p4592, %s19, 1
        %s4594 = smul.addr %s4593, 128
        %s4595 = smul.addr %s4594, 8
        %s4596 = scalar_lea.vmem %s4, %s4595
        // Predicated region
        $region49: #{complex_upsample.1} parent=35 // pred_check
          %p4597 = pneg %p126
        $region50: #{complex_upsample.1} parent=35 // pred_check_branch
          %4599 = sbr.rel (%p4597) target = $region52
        $region51: #{complex_upsample.1} parent=35 // pred_region
          _
        $region52: #{complex_upsample.1} parent=35 // pred_fallthru
          _
      $region36: #{complex_upsample.1} parent=5 // pred_fallthru
        _
      %p4600 = scmp.le.s32.totalorder 2, %s14
      // Predicated region
      $region53: #{complex_upsample.1} parent=5 // pred_check
        %p4601 = pneg %p4600
      $region54: #{complex_upsample.1} parent=5 // pred_check_branch
        %4603 = sbr.rel (%p4601) target = $region56
      $region55: #{complex_upsample.1} parent=5 // pred_region
        %s4604 = ssub.s32 %s14, 2
        // Predicated region
        $region57: #{complex_upsample.1} parent=55 // pred_check
          %p4605 = pneg %p132
        $region58: #{complex_upsample.1} parent=55 // pred_check_branch
          %4607 = sbr.rel (%p4605) target = $region60
        $region59: #{complex_upsample.1} parent=55 // pred_region
          %p4608 = scmp.lt.s32.totalorder %s20, 1
          %s4609 = scalar_select %p4608, %s20, 1
          %s4610 = smul.addr %s4609, 128
          %s4611 = smul.addr %s4610, 8
          %s4612 = scalar_lea.vmem %s4, %s4611
        $region60: #{complex_upsample.1} parent=55 // pred_fallthru
          _
      $region56: #{complex_upsample.1} parent=5 // pred_fallthru
        _
    $region6: #{complex_upsample.1} parent=1 // loop_footer
      %s18 = sadd.s32 1, %s14
    $region7: #{complex_upsample.1} parent=1 // loop_footer_branch
      %13 = sbr.rel target = $region3
    $region8: #{complex_upsample.1} parent=1 // loop_exit
      _
    %4613 = vsyncpa [#allocation5], 1
    %s4614 = scalar_lea.sflag [#allocation5], 1
    %4615 = vsyncpa %s4614, 1
    %4616 = vsyncpa [#allocation7], 1

</llo_original>
